<compile_context>
chip_gen: v7x
topology: tpu7x:2x2x1
jax: 0.10.0
libtpu: 0.0.40
codegen_flags: <defaults>
</compile_context>

<pallas_src>
import functools

import jax
import jax.numpy as jnp
from jax.experimental import pallas as pl
from jax.experimental.pallas import tpu as pltpu  # noqa: F401


# ----------------------------------------------------------------------------
# Pallas kernels
# ----------------------------------------------------------------------------
def _conv_pool_kernel(p_ref, w_ref, b_ref, o_ref):
    """Fused conv-as-matmul + bias + ReLU + 2x2 max-pool (one MXU stream).

    w_ref : (Cout, K)   conv weights as a matrix, K = 9*Cin, bf16
    p_ref : (K, 4*M)    im2col patches, the 4 pool-window corners concatenated
                        along the lane axis (each corner block M lanes wide,
                        M a multiple of 128), bf16
    b_ref : (Cout, 1)   bias, f32
    o_ref : (Cout, M)   pooled feature map, bf16 (lane-dense store)

    relu(maxpool(conv + b)) == relu(max_corners(w @ p) + b): the bias is
    corner-invariant and relu is monotone, so pooling runs on raw matmul
    outputs and bias/relu are applied once to the pooled result.
    """
    m = o_ref.shape[1]
    r = jnp.dot(w_ref[...], p_ref[...], preferred_element_type=jnp.float32)
    mx = jnp.maximum(jnp.maximum(r[:, 0 * m:1 * m], r[:, 1 * m:2 * m]),
                     jnp.maximum(r[:, 2 * m:3 * m], r[:, 3 * m:4 * m]))
    o_ref[...] = jnp.maximum(mx + b_ref[...], 0.0).astype(o_ref.dtype)


def _conv2_lstm_fc_kernel(p2_ref, w2_ref, b2_ref, wih_ref, whh_ref, bg_ref,
                          wfc_ref, bfc_ref, out_ref, *, bsz, t_steps, n_pos):
    """Fused conv2 + ReLU + 2x2 pool -> LSTM -> FC head (single invocation).

    p2_ref : (4*M, K2)  stage-2 im2col, rows (corner, pos, frame), frame
                        ordered (t, b), K2 = 9*16, bf16
    w2_ref : (K2, C2)   conv2 weights (C2 = 32 output channels), bf16
    b2_ref : (1, C2)    conv2 bias, f32
    wih_ref: (n_pos*C2, 4H) LSTM input weights, rows ordered (pos, channel),
                        i/f/o columns pre-scaled by 0.5, bf16
    whh_ref: (H, 4H)    recurrent weights, i/f/o columns pre-scaled by 0.5, f32
    bg_ref : (1, 4H)    b_ih + b_hh, i/f/o pre-scaled by 0.5, f32
    wfc_ref: (1, H)     FC weight, f32     bfc_ref: (1, 1) FC bias, f32
    out_ref: (B, 1)     prediction, f32
    Gate order is PyTorch's (i, f, g, o).
    """
    hidden = whh_ref.shape[0]
    h4 = whh_ref.shape[1]
    c2 = w2_ref.shape[1]
    n_frames = bsz * t_steps
    m = n_frames * n_pos

    # conv2 for all 4 pool corners in one MXU stream, then corner-max + bias
    # + ReLU (same monotonicity identity as stage 1).
    r = jnp.dot(p2_ref[...], w2_ref[...], preferred_element_type=jnp.float32)
    pooled = jnp.maximum(jnp.maximum(r[0 * m:1 * m], r[1 * m:2 * m]),
                         jnp.maximum(r[2 * m:3 * m], r[3 * m:4 * m]))
    pooled = jnp.maximum(pooled + b2_ref[...], 0.0).astype(jnp.bfloat16)

    # Hoisted LSTM input projection for ALL time steps, accumulated per
    # spatial position (rows pos*N..pos*N+N of `pooled` are one (frame, chan)
    # block; the matching 32-row block of wih is its weight slice).  All
    # slices are sublane-aligned; result gx is a register value (no scratch).
    gx = jnp.zeros((n_frames, h4), jnp.float32)
    for p in range(n_pos):
        gx = gx + jnp.dot(pooled[p * n_frames:(p + 1) * n_frames, :],
                          wih_ref[p * c2:(p + 1) * c2, :],
                          preferred_element_type=jnp.float32)
    gx = gx + bg_ref[...]                              # (N, 4H), rows (t, b)

    whh = whh_ref[...]
    h = jnp.zeros((bsz, hidden), jnp.float32)
    c = jnp.zeros((bsz, hidden), jnp.float32)
    for step in range(t_steps):                        # static unroll, T known
        gates = gx[step * bsz:(step + 1) * bsz, :] + jnp.dot(
            h, whh, preferred_element_type=jnp.float32)
        # One tanh for all 4 gates: i/f/o inputs were pre-scaled by 0.5 in the
        # weights, so sigmoid(z) = 0.5*tanh(z/2)+0.5 comes from the same tanh.
        tg = jnp.tanh(gates)
        sg = 0.5 * tg + 0.5
        i_g = sg[:, 0 * hidden:1 * hidden]
        f_g = sg[:, 1 * hidden:2 * hidden]
        g_g = tg[:, 2 * hidden:3 * hidden]
        o_g = sg[:, 3 * hidden:4 * hidden]
        c = f_g * c + i_g * g_g
        h = o_g * jnp.tanh(c)

    # FC head (hidden -> 1) as a lane reduction instead of a 1-lane matmul.
    out_ref[...] = (jnp.sum(h * wfc_ref[...], axis=1, keepdims=True)
                    + bfc_ref[...])


# ----------------------------------------------------------------------------
# Pallas wrappers (grid-less: whole problem < 1 MiB of VMEM)
# ----------------------------------------------------------------------------
def conv_relu_pool(p_all, w_mat, bias_col):
    k, m4 = p_all.shape
    m = m4 // 4
    cout = w_mat.shape[0]
    return pl.pallas_call(
        _conv_pool_kernel,
        out_shape=jax.ShapeDtypeStruct((cout, m), jnp.bfloat16),
        in_specs=[pl.BlockSpec((k, m4), lambda: (0, 0)),
                  pl.BlockSpec((cout, k), lambda: (0, 0)),
                  pl.BlockSpec((cout, 1), lambda: (0, 0))],
        out_specs=pl.BlockSpec((cout, m), lambda: (0, 0)),
    )(p_all, w_mat, bias_col)


def conv2_lstm_fc(p2, w2t, b2_row, wih_t, whh_t, bias_row, wfc_row, bfc,
                  bsz, t_steps):
    m4, k2 = p2.shape
    cout = w2t.shape[1]
    hidden = whh_t.shape[0]
    h4 = whh_t.shape[1]
    n_pos = m4 // (4 * bsz * t_steps)
    kernel = functools.partial(_conv2_lstm_fc_kernel, bsz=bsz,
                               t_steps=t_steps, n_pos=n_pos)
    return pl.pallas_call(
        kernel,
        out_shape=jax.ShapeDtypeStruct((bsz, 1), jnp.float32),
        in_specs=[pl.BlockSpec((m4, k2), lambda: (0, 0)),
                  pl.BlockSpec((k2, cout), lambda: (0, 0)),
                  pl.BlockSpec((1, cout), lambda: (0, 0)),
                  pl.BlockSpec((n_pos * cout, h4), lambda: (0, 0)),
                  pl.BlockSpec((hidden, h4), lambda: (0, 0)),
                  pl.BlockSpec((1, h4), lambda: (0, 0)),
                  pl.BlockSpec((1, hidden), lambda: (0, 0)),
                  pl.BlockSpec((1, 1), lambda: (0, 0))],
        out_specs=pl.BlockSpec((bsz, 1), lambda: (0, 0)),
    )(p2, w2t, b2_row, wih_t, whh_t, bias_row, wfc_row, bfc)


# ----------------------------------------------------------------------------
# XLA glue: pool-corner im2col for a 3x3/stride-1/pad-1 conv fused with the
# following floor-mode 2x2 max-pool (only conv positions that survive pooling
# are materialized, one patch block per pool-window corner).
# ----------------------------------------------------------------------------
def _corner_tap_slabs(x_nhwc, out_h, out_w):
    """List of 4 arrays (9, N, out_h, out_w, C), corners (0,0),(0,1),(1,0),(1,1)."""
    xp = jnp.pad(x_nhwc, ((0, 0), (1, 1), (1, 1), (0, 0)))
    out = []
    for dy in (0, 1):
        for dx in (0, 1):
            taps = [xp[:, dy + ky: dy + ky + 2 * out_h: 2,
                       dx + kx: dx + kx + 2 * out_w: 2, :]
                    for ky in range(3) for kx in range(3)]
            out.append(jnp.stack(taps, axis=0))
    return out


def _patches_stage1(x_nhw1, out_h, out_w, pad_to):
    """(9, 4*pad_to) bf16; per-corner columns (n, py, px), zero-padded to
    `pad_to` columns so in-kernel corner slices / stores stay 128-lane aligned."""
    n = x_nhw1.shape[0]
    m = n * out_h * out_w
    blocks = []
    for p in _corner_tap_slabs(x_nhw1, out_h, out_w):
        blk = p[..., 0].reshape(9, m)                        # (9, M)
        blocks.append(jnp.pad(blk, ((0, 0), (0, pad_to - m))))
    return jnp.concatenate(blocks, axis=1).astype(jnp.bfloat16)


def _patches_stage2(x_nhwc, out_h, out_w):
    """(4*M, 9*C) bf16; rows (corner, py*ow+px, n), cols (ky, kx, ci)."""
    n, _, _, c = x_nhwc.shape
    m = n * out_h * out_w
    blocks = []
    for p in _corner_tap_slabs(x_nhwc, out_h, out_w):        # (9, N, oh, ow, C)
        blocks.append(p.transpose(2, 3, 1, 0, 4).reshape(m, 9 * c))
    return jnp.concatenate(blocks, axis=0).astype(jnp.bfloat16)


# ----------------------------------------------------------------------------
# Forward pass
# ----------------------------------------------------------------------------
def rdm_cnn_lstm_forward(x, params):
    b, t, hh, ww = x.shape
    n = b * t
    hidden = params["w_hh"].shape[1]
    h4 = 4 * hidden

    oh1, ow1 = hh // 2, ww // 2                               # 11, 6
    oh2, ow2 = oh1 // 2, ow1 // 2                             # 5, 3
    n_pos = oh2 * ow2                                         # 15
    # The module's LSTM input size is fixed by its 23x13 dummy (=> 480).
    assert 32 * n_pos == params["w_ih"].shape[1], "frames must be 23x13"

    # Time-major frame order so LSTM rows come out as (t, b) with no
    # post-conv permutation (review item).
    x_tm = jnp.transpose(x, (1, 0, 2, 3)).reshape(n, hh, ww, 1)

    # ---- kernel A: conv1 (1 -> 16) + ReLU + 2x2 pool ----
    m1 = n * oh1 * ow1
    m1p = ((m1 + 127) // 128) * 128
    p1 = _patches_stage1(x_tm, oh1, ow1, m1p)                 # (9, 4*m1p)
    w1m = params["w1"].reshape(16, 9).astype(jnp.bfloat16)
    y1 = conv_relu_pool(p1, w1m, params["b1"].reshape(16, 1))[:, :m1]

    # ---- stage-2 patches (layout glue only) ----
    f1 = y1.reshape(16, n, oh1, ow1).transpose(1, 2, 3, 0)    # (N, 11, 6, 16)
    p2 = _patches_stage2(f1, oh2, ow2)                        # (4*N*15, 144)
    w2t = (params["w2"].transpose(2, 3, 1, 0)
           .reshape(9 * 16, 32).astype(jnp.bfloat16))

    # ---- LSTM weight packing (trace-time) ----
    # Fold the 0.5 of the tanh-based sigmoid into the i, f, o gate blocks
    # (exact: power-of-two scale), and permute w_ih's feature columns from
    # (channel, pos) to (pos, channel) to match the kernel's pooled layout.
    gate_scale = jnp.concatenate([jnp.full((2 * hidden,), 0.5, jnp.float32),
                                  jnp.ones((hidden,), jnp.float32),
                                  jnp.full((hidden,), 0.5, jnp.float32)])
    wih_t = (params["w_ih"].reshape(h4, 32, n_pos).transpose(2, 1, 0)
             .reshape(32 * n_pos, h4))
    wih_t = (wih_t * gate_scale[None, :]).astype(jnp.bfloat16)
    whh_t = params["w_hh"].T * gate_scale[None, :]            # (H, 4H) f32
    bias = ((params["b_ih"] + params["b_hh"]) * gate_scale).reshape(1, h4)

    # ---- kernel B: conv2 + pool + LSTM + FC, one fused kernel ----
    out = conv2_lstm_fc(p2, w2t, params["b2"].reshape(1, 32),
                        wih_t, whh_t, bias,
                        params["w_fc"].reshape(1, hidden),
                        params["b_fc"].reshape(1, 1), b, t)
    return jnp.squeeze(out)                                   # (B,)


# ----------------------------------------------------------------------------
# Pure-JAX f32 reference of the PyTorch forward (for verification)
# ----------------------------------------------------------------------------
def reference_forward(x, params):
    with jax.default_matmul_precision("highest"):
        b, t, hh, ww = x.shape
        xi = x.reshape(b * t, 1, hh, ww)
        dn = ("NCHW", "OIHW", "NCHW")
        neg_inf = jnp.array(-jnp.inf, dtype=jnp.float32)

        y = jax.lax.conv_general_dilated(xi, params["w1"], (1, 1), "SAME",
                                         dimension_numbers=dn)
        y = jnp.maximum(y + params["b1"][None, :, None, None], 0.0)
        y = jax.lax.reduce_window(y, neg_inf, jax.lax.max,
                                  (1, 1, 2, 2), (1, 1, 2, 2), "VALID")
        y = jax.lax.conv_general_dilated(y, params["w2"], (1, 1), "SAME",
                                         dimension_numbers=dn)
        y = jnp.maximum(y + params["b2"][None, :, None, None], 0.0)
        y = jax.lax.reduce_window(y, neg_inf, jax.lax.max,
                                  (1, 1, 2, 2), (1, 1, 2, 2), "VALID")
        feats = y.reshape(b, t, -1)

        hdim = params["w_hh"].shape[1]

        def step(carry, x_t):
            h, c = carry
            gates = (x_t @ params["w_ih"].T + h @ params["w_hh"].T
                     + params["b_ih"] + params["b_hh"])
            i_g, f_g, g_g, o_g = jnp.split(gates, 4, axis=-1)
            i_g = jax.nn.sigmoid(i_g)
            f_g = jax.nn.sigmoid(f_g)
            g_g = jnp.tanh(g_g)
            o_g = jax.nn.sigmoid(o_g)
            c = f_g * c + i_g * g_g
            h = o_g * jnp.tanh(c)
            return (h, c), None

        h0 = jnp.zeros((b, hdim), jnp.float32)
        c0 = jnp.zeros((b, hdim), jnp.float32)
        (h_last, _), _ = jax.lax.scan(step, (h0, c0), jnp.swapaxes(feats, 0, 1))
        out = h_last @ params["w_fc"].T + params["b_fc"]
        return jnp.squeeze(out)


# ----------------------------------------------------------------------------
if __name__ == "__main__":
    hidden = 32
    key = jax.random.PRNGKey(0)
    ks = jax.random.split(key, 11)
    params = {
        "w1":  0.2 * jax.random.normal(ks[0], (16, 1, 3, 3), jnp.float32),
        "b1":  0.1 * jax.random.normal(ks[1], (16,), jnp.float32),
        "w2":  0.1 * jax.random.normal(ks[2], (32, 16, 3, 3), jnp.float32),
        "b2":  0.1 * jax.random.normal(ks[3], (32,), jnp.float32),
        "w_ih": 0.1 * jax.random.normal(ks[4], (4 * hidden, 480), jnp.float32),
        "w_hh": 0.1 * jax.random.normal(ks[5], (4 * hidden, hidden), jnp.float32),
        "b_ih": 0.1 * jax.random.normal(ks[6], (4 * hidden,), jnp.float32),
        "b_hh": 0.1 * jax.random.normal(ks[7], (4 * hidden,), jnp.float32),
        "w_fc": 0.1 * jax.random.normal(ks[8], (1, hidden), jnp.float32),
        "b_fc": 0.1 * jax.random.normal(ks[9], (1,), jnp.float32),
    }
    # input: batch=2, time_steps=8, height=23, width=13 (fixed by the module)
    x = jax.random.normal(ks[10], (2, 8, 23, 13), jnp.float32)

    out = jax.block_until_ready(jax.jit(rdm_cnn_lstm_forward)(x, params))
    ref = jax.block_until_ready(reference_forward(x, params))

    assert out.shape == ref.shape == (2,), (out.shape, ref.shape)
    assert jnp.allclose(out, ref, rtol=2e-2, atol=2e-2), (out, ref)
    print("KERNEL_OK")
</pallas_src>

<mosaic_0001>
module attributes {stable_mosaic.version = 11 : i64} {
  func.func @_conv_pool_kernel(%arg0: memref<9x4608xbf16, #tpu.memory_space<vmem>>, %arg1: memref<16x9xbf16, #tpu.memory_space<vmem>>, %arg2: memref<16x1xf32, #tpu.memory_space<vmem>>, %arg3: memref<16x1152xbf16, #tpu.memory_space<vmem>>) attributes {dimension_semantics = [], scalar_prefetch = 0 : i64, scratch_operands = 0 : i64, tpu.core_type = #tpu.core_type<tc>} {
    %c0 = arith.constant 0 : index
    %c0_0 = arith.constant 0 : index
    %0 = vector.load %arg1[%c0, %c0_0] : memref<16x9xbf16, #tpu.memory_space<vmem>>, vector<16x9xbf16>
    %c0_1 = arith.constant 0 : index
    %c0_2 = arith.constant 0 : index
    %1 = vector.load %arg0[%c0_1, %c0_2] : memref<9x4608xbf16, #tpu.memory_space<vmem>>, vector<9x4608xbf16>
    %cst = arith.constant dense<0.000000e+00> : vector<16x4608xf32>
    %2 = tpu.matmul %0, %1, %cst {dimension_numbers = #tpu.dot_dimension_numbers<[1], [0], [0], [1], [0, 0, 1, 1], [], []>} : vector<16x9xbf16>, vector<9x4608xbf16>, vector<16x4608xf32> -> vector<16x4608xf32>
    %3 = vector.extract_strided_slice %2 {offsets = [0, 0], sizes = [16, 1152], strides = [1, 1]} : vector<16x4608xf32> to vector<16x1152xf32>
    %4 = vector.extract_strided_slice %2 {offsets = [0, 1152], sizes = [16, 1152], strides = [1, 1]} : vector<16x4608xf32> to vector<16x1152xf32>
    %5 = arith.maximumf %3, %4 : vector<16x1152xf32>
    %6 = vector.extract_strided_slice %2 {offsets = [0, 2304], sizes = [16, 1152], strides = [1, 1]} : vector<16x4608xf32> to vector<16x1152xf32>
    %7 = vector.extract_strided_slice %2 {offsets = [0, 3456], sizes = [16, 1152], strides = [1, 1]} : vector<16x4608xf32> to vector<16x1152xf32>
    %8 = arith.maximumf %6, %7 : vector<16x1152xf32>
    %9 = arith.maximumf %5, %8 : vector<16x1152xf32>
    %c0_3 = arith.constant 0 : index
    %c0_4 = arith.constant 0 : index
    %10 = vector.load %arg2[%c0_3, %c0_4] : memref<16x1xf32, #tpu.memory_space<vmem>>, vector<16x1xf32>
    %11 = vector.broadcast %10 : vector<16x1xf32> to vector<16x1152xf32>
    %12 = arith.addf %9, %11 : vector<16x1152xf32>
    %cst_5 = arith.constant 0.000000e+00 : f32
    %13 = vector.broadcast %cst_5 : f32 to vector<16x1152xf32>
    %14 = arith.maximumf %12, %13 : vector<16x1152xf32>
    %15 = arith.truncf %14 : vector<16x1152xf32> to vector<16x1152xbf16>
    %c0_6 = arith.constant 0 : index
    %c0_7 = arith.constant 0 : index
    %16 = vector.load %arg3[%c0_6, %c0_7] : memref<16x1152xbf16, #tpu.memory_space<vmem>>, vector<16x1152xbf16>
    tpu.vector_store %arg3[%c0_6, %c0_7], %15 {strides = array<i32>} : memref<16x1152xbf16, #tpu.memory_space<vmem>>, vector<16x1152xbf16>,
    return
  }
}

module attributes {stable_mosaic.version = 11 : i64} {
  func.func @_conv2_lstm_fc_kernel(%arg0: memref<960x144xbf16, #tpu.memory_space<vmem>>, %arg1: memref<144x32xbf16, #tpu.memory_space<vmem>>, %arg2: memref<1x32xf32, #tpu.memory_space<vmem>>, %arg3: memref<480x128xbf16, #tpu.memory_space<vmem>>, %arg4: memref<32x128xf32, #tpu.memory_space<vmem>>, %arg5: memref<1x128xf32, #tpu.memory_space<vmem>>, %arg6: memref<1x32xf32, #tpu.memory_space<vmem>>, %arg7: memref<1x1xf32, #tpu.memory_space<vmem>>, %arg8: memref<2x1xf32, #tpu.memory_space<vmem>>) attributes {dimension_semantics = [], scalar_prefetch = 0 : i64, scratch_operands = 0 : i64, tpu.core_type = #tpu.core_type<tc>} {
    %c0 = arith.constant 0 : index
    %c0_0 = arith.constant 0 : index
    %0 = vector.load %arg0[%c0, %c0_0] : memref<960x144xbf16, #tpu.memory_space<vmem>>, vector<960x144xbf16>
    %c0_1 = arith.constant 0 : index
    %c0_2 = arith.constant 0 : index
    %1 = vector.load %arg1[%c0_1, %c0_2] : memref<144x32xbf16, #tpu.memory_space<vmem>>, vector<144x32xbf16>
    %cst = arith.constant dense<0.000000e+00> : vector<960x32xf32>
    %2 = tpu.matmul %0, %1, %cst {dimension_numbers = #tpu.dot_dimension_numbers<[1], [0], [0], [1], [0, 0, 1, 1], [], []>} : vector<960x144xbf16>, vector<144x32xbf16>, vector<960x32xf32> -> vector<960x32xf32>
    %3 = vector.extract_strided_slice %2 {offsets = [0, 0], sizes = [240, 32], strides = [1, 1]} : vector<960x32xf32> to vector<240x32xf32>
    %4 = vector.extract_strided_slice %2 {offsets = [240, 0], sizes = [240, 32], strides = [1, 1]} : vector<960x32xf32> to vector<240x32xf32>
    %5 = arith.maximumf %3, %4 : vector<240x32xf32>
    %6 = vector.extract_strided_slice %2 {offsets = [480, 0], sizes = [240, 32], strides = [1, 1]} : vector<960x32xf32> to vector<240x32xf32>
    %7 = vector.extract_strided_slice %2 {offsets = [720, 0], sizes = [240, 32], strides = [1, 1]} : vector<960x32xf32> to vector<240x32xf32>
    %8 = arith.maximumf %6, %7 : vector<240x32xf32>
    %9 = arith.maximumf %5, %8 : vector<240x32xf32>
    %c0_3 = arith.constant 0 : index
    %c0_4 = arith.constant 0 : index
    %10 = vector.load %arg2[%c0_3, %c0_4] : memref<1x32xf32, #tpu.memory_space<vmem>>, vector<1x32xf32>
    %11 = vector.broadcast %10 : vector<1x32xf32> to vector<240x32xf32>
    %12 = arith.addf %9, %11 : vector<240x32xf32>
    %cst_5 = arith.constant 0.000000e+00 : f32
    %13 = vector.broadcast %cst_5 : f32 to vector<240x32xf32>
    %14 = arith.maximumf %12, %13 : vector<240x32xf32>
    %15 = arith.truncf %14 : vector<240x32xf32> to vector<240x32xbf16>
    %cst_6 = arith.constant 0.000000e+00 : f32
    %16 = vector.broadcast %cst_6 : f32 to vector<16x128xf32>
    %17 = vector.extract_strided_slice %15 {offsets = [0, 0], sizes = [16, 32], strides = [1, 1]} : vector<240x32xbf16> to vector<16x32xbf16>
    %c0_7 = arith.constant 0 : index
    %c0_8 = arith.constant 0 : index
    %18 = vector.load %arg3[%c0_7, %c0_8] : memref<480x128xbf16, #tpu.memory_space<vmem>>, vector<32x128xbf16>
    %cst_9 = arith.constant dense<0.000000e+00> : vector<16x128xf32>
    %19 = tpu.matmul %17, %18, %cst_9 {dimension_numbers = #tpu.dot_dimension_numbers<[1], [0], [0], [1], [0, 0, 1, 1], [], []>} : vector<16x32xbf16>, vector<32x128xbf16>, vector<16x128xf32> -> vector<16x128xf32>
    %20 = arith.addf %16, %19 : vector<16x128xf32>
    %21 = vector.extract_strided_slice %15 {offsets = [16, 0], sizes = [16, 32], strides = [1, 1]} : vector<240x32xbf16> to vector<16x32xbf16>
    %c32 = arith.constant 32 : index
    %c0_10 = arith.constant 0 : index
    %22 = vector.load %arg3[%c32, %c0_10] : memref<480x128xbf16, #tpu.memory_space<vmem>>, vector<32x128xbf16>
    %cst_11 = arith.constant dense<0.000000e+00> : vector<16x128xf32>
    %23 = tpu.matmul %21, %22, %cst_11 {dimension_numbers = #tpu.dot_dimension_numbers<[1], [0], [0], [1], [0, 0, 1, 1], [], []>} : vector<16x32xbf16>, vector<32x128xbf16>, vector<16x128xf32> -> vector<16x128xf32>
    %24 = arith.addf %20, %23 : vector<16x128xf32>
    %25 = vector.extract_strided_slice %15 {offsets = [32, 0], sizes = [16, 32], strides = [1, 1]} : vector<240x32xbf16> to vector<16x32xbf16>
    %c64 = arith.constant 64 : index
    %c0_12 = arith.constant 0 : index
    %26 = vector.load %arg3[%c64, %c0_12] : memref<480x128xbf16, #tpu.memory_space<vmem>>, vector<32x128xbf16>
    %cst_13 = arith.constant dense<0.000000e+00> : vector<16x128xf32>
    %27 = tpu.matmul %25, %26, %cst_13 {dimension_numbers = #tpu.dot_dimension_numbers<[1], [0], [0], [1], [0, 0, 1, 1], [], []>} : vector<16x32xbf16>, vector<32x128xbf16>, vector<16x128xf32> -> vector<16x128xf32>
    %28 = arith.addf %24, %27 : vector<16x128xf32>
    %29 = vector.extract_strided_slice %15 {offsets = [48, 0], sizes = [16, 32], strides = [1, 1]} : vector<240x32xbf16> to vector<16x32xbf16>
    %c96 = arith.constant 96 : index
    %c0_14 = arith.constant 0 : index
    %30 = vector.load %arg3[%c96, %c0_14] : memref<480x128xbf16, #tpu.memory_space<vmem>>, vector<32x128xbf16>
    %cst_15 = arith.constant dense<0.000000e+00> : vector<16x128xf32>
    %31 = tpu.matmul %29, %30, %cst_15 {dimension_numbers = #tpu.dot_dimension_numbers<[1], [0], [0], [1], [0, 0, 1, 1], [], []>} : vector<16x32xbf16>, vector<32x128xbf16>, vector<16x128xf32> -> vector<16x128xf32>
    %32 = arith.addf %28, %31 : vector<16x128xf32>
    %33 = vector.extract_strided_slice %15 {offsets = [64, 0], sizes = [16, 32], strides = [1, 1]} : vector<240x32xbf16> to vector<16x32xbf16>
    %c128 = arith.constant 128 : index
    %c0_16 = arith.constant 0 : index
    %34 = vector.load %arg3[%c128, %c0_16] : memref<480x128xbf16, #tpu.memory_space<vmem>>, vector<32x128xbf16>
    %cst_17 = arith.constant dense<0.000000e+00> : vector<16x128xf32>
    %35 = tpu.matmul %33, %34, %cst_17 {dimension_numbers = #tpu.dot_dimension_numbers<[1], [0], [0], [1], [0, 0, 1, 1], [], []>} : vector<16x32xbf16>, vector<32x128xbf16>, vector<16x128xf32> -> vector<16x128xf32>
    %36 = arith.addf %32, %35 : vector<16x128xf32>
    %37 = vector.extract_strided_slice %15 {offsets = [80, 0], sizes = [16, 32], strides = [1, 1]} : vector<240x32xbf16> to vector<16x32xbf16>
    %c160 = arith.constant 160 : index
    %c0_18 = arith.constant 0 : index
    %38 = vector.load %arg3[%c160, %c0_18] : memref<480x128xbf16, #tpu.memory_space<vmem>>, vector<32x128xbf16>
    %cst_19 = arith.constant dense<0.000000e+00> : vector<16x128xf32>
    %39 = tpu.matmul %37, %38, %cst_19 {dimension_numbers = #tpu.dot_dimension_numbers<[1], [0], [0], [1], [0, 0, 1, 1], [], []>} : vector<16x32xbf16>, vector<32x128xbf16>, vector<16x128xf32> -> vector<16x128xf32>
    %40 = arith.addf %36, %39 : vector<16x128xf32>
    %41 = vector.extract_strided_slice %15 {offsets = [96, 0], sizes = [16, 32], strides = [1, 1]} : vector<240x32xbf16> to vector<16x32xbf16>
    %c192 = arith.constant 192 : index
    %c0_20 = arith.constant 0 : index
    %42 = vector.load %arg3[%c192, %c0_20] : memref<480x128xbf16, #tpu.memory_space<vmem>>, vector<32x128xbf16>
    %cst_21 = arith.constant dense<0.000000e+00> : vector<16x128xf32>
    %43 = tpu.matmul %41, %42, %cst_21 {dimension_numbers = #tpu.dot_dimension_numbers<[1], [0], [0], [1], [0, 0, 1, 1], [], []>} : vector<16x32xbf16>, vector<32x128xbf16>, vector<16x128xf32> -> vector<16x128xf32>
    %44 = arith.addf %40, %43 : vector<16x128xf32>
    %45 = vector.extract_strided_slice %15 {offsets = [112, 0], sizes = [16, 32], strides = [1, 1]} : vector<240x32xbf16> to vector<16x32xbf16>
    %c224 = arith.constant 224 : index
    %c0_22 = arith.constant 0 : index
    %46 = vector.load %arg3[%c224, %c0_22] : memref<480x128xbf16, #tpu.memory_space<vmem>>, vector<32x128xbf16>
    %cst_23 = arith.constant dense<0.000000e+00> : vector<16x128xf32>
    %47 = tpu.matmul %45, %46, %cst_23 {dimension_numbers = #tpu.dot_dimension_numbers<[1], [0], [0], [1], [0, 0, 1, 1], [], []>} : vector<16x32xbf16>, vector<32x128xbf16>, vector<16x128xf32> -> vector<16x128xf32>
    %48 = arith.addf %44, %47 : vector<16x128xf32>
    %49 = vector.extract_strided_slice %15 {offsets = [128, 0], sizes = [16, 32], strides = [1, 1]} : vector<240x32xbf16> to vector<16x32xbf16>
    %c256 = arith.constant 256 : index
    %c0_24 = arith.constant 0 : index
    %50 = vector.load %arg3[%c256, %c0_24] : memref<480x128xbf16, #tpu.memory_space<vmem>>, vector<32x128xbf16>
    %cst_25 = arith.constant dense<0.000000e+00> : vector<16x128xf32>
    %51 = tpu.matmul %49, %50, %cst_25 {dimension_numbers = #tpu.dot_dimension_numbers<[1], [0], [0], [1], [0, 0, 1, 1], [], []>} : vector<16x32xbf16>, vector<32x128xbf16>, vector<16x128xf32> -> vector<16x128xf32>
    %52 = arith.addf %48, %51 : vector<16x128xf32>
    %53 = vector.extract_strided_slice %15 {offsets = [144, 0], sizes = [16, 32], strides = [1, 1]} : vector<240x32xbf16> to vector<16x32xbf16>
    %c288 = arith.constant 288 : index
    %c0_26 = arith.constant 0 : index
    %54 = vector.load %arg3[%c288, %c0_26] : memref<480x128xbf16, #tpu.memory_space<vmem>>, vector<32x128xbf16>
    %cst_27 = arith.constant dense<0.000000e+00> : vector<16x128xf32>
    %55 = tpu.matmul %53, %54, %cst_27 {dimension_numbers = #tpu.dot_dimension_numbers<[1], [0], [0], [1], [0, 0, 1, 1], [], []>} : vector<16x32xbf16>, vector<32x128xbf16>, vector<16x128xf32> -> vector<16x128xf32>
    %56 = arith.addf %52, %55 : vector<16x128xf32>
    %57 = vector.extract_strided_slice %15 {offsets = [160, 0], sizes = [16, 32], strides = [1, 1]} : vector<240x32xbf16> to vector<16x32xbf16>
    %c320 = arith.constant 320 : index
    %c0_28 = arith.constant 0 : index
    %58 = vector.load %arg3[%c320, %c0_28] : memref<480x128xbf16, #tpu.memory_space<vmem>>, vector<32x128xbf16>
    %cst_29 = arith.constant dense<0.000000e+00> : vector<16x128xf32>
    %59 = tpu.matmul %57, %58, %cst_29 {dimension_numbers = #tpu.dot_dimension_numbers<[1], [0], [0], [1], [0, 0, 1, 1], [], []>} : vector<16x32xbf16>, vector<32x128xbf16>, vector<16x128xf32> -> vector<16x128xf32>
    %60 = arith.addf %56, %59 : vector<16x128xf32>
    %61 = vector.extract_strided_slice %15 {offsets = [176, 0], sizes = [16, 32], strides = [1, 1]} : vector<240x32xbf16> to vector<16x32xbf16>
    %c352 = arith.constant 352 : index
    %c0_30 = arith.constant 0 : index
    %62 = vector.load %arg3[%c352, %c0_30] : memref<480x128xbf16, #tpu.memory_space<vmem>>, vector<32x128xbf16>
    %cst_31 = arith.constant dense<0.000000e+00> : vector<16x128xf32>
    %63 = tpu.matmul %61, %62, %cst_31 {dimension_numbers = #tpu.dot_dimension_numbers<[1], [0], [0], [1], [0, 0, 1, 1], [], []>} : vector<16x32xbf16>, vector<32x128xbf16>, vector<16x128xf32> -> vector<16x128xf32>
    %64 = arith.addf %60, %63 : vector<16x128xf32>
    %65 = vector.extract_strided_slice %15 {offsets = [192, 0], sizes = [16, 32], strides = [1, 1]} : vector<240x32xbf16> to vector<16x32xbf16>
    %c384 = arith.constant 384 : index
    %c0_32 = arith.constant 0 : index
    %66 = vector.load %arg3[%c384, %c0_32] : memref<480x128xbf16, #tpu.memory_space<vmem>>, vector<32x128xbf16>
    %cst_33 = arith.constant dense<0.000000e+00> : vector<16x128xf32>
    %67 = tpu.matmul %65, %66, %cst_33 {dimension_numbers = #tpu.dot_dimension_numbers<[1], [0], [0], [1], [0, 0, 1, 1], [], []>} : vector<16x32xbf16>, vector<32x128xbf16>, vector<16x128xf32> -> vector<16x128xf32>
    %68 = arith.addf %64, %67 : vector<16x128xf32>
    %69 = vector.extract_strided_slice %15 {offsets = [208, 0], sizes = [16, 32], strides = [1, 1]} : vector<240x32xbf16> to vector<16x32xbf16>
    %c416 = arith.constant 416 : index
    %c0_34 = arith.constant 0 : index
    %70 = vector.load %arg3[%c416, %c0_34] : memref<480x128xbf16, #tpu.memory_space<vmem>>, vector<32x128xbf16>
    %cst_35 = arith.constant dense<0.000000e+00> : vector<16x128xf32>
    %71 = tpu.matmul %69, %70, %cst_35 {dimension_numbers = #tpu.dot_dimension_numbers<[1], [0], [0], [1], [0, 0, 1, 1], [], []>} : vector<16x32xbf16>, vector<32x128xbf16>, vector<16x128xf32> -> vector<16x128xf32>
    %72 = arith.addf %68, %71 : vector<16x128xf32>
    %73 = vector.extract_strided_slice %15 {offsets = [224, 0], sizes = [16, 32], strides = [1, 1]} : vector<240x32xbf16> to vector<16x32xbf16>
    %c448 = arith.constant 448 : index
    %c0_36 = arith.constant 0 : index
    %74 = vector.load %arg3[%c448, %c0_36] : memref<480x128xbf16, #tpu.memory_space<vmem>>, vector<32x128xbf16>
    %cst_37 = arith.constant dense<0.000000e+00> : vector<16x128xf32>
    %75 = tpu.matmul %73, %74, %cst_37 {dimension_numbers = #tpu.dot_dimension_numbers<[1], [0], [0], [1], [0, 0, 1, 1], [], []>} : vector<16x32xbf16>, vector<32x128xbf16>, vector<16x128xf32> -> vector<16x128xf32>
    %76 = arith.addf %72, %75 : vector<16x128xf32>
    %c0_38 = arith.constant 0 : index
    %c0_39 = arith.constant 0 : index
    %77 = vector.load %arg5[%c0_38, %c0_39] : memref<1x128xf32, #tpu.memory_space<vmem>>, vector<1x128xf32>
    %78 = vector.broadcast %77 : vector<1x128xf32> to vector<16x128xf32>
    %79 = arith.addf %76, %78 : vector<16x128xf32>
    %c0_40 = arith.constant 0 : index
    %c0_41 = arith.constant 0 : index
    %80 = vector.load %arg4[%c0_40, %c0_41] : memref<32x128xf32, #tpu.memory_space<vmem>>, vector<32x128xf32>
    %cst_42 = arith.constant 0.000000e+00 : f32
    %81 = vector.broadcast %cst_42 : f32 to vector<2x32xf32>
    %cst_43 = arith.constant 0.000000e+00 : f32
    %82 = vector.broadcast %cst_43 : f32 to vector<2x32xf32>
    %83 = vector.extract_strided_slice %79 {offsets = [0, 0], sizes = [2, 128], strides = [1, 1]} : vector<16x128xf32> to vector<2x128xf32>
    %cst_44 = arith.constant dense<0.000000e+00> : vector<2x128xf32>
    %84 = tpu.matmul %81, %80, %cst_44 {dimension_numbers = #tpu.dot_dimension_numbers<[1], [0], [0], [1], [0, 0, 1, 1], [], []>} : vector<2x32xf32>, vector<32x128xf32>, vector<2x128xf32> -> vector<2x128xf32>
    %85 = arith.addf %83, %84 : vector<2x128xf32>
    %86 = math.tanh %85 : vector<2x128xf32>
    %cst_45 = arith.constant 5.000000e-01 : f32
    %87 = vector.broadcast %cst_45 : f32 to vector<2x128xf32>
    %88 = arith.mulf %87, %86 : vector<2x128xf32>
    %cst_46 = arith.constant 5.000000e-01 : f32
    %89 = vector.broadcast %cst_46 : f32 to vector<2x128xf32>
    %90 = arith.addf %88, %89 : vector<2x128xf32>
    %91 = vector.extract_strided_slice %90 {offsets = [0, 0], sizes = [2, 32], strides = [1, 1]} : vector<2x128xf32> to vector<2x32xf32>
    %92 = vector.extract_strided_slice %90 {offsets = [0, 32], sizes = [2, 32], strides = [1, 1]} : vector<2x128xf32> to vector<2x32xf32>
    %93 = vector.extract_strided_slice %86 {offsets = [0, 64], sizes = [2, 32], strides = [1, 1]} : vector<2x128xf32> to vector<2x32xf32>
    %94 = vector.extract_strided_slice %90 {offsets = [0, 96], sizes = [2, 32], strides = [1, 1]} : vector<2x128xf32> to vector<2x32xf32>
    %95 = arith.mulf %92, %82 : vector<2x32xf32>
    %96 = arith.mulf %91, %93 : vector<2x32xf32>
    %97 = arith.addf %95, %96 : vector<2x32xf32>
    %98 = math.tanh %97 : vector<2x32xf32>
    %99 = arith.mulf %94, %98 : vector<2x32xf32>
    %100 = vector.extract_strided_slice %79 {offsets = [2, 0], sizes = [2, 128], strides = [1, 1]} : vector<16x128xf32> to vector<2x128xf32>
    %cst_47 = arith.constant dense<0.000000e+00> : vector<2x128xf32>
    %101 = tpu.matmul %99, %80, %cst_47 {dimension_numbers = #tpu.dot_dimension_numbers<[1], [0], [0], [1], [0, 0, 1, 1], [], []>} : vector<2x32xf32>, vector<32x128xf32>, vector<2x128xf32> -> vector<2x128xf32>
    %102 = arith.addf %100, %101 : vector<2x128xf32>
    %103 = math.tanh %102 : vector<2x128xf32>
    %cst_48 = arith.constant 5.000000e-01 : f32
    %104 = vector.broadcast %cst_48 : f32 to vector<2x128xf32>
    %105 = arith.mulf %104, %103 : vector<2x128xf32>
    %cst_49 = arith.constant 5.000000e-01 : f32
    %106 = vector.broadcast %cst_49 : f32 to vector<2x128xf32>
    %107 = arith.addf %105, %106 : vector<2x128xf32>
    %108 = vector.extract_strided_slice %107 {offsets = [0, 0], sizes = [2, 32], strides = [1, 1]} : vector<2x128xf32> to vector<2x32xf32>
    %109 = vector.extract_strided_slice %107 {offsets = [0, 32], sizes = [2, 32], strides = [1, 1]} : vector<2x128xf32> to vector<2x32xf32>
    %110 = vector.extract_strided_slice %103 {offsets = [0, 64], sizes = [2, 32], strides = [1, 1]} : vector<2x128xf32> to vector<2x32xf32>
    %111 = vector.extract_strided_slice %107 {offsets = [0, 96], sizes = [2, 32], strides = [1, 1]} : vector<2x128xf32> to vector<2x32xf32>
    %112 = arith.mulf %109, %97 : vector<2x32xf32>
    %113 = arith.mulf %108, %110 : vector<2x32xf32>
    %114 = arith.addf %112, %113 : vector<2x32xf32>
    %115 = math.tanh %114 : vector<2x32xf32>
    %116 = arith.mulf %111, %115 : vector<2x32xf32>
    %117 = vector.extract_strided_slice %79 {offsets = [4, 0], sizes = [2, 128], strides = [1, 1]} : vector<16x128xf32> to vector<2x128xf32>
    %cst_50 = arith.constant dense<0.000000e+00> : vector<2x128xf32>
    %118 = tpu.matmul %116, %80, %cst_50 {dimension_numbers = #tpu.dot_dimension_numbers<[1], [0], [0], [1], [0, 0, 1, 1], [], []>} : vector<2x32xf32>, vector<32x128xf32>, vector<2x128xf32> -> vector<2x128xf32>
    %119 = arith.addf %117, %118 : vector<2x128xf32>
    %120 = math.tanh %119 : vector<2x128xf32>
    %cst_51 = arith.constant 5.000000e-01 : f32
    %121 = vector.broadcast %cst_51 : f32 to vector<2x128xf32>
    %122 = arith.mulf %121, %120 : vector<2x128xf32>
    %cst_52 = arith.constant 5.000000e-01 : f32
    %123 = vector.broadcast %cst_52 : f32 to vector<2x128xf32>
    %124 = arith.addf %122, %123 : vector<2x128xf32>
    %125 = vector.extract_strided_slice %124 {offsets = [0, 0], sizes = [2, 32], strides = [1, 1]} : vector<2x128xf32> to vector<2x32xf32>
    %126 = vector.extract_strided_slice %124 {offsets = [0, 32], sizes = [2, 32], strides = [1, 1]} : vector<2x128xf32> to vector<2x32xf32>
    %127 = vector.extract_strided_slice %120 {offsets = [0, 64], sizes = [2, 32], strides = [1, 1]} : vector<2x128xf32> to vector<2x32xf32>
    %128 = vector.extract_strided_slice %124 {offsets = [0, 96], sizes = [2, 32], strides = [1, 1]} : vector<2x128xf32> to vector<2x32xf32>
    %129 = arith.mulf %126, %114 : vector<2x32xf32>
    %130 = arith.mulf %125, %127 : vector<2x32xf32>
    %131 = arith.addf %129, %130 : vector<2x32xf32>
    %132 = math.tanh %131 : vector<2x32xf32>
    %133 = arith.mulf %128, %132 : vector<2x32xf32>
    %134 = vector.extract_strided_slice %79 {offsets = [6, 0], sizes = [2, 128], strides = [1, 1]} : vector<16x128xf32> to vector<2x128xf32>
    %cst_53 = arith.constant dense<0.000000e+00> : vector<2x128xf32>
    %135 = tpu.matmul %133, %80, %cst_53 {dimension_numbers = #tpu.dot_dimension_numbers<[1], [0], [0], [1], [0, 0, 1, 1], [], []>} : vector<2x32xf32>, vector<32x128xf32>, vector<2x128xf32> -> vector<2x128xf32>
    %136 = arith.addf %134, %135 : vector<2x128xf32>
    %137 = math.tanh %136 : vector<2x128xf32>
    %cst_54 = arith.constant 5.000000e-01 : f32
    %138 = vector.broadcast %cst_54 : f32 to vector<2x128xf32>
    %139 = arith.mulf %138, %137 : vector<2x128xf32>
    %cst_55 = arith.constant 5.000000e-01 : f32
    %140 = vector.broadcast %cst_55 : f32 to vector<2x128xf32>
    %141 = arith.addf %139, %140 : vector<2x128xf32>
    %142 = vector.extract_strided_slice %141 {offsets = [0, 0], sizes = [2, 32], strides = [1, 1]} : vector<2x128xf32> to vector<2x32xf32>
    %143 = vector.extract_strided_slice %141 {offsets = [0, 32], sizes = [2, 32], strides = [1, 1]} : vector<2x128xf32> to vector<2x32xf32>
    %144 = vector.extract_strided_slice %137 {offsets = [0, 64], sizes = [2, 32], strides = [1, 1]} : vector<2x128xf32> to vector<2x32xf32>
    %145 = vector.extract_strided_slice %141 {offsets = [0, 96], sizes = [2, 32], strides = [1, 1]} : vector<2x128xf32> to vector<2x32xf32>
    %146 = arith.mulf %143, %131 : vector<2x32xf32>
    %147 = arith.mulf %142, %144 : vector<2x32xf32>
    %148 = arith.addf %146, %147 : vector<2x32xf32>
    %149 = math.tanh %148 : vector<2x32xf32>
    %150 = arith.mulf %145, %149 : vector<2x32xf32>
    %151 = vector.extract_strided_slice %79 {offsets = [8, 0], sizes = [2, 128], strides = [1, 1]} : vector<16x128xf32> to vector<2x128xf32>
    %cst_56 = arith.constant dense<0.000000e+00> : vector<2x128xf32>
    %152 = tpu.matmul %150, %80, %cst_56 {dimension_numbers = #tpu.dot_dimension_numbers<[1], [0], [0], [1], [0, 0, 1, 1], [], []>} : vector<2x32xf32>, vector<32x128xf32>, vector<2x128xf32> -> vector<2x128xf32>
    %153 = arith.addf %151, %152 : vector<2x128xf32>
    %154 = math.tanh %153 : vector<2x128xf32>
    %cst_57 = arith.constant 5.000000e-01 : f32
    %155 = vector.broadcast %cst_57 : f32 to vector<2x128xf32>
    %156 = arith.mulf %155, %154 : vector<2x128xf32>
    %cst_58 = arith.constant 5.000000e-01 : f32
    %157 = vector.broadcast %cst_58 : f32 to vector<2x128xf32>
    %158 = arith.addf %156, %157 : vector<2x128xf32>
    %159 = vector.extract_strided_slice %158 {offsets = [0, 0], sizes = [2, 32], strides = [1, 1]} : vector<2x128xf32> to vector<2x32xf32>
    %160 = vector.extract_strided_slice %158 {offsets = [0, 32], sizes = [2, 32], strides = [1, 1]} : vector<2x128xf32> to vector<2x32xf32>
    %161 = vector.extract_strided_slice %154 {offsets = [0, 64], sizes = [2, 32], strides = [1, 1]} : vector<2x128xf32> to vector<2x32xf32>
    %162 = vector.extract_strided_slice %158 {offsets = [0, 96], sizes = [2, 32], strides = [1, 1]} : vector<2x128xf32> to vector<2x32xf32>
    %163 = arith.mulf %160, %148 : vector<2x32xf32>
    %164 = arith.mulf %159, %161 : vector<2x32xf32>
    %165 = arith.addf %163, %164 : vector<2x32xf32>
    %166 = math.tanh %165 : vector<2x32xf32>
    %167 = arith.mulf %162, %166 : vector<2x32xf32>
    %168 = vector.extract_strided_slice %79 {offsets = [10, 0], sizes = [2, 128], strides = [1, 1]} : vector<16x128xf32> to vector<2x128xf32>
    %cst_59 = arith.constant dense<0.000000e+00> : vector<2x128xf32>
    %169 = tpu.matmul %167, %80, %cst_59 {dimension_numbers = #tpu.dot_dimension_numbers<[1], [0], [0], [1], [0, 0, 1, 1], [], []>} : vector<2x32xf32>, vector<32x128xf32>, vector<2x128xf32> -> vector<2x128xf32>
    %170 = arith.addf %168, %169 : vector<2x128xf32>
    %171 = math.tanh %170 : vector<2x128xf32>
    %cst_60 = arith.constant 5.000000e-01 : f32
    %172 = vector.broadcast %cst_60 : f32 to vector<2x128xf32>
    %173 = arith.mulf %172, %171 : vector<2x128xf32>
    %cst_61 = arith.constant 5.000000e-01 : f32
    %174 = vector.broadcast %cst_61 : f32 to vector<2x128xf32>
    %175 = arith.addf %173, %174 : vector<2x128xf32>
    %176 = vector.extract_strided_slice %175 {offsets = [0, 0], sizes = [2, 32], strides = [1, 1]} : vector<2x128xf32> to vector<2x32xf32>
    %177 = vector.extract_strided_slice %175 {offsets = [0, 32], sizes = [2, 32], strides = [1, 1]} : vector<2x128xf32> to vector<2x32xf32>
    %178 = vector.extract_strided_slice %171 {offsets = [0, 64], sizes = [2, 32], strides = [1, 1]} : vector<2x128xf32> to vector<2x32xf32>
    %179 = vector.extract_strided_slice %175 {offsets = [0, 96], sizes = [2, 32], strides = [1, 1]} : vector<2x128xf32> to vector<2x32xf32>
    %180 = arith.mulf %177, %165 : vector<2x32xf32>
    %181 = arith.mulf %176, %178 : vector<2x32xf32>
    %182 = arith.addf %180, %181 : vector<2x32xf32>
    %183 = math.tanh %182 : vector<2x32xf32>
    %184 = arith.mulf %179, %183 : vector<2x32xf32>
    %185 = vector.extract_strided_slice %79 {offsets = [12, 0], sizes = [2, 128], strides = [1, 1]} : vector<16x128xf32> to vector<2x128xf32>
    %cst_62 = arith.constant dense<0.000000e+00> : vector<2x128xf32>
    %186 = tpu.matmul %184, %80, %cst_62 {dimension_numbers = #tpu.dot_dimension_numbers<[1], [0], [0], [1], [0, 0, 1, 1], [], []>} : vector<2x32xf32>, vector<32x128xf32>, vector<2x128xf32> -> vector<2x128xf32>
    %187 = arith.addf %185, %186 : vector<2x128xf32>
    %188 = math.tanh %187 : vector<2x128xf32>
    %cst_63 = arith.constant 5.000000e-01 : f32
    %189 = vector.broadcast %cst_63 : f32 to vector<2x128xf32>
    %190 = arith.mulf %189, %188 : vector<2x128xf32>
    %cst_64 = arith.constant 5.000000e-01 : f32
    %191 = vector.broadcast %cst_64 : f32 to vector<2x128xf32>
    %192 = arith.addf %190, %191 : vector<2x128xf32>
    %193 = vector.extract_strided_slice %192 {offsets = [0, 0], sizes = [2, 32], strides = [1, 1]} : vector<2x128xf32> to vector<2x32xf32>
    %194 = vector.extract_strided_slice %192 {offsets = [0, 32], sizes = [2, 32], strides = [1, 1]} : vector<2x128xf32> to vector<2x32xf32>
    %195 = vector.extract_strided_slice %188 {offsets = [0, 64], sizes = [2, 32], strides = [1, 1]} : vector<2x128xf32> to vector<2x32xf32>
    %196 = vector.extract_strided_slice %192 {offsets = [0, 96], sizes = [2, 32], strides = [1, 1]} : vector<2x128xf32> to vector<2x32xf32>
    %197 = arith.mulf %194, %182 : vector<2x32xf32>
    %198 = arith.mulf %193, %195 : vector<2x32xf32>
    %199 = arith.addf %197, %198 : vector<2x32xf32>
    %200 = math.tanh %199 : vector<2x32xf32>
    %201 = arith.mulf %196, %200 : vector<2x32xf32>
    %202 = vector.extract_strided_slice %79 {offsets = [14, 0], sizes = [2, 128], strides = [1, 1]} : vector<16x128xf32> to vector<2x128xf32>
    %cst_65 = arith.constant dense<0.000000e+00> : vector<2x128xf32>
    %203 = tpu.matmul %201, %80, %cst_65 {dimension_numbers = #tpu.dot_dimension_numbers<[1], [0], [0], [1], [0, 0, 1, 1], [], []>} : vector<2x32xf32>, vector<32x128xf32>, vector<2x128xf32> -> vector<2x128xf32>
    %204 = arith.addf %202, %203 : vector<2x128xf32>
    %205 = math.tanh %204 : vector<2x128xf32>
    %cst_66 = arith.constant 5.000000e-01 : f32
    %206 = vector.broadcast %cst_66 : f32 to vector<2x128xf32>
    %207 = arith.mulf %206, %205 : vector<2x128xf32>
    %cst_67 = arith.constant 5.000000e-01 : f32
    %208 = vector.broadcast %cst_67 : f32 to vector<2x128xf32>
    %209 = arith.addf %207, %208 : vector<2x128xf32>
    %210 = vector.extract_strided_slice %209 {offsets = [0, 0], sizes = [2, 32], strides = [1, 1]} : vector<2x128xf32> to vector<2x32xf32>
    %211 = vector.extract_strided_slice %209 {offsets = [0, 32], sizes = [2, 32], strides = [1, 1]} : vector<2x128xf32> to vector<2x32xf32>
    %212 = vector.extract_strided_slice %205 {offsets = [0, 64], sizes = [2, 32], strides = [1, 1]} : vector<2x128xf32> to vector<2x32xf32>
    %213 = vector.extract_strided_slice %209 {offsets = [0, 96], sizes = [2, 32], strides = [1, 1]} : vector<2x128xf32> to vector<2x32xf32>
    %214 = arith.mulf %211, %199 : vector<2x32xf32>
    %215 = arith.mulf %210, %212 : vector<2x32xf32>
    %216 = arith.addf %214, %215 : vector<2x32xf32>
    %217 = math.tanh %216 : vector<2x32xf32>
    %218 = arith.mulf %213, %217 : vector<2x32xf32>
    %c0_68 = arith.constant 0 : index
    %c0_69 = arith.constant 0 : index
    %219 = vector.load %arg6[%c0_68, %c0_69] : memref<1x32xf32, #tpu.memory_space<vmem>>, vector<1x32xf32>
    %220 = vector.broadcast %219 : vector<1x32xf32> to vector<2x32xf32>
    %221 = arith.mulf %218, %220 : vector<2x32xf32>
    %cst_70 = arith.constant dense<0.000000e+00> : vector<2xf32>
    %222 = vector.multi_reduction <add>, %221, %cst_70 [1] : vector<2x32xf32> to vector<2xf32>
    %223 = vector.shape_cast %222 : vector<2xf32> to vector<2x1xf32>
    %c0_71 = arith.constant 0 : index
    %c0_72 = arith.constant 0 : index
    %224 = vector.load %arg7[%c0_71, %c0_72] : memref<1x1xf32, #tpu.memory_space<vmem>>, vector<1x1xf32>
    %225 = vector.broadcast %224 : vector<1x1xf32> to vector<2x1xf32>
    %226 = arith.addf %223, %225 : vector<2x1xf32>
    %c0_73 = arith.constant 0 : index
    %c0_74 = arith.constant 0 : index
    %227 = vector.load %arg8[%c0_73, %c0_74] : memref<2x1xf32, #tpu.memory_space<vmem>>, vector<2x1xf32>
    tpu.vector_store %arg8[%c0_73, %c0_74], %226 {strides = array<i32>} : memref<2x1xf32, #tpu.memory_space<vmem>>, vector<2x1xf32>,
    return
  }
}

</mosaic_0001>

<llo_original>
// kernel: rdm_cnn_lstm_forward.2
$region0: #{rdm_cnn_lstm_forward.2}
  #allocation0 [shape = 'u32[]', space=smem, size = 0x4, offset = 0x4, fixed_abs, tag = 'smem constant byte address 0x4 - core index']
  #allocation1 [shape = 'u32[144,128]{1,0:T(1,128)}', space=vmem, size = 0x12000, scoped, tag = 'internal scratch']
  %s0 = inlined_call_operand.vmem [shape: bf16[9,4608], index: 0, kind: input, shape index: {}]
  %s1 = inlined_call_operand.vmem [shape: bf16[16,9], index: 1, kind: input, shape index: {}]
  %s2 = inlined_call_operand.vmem [shape: f32[16,1], index: 2, kind: input, shape index: {}]
  %s3 = inlined_call_operand.vmem [shape: bf16[16,1152], index: 3, kind: output, shape index: {}]
  %s4 = sld [smem:[#allocation0]]
  $region22: #{rdm_cnn_lstm_forward.2} parent=0
    _
  %s6 = ssub.s32 1, %s4
  %s7 = scalar_select 0, %s6, %s4
  // Predicated region
  $region2: #{rdm_cnn_lstm_forward.2} parent=0 // pred_check
    _
  $region3: #{rdm_cnn_lstm_forward.2} parent=0 // pred_check_branch
    %9 = sbr.rel (0) target = $region5
  $region4: #{rdm_cnn_lstm_forward.2} parent=0 // pred_region
    _
  $region5: #{rdm_cnn_lstm_forward.2} parent=0 // pred_fallthru
    _
  // Predicated region
  $region6: #{rdm_cnn_lstm_forward.2} parent=0 // pred_check
    _
  $region7: #{rdm_cnn_lstm_forward.2} parent=0 // pred_check_branch
    %11 = sbr.rel (0) target = $region9
  $region8: #{rdm_cnn_lstm_forward.2} parent=0 // pred_region
    _
  $region9: #{rdm_cnn_lstm_forward.2} parent=0 // pred_fallthru
    _
  // Predicated region
  $region10: #{rdm_cnn_lstm_forward.2} parent=0 // pred_check
    _
  $region11: #{rdm_cnn_lstm_forward.2} parent=0 // pred_check_branch
    %13 = sbr.rel (0) target = $region13
  $region12: #{rdm_cnn_lstm_forward.2} parent=0 // pred_region
    _
  $region13: #{rdm_cnn_lstm_forward.2} parent=0 // pred_fallthru
    _
  %v15 = vld [vmem:[%s1] sm:$0xf]
  %v16 = vld [vmem:[%s1 + $0x4] sm:$0xf]
  %v17 = vld [vmem:[%s0] sm:$0xff]
  %v18 = vld [vmem:[%s0 + $0x8] sm:$0xff]
  %v19 = vld [vmem:[%s0 + $0x10] sm:$0xff]
  %v20 = vld [vmem:[%s0 + $0x18] sm:$0xff]
  %v21 = vld [vmem:[%s0 + $0x20] sm:$0xff]
  %v22 = vld [vmem:[%s0 + $0x28] sm:$0xff]
  %v23 = vld [vmem:[%s0 + $0x30] sm:$0xff]
  %v24 = vld [vmem:[%s0 + $0x38] sm:$0xff]
  %v25 = vld [vmem:[%s0 + $0x40] sm:$0xff]
  %v26 = vld [vmem:[%s0 + $0x48] sm:$0xff]
  %v27 = vld [vmem:[%s0 + $0x50] sm:$0xff]
  %v28 = vld [vmem:[%s0 + $0x58] sm:$0xff]
  %v29 = vld [vmem:[%s0 + $0x60] sm:$0xff]
  %v30 = vld [vmem:[%s0 + $0x68] sm:$0xff]
  %v31 = vld [vmem:[%s0 + $0x70] sm:$0xff]
  %v32 = vld [vmem:[%s0 + $0x78] sm:$0xff]
  %v33 = vld [vmem:[%s0 + $0x80] sm:$0xff]
  %v34 = vld [vmem:[%s0 + $0x88] sm:$0xff]
  %v35 = vld [vmem:[%s0 + $0x90] sm:$0x11]
  %v36 = vld [vmem:[%s0 + $0x98] sm:$0x11]
  %v37 = vld [vmem:[%s0 + $0xa0] sm:$0x11]
  %v38 = vld [vmem:[%s0 + $0xa8] sm:$0x11]
  %v39 = vld [vmem:[%s0 + $0xb0] sm:$0x11]
  %v40 = vld [vmem:[%s0 + $0xb8] sm:$0x11]
  %v41 = vld [vmem:[%s0 + $0xc0] sm:$0x11]
  %v42 = vld [vmem:[%s0 + $0xc8] sm:$0x11]
  %v43 = vld [vmem:[%s0 + $0xd0] sm:$0x11]
  %v44 = vld [vmem:[%s0 + $0xd8] sm:$0x11]
  %v45 = vld [vmem:[%s0 + $0xe0] sm:$0x11]
  %v46 = vld [vmem:[%s0 + $0xe8] sm:$0x11]
  %v47 = vld [vmem:[%s0 + $0xf0] sm:$0x11]
  %v48 = vld [vmem:[%s0 + $0xf8] sm:$0x11]
  %v49 = vld [vmem:[%s0 + $0x100] sm:$0x11]
  %v50 = vld [vmem:[%s0 + $0x108] sm:$0x11]
  %v51 = vld [vmem:[%s0 + $0x110] sm:$0x11]
  %v52 = vld [vmem:[%s0 + $0x118] sm:$0x11]
  %v55 = vunpack.c.l.b16 %v15
  %v56 = vunpack.c.l.b16 %v16
  %v57 = vpack.c.b16 %v56, %v55
  %v94 = vunpack.c.l.b16 %v17
  %v95 = vunpack.c.h.b16 %v17
  %v96 = vunpack.c.l.b16 %v18
  %v97 = vunpack.c.h.b16 %v18
  %v98 = vunpack.c.l.b16 %v19
  %v99 = vunpack.c.h.b16 %v19
  %v100 = vunpack.c.l.b16 %v20
  %v101 = vunpack.c.h.b16 %v20
  %v102 = vunpack.c.l.b16 %v21
  %v103 = vunpack.c.h.b16 %v21
  %v104 = vunpack.c.l.b16 %v22
  %v105 = vunpack.c.h.b16 %v22
  %v106 = vunpack.c.l.b16 %v23
  %v107 = vunpack.c.h.b16 %v23
  %v108 = vunpack.c.l.b16 %v24
  %v109 = vunpack.c.h.b16 %v24
  %v110 = vunpack.c.l.b16 %v25
  %v111 = vunpack.c.h.b16 %v25
  %v112 = vunpack.c.l.b16 %v26
  %v113 = vunpack.c.h.b16 %v26
  %v114 = vunpack.c.l.b16 %v27
  %v115 = vunpack.c.h.b16 %v27
  %v116 = vunpack.c.l.b16 %v28
  %v117 = vunpack.c.h.b16 %v28
  %v118 = vunpack.c.l.b16 %v29
  %v119 = vunpack.c.h.b16 %v29
  %v120 = vunpack.c.l.b16 %v30
  %v121 = vunpack.c.h.b16 %v30
  %v122 = vunpack.c.l.b16 %v31
  %v123 = vunpack.c.h.b16 %v31
  %v124 = vunpack.c.l.b16 %v32
  %v125 = vunpack.c.h.b16 %v32
  %v126 = vunpack.c.l.b16 %v33
  %v127 = vunpack.c.h.b16 %v33
  %v128 = vunpack.c.l.b16 %v34
  %v129 = vunpack.c.h.b16 %v34
  %v130 = vunpack.c.l.b16 %v35
  %v131 = vunpack.c.h.b16 %v35
  %v132 = vunpack.c.l.b16 %v36
  %v133 = vunpack.c.h.b16 %v36
  %v134 = vunpack.c.l.b16 %v37
  %v135 = vunpack.c.h.b16 %v37
  %v136 = vunpack.c.l.b16 %v38
  %v137 = vunpack.c.h.b16 %v38
  %v138 = vunpack.c.l.b16 %v39
  %v139 = vunpack.c.h.b16 %v39
  %v140 = vunpack.c.l.b16 %v40
  %v141 = vunpack.c.h.b16 %v40
  %v142 = vunpack.c.l.b16 %v41
  %v143 = vunpack.c.h.b16 %v41
  %v144 = vunpack.c.l.b16 %v42
  %v145 = vunpack.c.h.b16 %v42
  %v146 = vunpack.c.l.b16 %v43
  %v147 = vunpack.c.h.b16 %v43
  %v148 = vunpack.c.l.b16 %v44
  %v149 = vunpack.c.h.b16 %v44
  %v150 = vunpack.c.l.b16 %v45
  %v151 = vunpack.c.h.b16 %v45
  %v152 = vunpack.c.l.b16 %v46
  %v153 = vunpack.c.h.b16 %v46
  %v154 = vunpack.c.l.b16 %v47
  %v155 = vunpack.c.h.b16 %v47
  %v156 = vunpack.c.l.b16 %v48
  %v157 = vunpack.c.h.b16 %v48
  %v158 = vunpack.c.l.b16 %v49
  %v159 = vunpack.c.h.b16 %v49
  %v160 = vunpack.c.l.b16 %v50
  %v161 = vunpack.c.h.b16 %v50
  %v162 = vunpack.c.l.b16 %v51
  %v163 = vunpack.c.h.b16 %v51
  %v164 = vunpack.c.l.b16 %v52
  %v165 = vunpack.c.h.b16 %v52
  %v166 = vpack.c.b16 %v130, %v94
  %v167 = vpack.c.b16 %v131, %v95
  %v168 = vpack.c.b16 %v132, %v96
  %v169 = vpack.c.b16 %v133, %v97
  %v170 = vpack.c.b16 %v134, %v98
  %v171 = vpack.c.b16 %v135, %v99
  %v172 = vpack.c.b16 %v136, %v100
  %v173 = vpack.c.b16 %v137, %v101
  %v174 = vpack.c.b16 %v138, %v102
  %v175 = vpack.c.b16 %v139, %v103
  %v176 = vpack.c.b16 %v140, %v104
  %v177 = vpack.c.b16 %v141, %v105
  %v178 = vpack.c.b16 %v142, %v106
  %v179 = vpack.c.b16 %v143, %v107
  %v180 = vpack.c.b16 %v144, %v108
  %v181 = vpack.c.b16 %v145, %v109
  %v182 = vpack.c.b16 %v146, %v110
  %v183 = vpack.c.b16 %v147, %v111
  %v184 = vpack.c.b16 %v148, %v112
  %v185 = vpack.c.b16 %v149, %v113
  %v186 = vpack.c.b16 %v150, %v114
  %v187 = vpack.c.b16 %v151, %v115
  %v188 = vpack.c.b16 %v152, %v116
  %v189 = vpack.c.b16 %v153, %v117
  %v190 = vpack.c.b16 %v154, %v118
  %v191 = vpack.c.b16 %v155, %v119
  %v192 = vpack.c.b16 %v156, %v120
  %v193 = vpack.c.b16 %v157, %v121
  %v194 = vpack.c.b16 %v158, %v122
  %v195 = vpack.c.b16 %v159, %v123
  %v196 = vpack.c.b16 %v160, %v124
  %v197 = vpack.c.b16 %v161, %v125
  %v198 = vpack.c.b16 %v162, %v126
  %v199 = vpack.c.b16 %v163, %v127
  %v200 = vpack.c.b16 %v164, %v128
  %v201 = vpack.c.b16 %v165, %v129
  %vm202 = vcmask 72704
  %v204 = vsel %vm202, %v57, 0
  %vm206 = vcmask 1043456
  %vm207 = vcmask 1044480
  %v208 = vsel %vm206, 4294967295, 65535
  %v209 = vsel %vm207, %v208, 0
  %v211 = vand.u32 %v166, %v209
  %v214 = vand.u32 %v167, %v209
  %v217 = vand.u32 %v168, %v209
  %v220 = vand.u32 %v169, %v209
  %v223 = vand.u32 %v170, %v209
  %v226 = vand.u32 %v171, %v209
  %v229 = vand.u32 %v172, %v209
  %v232 = vand.u32 %v173, %v209
  %v235 = vand.u32 %v174, %v209
  %v238 = vand.u32 %v175, %v209
  %v241 = vand.u32 %v176, %v209
  %v244 = vand.u32 %v177, %v209
  %v247 = vand.u32 %v178, %v209
  %v250 = vand.u32 %v179, %v209
  %v253 = vand.u32 %v180, %v209
  %v256 = vand.u32 %v181, %v209
  %v259 = vand.u32 %v182, %v209
  %v262 = vand.u32 %v183, %v209
  %v265 = vand.u32 %v184, %v209
  %v268 = vand.u32 %v185, %v209
  %v271 = vand.u32 %v186, %v209
  %v274 = vand.u32 %v187, %v209
  %v277 = vand.u32 %v188, %v209
  %v280 = vand.u32 %v189, %v209
  %v283 = vand.u32 %v190, %v209
  %v286 = vand.u32 %v191, %v209
  %v289 = vand.u32 %v192, %v209
  %v292 = vand.u32 %v193, %v209
  %v295 = vand.u32 %v194, %v209
  %v298 = vand.u32 %v195, %v209
  %v301 = vand.u32 %v196, %v209
  %v304 = vand.u32 %v197, %v209
  %v307 = vand.u32 %v198, %v209
  %v310 = vand.u32 %v199, %v209
  %v313 = vand.u32 %v200, %v209
  %v316 = vand.u32 %v201, %v209
  %318 = vmatprep.subr.bf16.mxu0 %v214
  %319 = vmatpush1.bf16.msra.mxu0 %v211
  %320 = vmatprep.subr.bf16.mxu0 0
  %321 = vmatpush1.bf16.msra.mxu0 0
  %322 = vmatprep.subr.bf16.mxu0 0
  %323 = vmatpush1.bf16.msra.mxu0 0
  %324 = vmatprep.subr.bf16.mxu0 0
  %325 = vmatpush1.bf16.msra.mxu0 0
  %326 = vmatprep.subr.bf16.mxu0 0
  %327 = vmatpush1.bf16.msra.mxu0 0
  %328 = vmatprep.subr.bf16.mxu0 0
  %329 = vmatpush1.bf16.msra.mxu0 0
  %330 = vmatprep.subr.bf16.mxu0 0
  %331 = vmatpush1.bf16.msra.mxu0 0
  %332 = vmatprep.subr.bf16.mxu0 0
  %333 = vmatpush1.bf16.msra.mxu0 0
  %334 = vmatprep.subr.bf16.mxu0 0
  %335 = vmatpush1.bf16.msra.mxu0 0
  %336 = vmatprep.subr.bf16.mxu0 0
  %337 = vmatpush1.bf16.msra.mxu0 0
  %338 = vmatprep.subr.bf16.mxu0 0
  %339 = vmatpush1.bf16.msra.mxu0 0
  %340 = vmatprep.subr.bf16.mxu0 0
  %341 = vmatpush1.bf16.msra.mxu0 0
  %342 = vmatprep.subr.bf16.mxu0 0
  %343 = vmatpush1.bf16.msra.mxu0 0
  %344 = vmatprep.subr.bf16.mxu0 0
  %345 = vmatpush1.bf16.msra.mxu0 0
  %346 = vmatprep.subr.bf16.mxu0 0
  %347 = vmatpush1.bf16.msra.mxu0 0
  %348 = vmatprep.subr.bf16.mxu0 0
  %349 = vmatpush1.bf16.msra.mxu0 0
  %350 = vmatprep.mubr.bf16.mxu0 0
  %351 = vmatmul.mubr.bf16.gmra.mrb[0].mxu0 %v204
  %v352 = vpop.f32.mrb[0].mxu0
  %v353 = vadd.f32 0.0, %v352
  %v354 = vpop.f32.mrb[0].mxu0
  %v355 = vadd.f32 0.0, %v354
  %v356 = vpop.f32.mrb[0].mxu0
  %v357 = vadd.f32 0.0, %v356
  %v358 = vpop.f32.mrb[0].mxu0
  %v359 = vadd.f32 0.0, %v358
  %360 = vdwg.mxu0
  %361 = vmatprep.subr.bf16.mxu0 %v220
  %362 = vmatpush1.bf16.msra.mxu0 %v217
  %363 = vmatprep.subr.bf16.mxu0 0
  %364 = vmatpush1.bf16.msra.mxu0 0
  %365 = vmatprep.subr.bf16.mxu0 0
  %366 = vmatpush1.bf16.msra.mxu0 0
  %367 = vmatprep.subr.bf16.mxu0 0
  %368 = vmatpush1.bf16.msra.mxu0 0
  %369 = vmatprep.subr.bf16.mxu0 0
  %370 = vmatpush1.bf16.msra.mxu0 0
  %371 = vmatprep.subr.bf16.mxu0 0
  %372 = vmatpush1.bf16.msra.mxu0 0
  %373 = vmatprep.subr.bf16.mxu0 0
  %374 = vmatpush1.bf16.msra.mxu0 0
  %375 = vmatprep.subr.bf16.mxu0 0
  %376 = vmatpush1.bf16.msra.mxu0 0
  %377 = vmatprep.subr.bf16.mxu0 0
  %378 = vmatpush1.bf16.msra.mxu0 0
  %379 = vmatprep.subr.bf16.mxu0 0
  %380 = vmatpush1.bf16.msra.mxu0 0
  %381 = vmatprep.subr.bf16.mxu0 0
  %382 = vmatpush1.bf16.msra.mxu0 0
  %383 = vmatprep.subr.bf16.mxu0 0
  %384 = vmatpush1.bf16.msra.mxu0 0
  %385 = vmatprep.subr.bf16.mxu0 0
  %386 = vmatpush1.bf16.msra.mxu0 0
  %387 = vmatprep.subr.bf16.mxu0 0
  %388 = vmatpush1.bf16.msra.mxu0 0
  %389 = vmatprep.subr.bf16.mxu0 0
  %390 = vmatpush1.bf16.msra.mxu0 0
  %391 = vmatprep.subr.bf16.mxu0 0
  %392 = vmatpush1.bf16.msra.mxu0 0
  %393 = vmatprep.mubr.bf16.mxu0 0
  %394 = vmatmul.mubr.bf16.gmra.mrb[0].mxu0 %v204
  %v395 = vpop.f32.mrb[0].mxu0
  %v396 = vadd.f32 0.0, %v395
  %v397 = vpop.f32.mrb[0].mxu0
  %v398 = vadd.f32 0.0, %v397
  %v399 = vpop.f32.mrb[0].mxu0
  %v400 = vadd.f32 0.0, %v399
  %v401 = vpop.f32.mrb[0].mxu0
  %v402 = vadd.f32 0.0, %v401
  %403 = vdwg.mxu0
  %404 = vmatprep.subr.bf16.mxu0 %v226
  %405 = vmatpush1.bf16.msra.mxu0 %v223
  %406 = vmatprep.subr.bf16.mxu0 0
  %407 = vmatpush1.bf16.msra.mxu0 0
  %408 = vmatprep.subr.bf16.mxu0 0
  %409 = vmatpush1.bf16.msra.mxu0 0
  %410 = vmatprep.subr.bf16.mxu0 0
  %411 = vmatpush1.bf16.msra.mxu0 0
  %412 = vmatprep.subr.bf16.mxu0 0
  %413 = vmatpush1.bf16.msra.mxu0 0
  %414 = vmatprep.subr.bf16.mxu0 0
  %415 = vmatpush1.bf16.msra.mxu0 0
  %416 = vmatprep.subr.bf16.mxu0 0
  %417 = vmatpush1.bf16.msra.mxu0 0
  %418 = vmatprep.subr.bf16.mxu0 0
  %419 = vmatpush1.bf16.msra.mxu0 0
  %420 = vmatprep.subr.bf16.mxu0 0
  %421 = vmatpush1.bf16.msra.mxu0 0
  %422 = vmatprep.subr.bf16.mxu0 0
  %423 = vmatpush1.bf16.msra.mxu0 0
  %424 = vmatprep.subr.bf16.mxu0 0
  %425 = vmatpush1.bf16.msra.mxu0 0
  %426 = vmatprep.subr.bf16.mxu0 0
  %427 = vmatpush1.bf16.msra.mxu0 0
  %428 = vmatprep.subr.bf16.mxu0 0
  %429 = vmatpush1.bf16.msra.mxu0 0
  %430 = vmatprep.subr.bf16.mxu0 0
  %431 = vmatpush1.bf16.msra.mxu0 0
  %432 = vmatprep.subr.bf16.mxu0 0
  %433 = vmatpush1.bf16.msra.mxu0 0
  %434 = vmatprep.subr.bf16.mxu0 0
  %435 = vmatpush1.bf16.msra.mxu0 0
  %436 = vmatprep.mubr.bf16.mxu0 0
  %437 = vmatmul.mubr.bf16.gmra.mrb[0].mxu0 %v204
  %v438 = vpop.f32.mrb[0].mxu0
  %v439 = vadd.f32 0.0, %v438
  %v440 = vpop.f32.mrb[0].mxu0
  %v441 = vadd.f32 0.0, %v440
  %v442 = vpop.f32.mrb[0].mxu0
  %v443 = vadd.f32 0.0, %v442
  %v444 = vpop.f32.mrb[0].mxu0
  %v445 = vadd.f32 0.0, %v444
  %446 = vdwg.mxu0
  %447 = vmatprep.subr.bf16.mxu0 %v232
  %448 = vmatpush1.bf16.msra.mxu0 %v229
  %449 = vmatprep.subr.bf16.mxu0 0
  %450 = vmatpush1.bf16.msra.mxu0 0
  %451 = vmatprep.subr.bf16.mxu0 0
  %452 = vmatpush1.bf16.msra.mxu0 0
  %453 = vmatprep.subr.bf16.mxu0 0
  %454 = vmatpush1.bf16.msra.mxu0 0
  %455 = vmatprep.subr.bf16.mxu0 0
  %456 = vmatpush1.bf16.msra.mxu0 0
  %457 = vmatprep.subr.bf16.mxu0 0
  %458 = vmatpush1.bf16.msra.mxu0 0
  %459 = vmatprep.subr.bf16.mxu0 0
  %460 = vmatpush1.bf16.msra.mxu0 0
  %461 = vmatprep.subr.bf16.mxu0 0
  %462 = vmatpush1.bf16.msra.mxu0 0
  %463 = vmatprep.subr.bf16.mxu0 0
  %464 = vmatpush1.bf16.msra.mxu0 0
  %465 = vmatprep.subr.bf16.mxu0 0
  %466 = vmatpush1.bf16.msra.mxu0 0
  %467 = vmatprep.subr.bf16.mxu0 0
  %468 = vmatpush1.bf16.msra.mxu0 0
  %469 = vmatprep.subr.bf16.mxu0 0
  %470 = vmatpush1.bf16.msra.mxu0 0
  %471 = vmatprep.subr.bf16.mxu0 0
  %472 = vmatpush1.bf16.msra.mxu0 0
  %473 = vmatprep.subr.bf16.mxu0 0
  %474 = vmatpush1.bf16.msra.mxu0 0
  %475 = vmatprep.subr.bf16.mxu0 0
  %476 = vmatpush1.bf16.msra.mxu0 0
  %477 = vmatprep.subr.bf16.mxu0 0
  %478 = vmatpush1.bf16.msra.mxu0 0
  %479 = vmatprep.mubr.bf16.mxu0 0
  %480 = vmatmul.mubr.bf16.gmra.mrb[0].mxu0 %v204
  %v481 = vpop.f32.mrb[0].mxu0
  %v482 = vadd.f32 0.0, %v481
  %v483 = vpop.f32.mrb[0].mxu0
  %v484 = vadd.f32 0.0, %v483
  %v485 = vpop.f32.mrb[0].mxu0
  %v486 = vadd.f32 0.0, %v485
  %v487 = vpop.f32.mrb[0].mxu0
  %v488 = vadd.f32 0.0, %v487
  %489 = vdwg.mxu0
  %490 = vmatprep.subr.bf16.mxu0 %v238
  %491 = vmatpush1.bf16.msra.mxu0 %v235
  %492 = vmatprep.subr.bf16.mxu0 0
  %493 = vmatpush1.bf16.msra.mxu0 0
  %494 = vmatprep.subr.bf16.mxu0 0
  %495 = vmatpush1.bf16.msra.mxu0 0
  %496 = vmatprep.subr.bf16.mxu0 0
  %497 = vmatpush1.bf16.msra.mxu0 0
  %498 = vmatprep.subr.bf16.mxu0 0
  %499 = vmatpush1.bf16.msra.mxu0 0
  %500 = vmatprep.subr.bf16.mxu0 0
  %501 = vmatpush1.bf16.msra.mxu0 0
  %502 = vmatprep.subr.bf16.mxu0 0
  %503 = vmatpush1.bf16.msra.mxu0 0
  %504 = vmatprep.subr.bf16.mxu0 0
  %505 = vmatpush1.bf16.msra.mxu0 0
  %506 = vmatprep.subr.bf16.mxu0 0
  %507 = vmatpush1.bf16.msra.mxu0 0
  %508 = vmatprep.subr.bf16.mxu0 0
  %509 = vmatpush1.bf16.msra.mxu0 0
  %510 = vmatprep.subr.bf16.mxu0 0
  %511 = vmatpush1.bf16.msra.mxu0 0
  %512 = vmatprep.subr.bf16.mxu0 0
  %513 = vmatpush1.bf16.msra.mxu0 0
  %514 = vmatprep.subr.bf16.mxu0 0
  %515 = vmatpush1.bf16.msra.mxu0 0
  %516 = vmatprep.subr.bf16.mxu0 0
  %517 = vmatpush1.bf16.msra.mxu0 0
  %518 = vmatprep.subr.bf16.mxu0 0
  %519 = vmatpush1.bf16.msra.mxu0 0
  %520 = vmatprep.subr.bf16.mxu0 0
  %521 = vmatpush1.bf16.msra.mxu0 0
  %522 = vmatprep.mubr.bf16.mxu0 0
  %523 = vmatmul.mubr.bf16.gmra.mrb[0].mxu0 %v204
  %v524 = vpop.f32.mrb[0].mxu0
  %v525 = vadd.f32 0.0, %v524
  %v526 = vpop.f32.mrb[0].mxu0
  %v527 = vadd.f32 0.0, %v526
  %v528 = vpop.f32.mrb[0].mxu0
  %v529 = vadd.f32 0.0, %v528
  %v530 = vpop.f32.mrb[0].mxu0
  %v531 = vadd.f32 0.0, %v530
  %532 = vdwg.mxu0
  %533 = vmatprep.subr.bf16.mxu0 %v244
  %534 = vmatpush1.bf16.msra.mxu0 %v241
  %535 = vmatprep.subr.bf16.mxu0 0
  %536 = vmatpush1.bf16.msra.mxu0 0
  %537 = vmatprep.subr.bf16.mxu0 0
  %538 = vmatpush1.bf16.msra.mxu0 0
  %539 = vmatprep.subr.bf16.mxu0 0
  %540 = vmatpush1.bf16.msra.mxu0 0
  %541 = vmatprep.subr.bf16.mxu0 0
  %542 = vmatpush1.bf16.msra.mxu0 0
  %543 = vmatprep.subr.bf16.mxu0 0
  %544 = vmatpush1.bf16.msra.mxu0 0
  %545 = vmatprep.subr.bf16.mxu0 0
  %546 = vmatpush1.bf16.msra.mxu0 0
  %547 = vmatprep.subr.bf16.mxu0 0
  %548 = vmatpush1.bf16.msra.mxu0 0
  %549 = vmatprep.subr.bf16.mxu0 0
  %550 = vmatpush1.bf16.msra.mxu0 0
  %551 = vmatprep.subr.bf16.mxu0 0
  %552 = vmatpush1.bf16.msra.mxu0 0
  %553 = vmatprep.subr.bf16.mxu0 0
  %554 = vmatpush1.bf16.msra.mxu0 0
  %555 = vmatprep.subr.bf16.mxu0 0
  %556 = vmatpush1.bf16.msra.mxu0 0
  %557 = vmatprep.subr.bf16.mxu0 0
  %558 = vmatpush1.bf16.msra.mxu0 0
  %559 = vmatprep.subr.bf16.mxu0 0
  %560 = vmatpush1.bf16.msra.mxu0 0
  %561 = vmatprep.subr.bf16.mxu0 0
  %562 = vmatpush1.bf16.msra.mxu0 0
  %563 = vmatprep.subr.bf16.mxu0 0
  %564 = vmatpush1.bf16.msra.mxu0 0
  %565 = vmatprep.mubr.bf16.mxu0 0
  %566 = vmatmul.mubr.bf16.gmra.mrb[0].mxu0 %v204
  %v567 = vpop.f32.mrb[0].mxu0
  %v568 = vadd.f32 0.0, %v567
  %v569 = vpop.f32.mrb[0].mxu0
  %v570 = vadd.f32 0.0, %v569
  %v571 = vpop.f32.mrb[0].mxu0
  %v572 = vadd.f32 0.0, %v571
  %v573 = vpop.f32.mrb[0].mxu0
  %v574 = vadd.f32 0.0, %v573
  %575 = vdwg.mxu0
  %576 = vmatprep.subr.bf16.mxu0 %v250
  %577 = vmatpush1.bf16.msra.mxu0 %v247
  %578 = vmatprep.subr.bf16.mxu0 0
  %579 = vmatpush1.bf16.msra.mxu0 0
  %580 = vmatprep.subr.bf16.mxu0 0
  %581 = vmatpush1.bf16.msra.mxu0 0
  %582 = vmatprep.subr.bf16.mxu0 0
  %583 = vmatpush1.bf16.msra.mxu0 0
  %584 = vmatprep.subr.bf16.mxu0 0
  %585 = vmatpush1.bf16.msra.mxu0 0
  %586 = vmatprep.subr.bf16.mxu0 0
  %587 = vmatpush1.bf16.msra.mxu0 0
  %588 = vmatprep.subr.bf16.mxu0 0
  %589 = vmatpush1.bf16.msra.mxu0 0
  %590 = vmatprep.subr.bf16.mxu0 0
  %591 = vmatpush1.bf16.msra.mxu0 0
  %592 = vmatprep.subr.bf16.mxu0 0
  %593 = vmatpush1.bf16.msra.mxu0 0
  %594 = vmatprep.subr.bf16.mxu0 0
  %595 = vmatpush1.bf16.msra.mxu0 0
  %596 = vmatprep.subr.bf16.mxu0 0
  %597 = vmatpush1.bf16.msra.mxu0 0
  %598 = vmatprep.subr.bf16.mxu0 0
  %599 = vmatpush1.bf16.msra.mxu0 0
  %600 = vmatprep.subr.bf16.mxu0 0
  %601 = vmatpush1.bf16.msra.mxu0 0
  %602 = vmatprep.subr.bf16.mxu0 0
  %603 = vmatpush1.bf16.msra.mxu0 0
  %604 = vmatprep.subr.bf16.mxu0 0
  %605 = vmatpush1.bf16.msra.mxu0 0
  %606 = vmatprep.subr.bf16.mxu0 0
  %607 = vmatpush1.bf16.msra.mxu0 0
  %608 = vmatprep.mubr.bf16.mxu0 0
  %609 = vmatmul.mubr.bf16.gmra.mrb[0].mxu0 %v204
  %v610 = vpop.f32.mrb[0].mxu0
  %v611 = vadd.f32 0.0, %v610
  %v612 = vpop.f32.mrb[0].mxu0
  %v613 = vadd.f32 0.0, %v612
  %v614 = vpop.f32.mrb[0].mxu0
  %v615 = vadd.f32 0.0, %v614
  %v616 = vpop.f32.mrb[0].mxu0
  %v617 = vadd.f32 0.0, %v616
  %618 = vdwg.mxu0
  %619 = vmatprep.subr.bf16.mxu0 %v256
  %620 = vmatpush1.bf16.msra.mxu0 %v253
  %621 = vmatprep.subr.bf16.mxu0 0
  %622 = vmatpush1.bf16.msra.mxu0 0
  %623 = vmatprep.subr.bf16.mxu0 0
  %624 = vmatpush1.bf16.msra.mxu0 0
  %625 = vmatprep.subr.bf16.mxu0 0
  %626 = vmatpush1.bf16.msra.mxu0 0
  %627 = vmatprep.subr.bf16.mxu0 0
  %628 = vmatpush1.bf16.msra.mxu0 0
  %629 = vmatprep.subr.bf16.mxu0 0
  %630 = vmatpush1.bf16.msra.mxu0 0
  %631 = vmatprep.subr.bf16.mxu0 0
  %632 = vmatpush1.bf16.msra.mxu0 0
  %633 = vmatprep.subr.bf16.mxu0 0
  %634 = vmatpush1.bf16.msra.mxu0 0
  %635 = vmatprep.subr.bf16.mxu0 0
  %636 = vmatpush1.bf16.msra.mxu0 0
  %637 = vmatprep.subr.bf16.mxu0 0
  %638 = vmatpush1.bf16.msra.mxu0 0
  %639 = vmatprep.subr.bf16.mxu0 0
  %640 = vmatpush1.bf16.msra.mxu0 0
  %641 = vmatprep.subr.bf16.mxu0 0
  %642 = vmatpush1.bf16.msra.mxu0 0
  %643 = vmatprep.subr.bf16.mxu0 0
  %644 = vmatpush1.bf16.msra.mxu0 0
  %645 = vmatprep.subr.bf16.mxu0 0
  %646 = vmatpush1.bf16.msra.mxu0 0
  %647 = vmatprep.subr.bf16.mxu0 0
  %648 = vmatpush1.bf16.msra.mxu0 0
  %649 = vmatprep.subr.bf16.mxu0 0
  %650 = vmatpush1.bf16.msra.mxu0 0
  %651 = vmatprep.mubr.bf16.mxu0 0
  %652 = vmatmul.mubr.bf16.gmra.mrb[0].mxu0 %v204
  %v653 = vpop.f32.mrb[0].mxu0
  %v654 = vadd.f32 0.0, %v653
  %v655 = vpop.f32.mrb[0].mxu0
  %v656 = vadd.f32 0.0, %v655
  %v657 = vpop.f32.mrb[0].mxu0
  %v658 = vadd.f32 0.0, %v657
  %v659 = vpop.f32.mrb[0].mxu0
  %v660 = vadd.f32 0.0, %v659
  %661 = vdwg.mxu0
  %662 = vmatprep.subr.bf16.mxu0 %v262
  %663 = vmatpush1.bf16.msra.mxu0 %v259
  %664 = vmatprep.subr.bf16.mxu0 0
  %665 = vmatpush1.bf16.msra.mxu0 0
  %666 = vmatprep.subr.bf16.mxu0 0
  %667 = vmatpush1.bf16.msra.mxu0 0
  %668 = vmatprep.subr.bf16.mxu0 0
  %669 = vmatpush1.bf16.msra.mxu0 0
  %670 = vmatprep.subr.bf16.mxu0 0
  %671 = vmatpush1.bf16.msra.mxu0 0
  %672 = vmatprep.subr.bf16.mxu0 0
  %673 = vmatpush1.bf16.msra.mxu0 0
  %674 = vmatprep.subr.bf16.mxu0 0
  %675 = vmatpush1.bf16.msra.mxu0 0
  %676 = vmatprep.subr.bf16.mxu0 0
  %677 = vmatpush1.bf16.msra.mxu0 0
  %678 = vmatprep.subr.bf16.mxu0 0
  %679 = vmatpush1.bf16.msra.mxu0 0
  %680 = vmatprep.subr.bf16.mxu0 0
  %681 = vmatpush1.bf16.msra.mxu0 0
  %682 = vmatprep.subr.bf16.mxu0 0
  %683 = vmatpush1.bf16.msra.mxu0 0
  %684 = vmatprep.subr.bf16.mxu0 0
  %685 = vmatpush1.bf16.msra.mxu0 0
  %686 = vmatprep.subr.bf16.mxu0 0
  %687 = vmatpush1.bf16.msra.mxu0 0
  %688 = vmatprep.subr.bf16.mxu0 0
  %689 = vmatpush1.bf16.msra.mxu0 0
  %690 = vmatprep.subr.bf16.mxu0 0
  %691 = vmatpush1.bf16.msra.mxu0 0
  %692 = vmatprep.subr.bf16.mxu0 0
  %693 = vmatpush1.bf16.msra.mxu0 0
  %694 = vmatprep.mubr.bf16.mxu0 0
  %695 = vmatmul.mubr.bf16.gmra.mrb[0].mxu0 %v204
  %v696 = vpop.f32.mrb[0].mxu0
  %v697 = vadd.f32 0.0, %v696
  %v698 = vpop.f32.mrb[0].mxu0
  %v699 = vadd.f32 0.0, %v698
  %v700 = vpop.f32.mrb[0].mxu0
  %v701 = vadd.f32 0.0, %v700
  %v702 = vpop.f32.mrb[0].mxu0
  %v703 = vadd.f32 0.0, %v702
  %704 = vdwg.mxu0
  %705 = vmatprep.subr.bf16.mxu0 %v268
  %706 = vmatpush1.bf16.msra.mxu0 %v265
  %707 = vmatprep.subr.bf16.mxu0 0
  %708 = vmatpush1.bf16.msra.mxu0 0
  %709 = vmatprep.subr.bf16.mxu0 0
  %710 = vmatpush1.bf16.msra.mxu0 0
  %711 = vmatprep.subr.bf16.mxu0 0
  %712 = vmatpush1.bf16.msra.mxu0 0
  %713 = vmatprep.subr.bf16.mxu0 0
  %714 = vmatpush1.bf16.msra.mxu0 0
  %715 = vmatprep.subr.bf16.mxu0 0
  %716 = vmatpush1.bf16.msra.mxu0 0
  %717 = vmatprep.subr.bf16.mxu0 0
  %718 = vmatpush1.bf16.msra.mxu0 0
  %719 = vmatprep.subr.bf16.mxu0 0
  %720 = vmatpush1.bf16.msra.mxu0 0
  %721 = vmatprep.subr.bf16.mxu0 0
  %722 = vmatpush1.bf16.msra.mxu0 0
  %723 = vmatprep.subr.bf16.mxu0 0
  %724 = vmatpush1.bf16.msra.mxu0 0
  %725 = vmatprep.subr.bf16.mxu0 0
  %726 = vmatpush1.bf16.msra.mxu0 0
  %727 = vmatprep.subr.bf16.mxu0 0
  %728 = vmatpush1.bf16.msra.mxu0 0
  %729 = vmatprep.subr.bf16.mxu0 0
  %730 = vmatpush1.bf16.msra.mxu0 0
  %731 = vmatprep.subr.bf16.mxu0 0
  %732 = vmatpush1.bf16.msra.mxu0 0
  %733 = vmatprep.subr.bf16.mxu0 0
  %734 = vmatpush1.bf16.msra.mxu0 0
  %735 = vmatprep.subr.bf16.mxu0 0
  %736 = vmatpush1.bf16.msra.mxu0 0
  %737 = vmatprep.mubr.bf16.mxu0 0
  %738 = vmatmul.mubr.bf16.gmra.mrb[0].mxu0 %v204
  %v739 = vpop.f32.mrb[0].mxu0
  %v740 = vadd.f32 0.0, %v739
  %v741 = vpop.f32.mrb[0].mxu0
  %v742 = vadd.f32 0.0, %v741
  %v743 = vpop.f32.mrb[0].mxu0
  %v744 = vadd.f32 0.0, %v743
  %v745 = vpop.f32.mrb[0].mxu0
  %v746 = vadd.f32 0.0, %v745
  %747 = vdwg.mxu0
  %748 = vmatprep.subr.bf16.mxu0 %v274
  %749 = vmatpush1.bf16.msra.mxu0 %v271
  %750 = vmatprep.subr.bf16.mxu0 0
  %751 = vmatpush1.bf16.msra.mxu0 0
  %752 = vmatprep.subr.bf16.mxu0 0
  %753 = vmatpush1.bf16.msra.mxu0 0
  %754 = vmatprep.subr.bf16.mxu0 0
  %755 = vmatpush1.bf16.msra.mxu0 0
  %756 = vmatprep.subr.bf16.mxu0 0
  %757 = vmatpush1.bf16.msra.mxu0 0
  %758 = vmatprep.subr.bf16.mxu0 0
  %759 = vmatpush1.bf16.msra.mxu0 0
  %760 = vmatprep.subr.bf16.mxu0 0
  %761 = vmatpush1.bf16.msra.mxu0 0
  %762 = vmatprep.subr.bf16.mxu0 0
  %763 = vmatpush1.bf16.msra.mxu0 0
  %764 = vmatprep.subr.bf16.mxu0 0
  %765 = vmatpush1.bf16.msra.mxu0 0
  %766 = vmatprep.subr.bf16.mxu0 0
  %767 = vmatpush1.bf16.msra.mxu0 0
  %768 = vmatprep.subr.bf16.mxu0 0
  %769 = vmatpush1.bf16.msra.mxu0 0
  %770 = vmatprep.subr.bf16.mxu0 0
  %771 = vmatpush1.bf16.msra.mxu0 0
  %772 = vmatprep.subr.bf16.mxu0 0
  %773 = vmatpush1.bf16.msra.mxu0 0
  %774 = vmatprep.subr.bf16.mxu0 0
  %775 = vmatpush1.bf16.msra.mxu0 0
  %776 = vmatprep.subr.bf16.mxu0 0
  %777 = vmatpush1.bf16.msra.mxu0 0
  %778 = vmatprep.subr.bf16.mxu0 0
  %779 = vmatpush1.bf16.msra.mxu0 0
  %780 = vmatprep.mubr.bf16.mxu0 0
  %781 = vmatmul.mubr.bf16.gmra.mrb[0].mxu0 %v204
  %v782 = vpop.f32.mrb[0].mxu0
  %v783 = vadd.f32 0.0, %v782
  %v784 = vpop.f32.mrb[0].mxu0
  %v785 = vadd.f32 0.0, %v784
  %v786 = vpop.f32.mrb[0].mxu0
  %v787 = vadd.f32 0.0, %v786
  %v788 = vpop.f32.mrb[0].mxu0
  %v789 = vadd.f32 0.0, %v788
  %790 = vdwg.mxu0
  %791 = vmatprep.subr.bf16.mxu0 %v280
  %792 = vmatpush1.bf16.msra.mxu0 %v277
  %793 = vmatprep.subr.bf16.mxu0 0
  %794 = vmatpush1.bf16.msra.mxu0 0
  %795 = vmatprep.subr.bf16.mxu0 0
  %796 = vmatpush1.bf16.msra.mxu0 0
  %797 = vmatprep.subr.bf16.mxu0 0
  %798 = vmatpush1.bf16.msra.mxu0 0
  %799 = vmatprep.subr.bf16.mxu0 0
  %800 = vmatpush1.bf16.msra.mxu0 0
  %801 = vmatprep.subr.bf16.mxu0 0
  %802 = vmatpush1.bf16.msra.mxu0 0
  %803 = vmatprep.subr.bf16.mxu0 0
  %804 = vmatpush1.bf16.msra.mxu0 0
  %805 = vmatprep.subr.bf16.mxu0 0
  %806 = vmatpush1.bf16.msra.mxu0 0
  %807 = vmatprep.subr.bf16.mxu0 0
  %808 = vmatpush1.bf16.msra.mxu0 0
  %809 = vmatprep.subr.bf16.mxu0 0
  %810 = vmatpush1.bf16.msra.mxu0 0
  %811 = vmatprep.subr.bf16.mxu0 0
  %812 = vmatpush1.bf16.msra.mxu0 0
  %813 = vmatprep.subr.bf16.mxu0 0
  %814 = vmatpush1.bf16.msra.mxu0 0
  %815 = vmatprep.subr.bf16.mxu0 0
  %816 = vmatpush1.bf16.msra.mxu0 0
  %817 = vmatprep.subr.bf16.mxu0 0
  %818 = vmatpush1.bf16.msra.mxu0 0
  %819 = vmatprep.subr.bf16.mxu0 0
  %820 = vmatpush1.bf16.msra.mxu0 0
  %821 = vmatprep.subr.bf16.mxu0 0
  %822 = vmatpush1.bf16.msra.mxu0 0
  %823 = vmatprep.mubr.bf16.mxu0 0
  %824 = vmatmul.mubr.bf16.gmra.mrb[0].mxu0 %v204
  %v825 = vpop.f32.mrb[0].mxu0
  %v826 = vadd.f32 0.0, %v825
  %v827 = vpop.f32.mrb[0].mxu0
  %v828 = vadd.f32 0.0, %v827
  %v829 = vpop.f32.mrb[0].mxu0
  %v830 = vadd.f32 0.0, %v829
  %v831 = vpop.f32.mrb[0].mxu0
  %v832 = vadd.f32 0.0, %v831
  %833 = vdwg.mxu0
  %834 = vmatprep.subr.bf16.mxu0 %v286
  %835 = vmatpush1.bf16.msra.mxu0 %v283
  %836 = vmatprep.subr.bf16.mxu0 0
  %837 = vmatpush1.bf16.msra.mxu0 0
  %838 = vmatprep.subr.bf16.mxu0 0
  %839 = vmatpush1.bf16.msra.mxu0 0
  %840 = vmatprep.subr.bf16.mxu0 0
  %841 = vmatpush1.bf16.msra.mxu0 0
  %842 = vmatprep.subr.bf16.mxu0 0
  %843 = vmatpush1.bf16.msra.mxu0 0
  %844 = vmatprep.subr.bf16.mxu0 0
  %845 = vmatpush1.bf16.msra.mxu0 0
  %846 = vmatprep.subr.bf16.mxu0 0
  %847 = vmatpush1.bf16.msra.mxu0 0
  %848 = vmatprep.subr.bf16.mxu0 0
  %849 = vmatpush1.bf16.msra.mxu0 0
  %850 = vmatprep.subr.bf16.mxu0 0
  %851 = vmatpush1.bf16.msra.mxu0 0
  %852 = vmatprep.subr.bf16.mxu0 0
  %853 = vmatpush1.bf16.msra.mxu0 0
  %854 = vmatprep.subr.bf16.mxu0 0
  %855 = vmatpush1.bf16.msra.mxu0 0
  %856 = vmatprep.subr.bf16.mxu0 0
  %857 = vmatpush1.bf16.msra.mxu0 0
  %858 = vmatprep.subr.bf16.mxu0 0
  %859 = vmatpush1.bf16.msra.mxu0 0
  %860 = vmatprep.subr.bf16.mxu0 0
  %861 = vmatpush1.bf16.msra.mxu0 0
  %862 = vmatprep.subr.bf16.mxu0 0
  %863 = vmatpush1.bf16.msra.mxu0 0
  %864 = vmatprep.subr.bf16.mxu0 0
  %865 = vmatpush1.bf16.msra.mxu0 0
  %866 = vmatprep.mubr.bf16.mxu0 0
  %867 = vmatmul.mubr.bf16.gmra.mrb[0].mxu0 %v204
  %v868 = vpop.f32.mrb[0].mxu0
  %v869 = vadd.f32 0.0, %v868
  %v870 = vpop.f32.mrb[0].mxu0
  %v871 = vadd.f32 0.0, %v870
  %v872 = vpop.f32.mrb[0].mxu0
  %v873 = vadd.f32 0.0, %v872
  %v874 = vpop.f32.mrb[0].mxu0
  %v875 = vadd.f32 0.0, %v874
  %876 = vdwg.mxu0
  %877 = vmatprep.subr.bf16.mxu0 %v292
  %878 = vmatpush1.bf16.msra.mxu0 %v289
  %879 = vmatprep.subr.bf16.mxu0 0
  %880 = vmatpush1.bf16.msra.mxu0 0
  %881 = vmatprep.subr.bf16.mxu0 0
  %882 = vmatpush1.bf16.msra.mxu0 0
  %883 = vmatprep.subr.bf16.mxu0 0
  %884 = vmatpush1.bf16.msra.mxu0 0
  %885 = vmatprep.subr.bf16.mxu0 0
  %886 = vmatpush1.bf16.msra.mxu0 0
  %887 = vmatprep.subr.bf16.mxu0 0
  %888 = vmatpush1.bf16.msra.mxu0 0
  %889 = vmatprep.subr.bf16.mxu0 0
  %890 = vmatpush1.bf16.msra.mxu0 0
  %891 = vmatprep.subr.bf16.mxu0 0
  %892 = vmatpush1.bf16.msra.mxu0 0
  %893 = vmatprep.subr.bf16.mxu0 0
  %894 = vmatpush1.bf16.msra.mxu0 0
  %895 = vmatprep.subr.bf16.mxu0 0
  %896 = vmatpush1.bf16.msra.mxu0 0
  %897 = vmatprep.subr.bf16.mxu0 0
  %898 = vmatpush1.bf16.msra.mxu0 0
  %899 = vmatprep.subr.bf16.mxu0 0
  %900 = vmatpush1.bf16.msra.mxu0 0
  %901 = vmatprep.subr.bf16.mxu0 0
  %902 = vmatpush1.bf16.msra.mxu0 0
  %903 = vmatprep.subr.bf16.mxu0 0
  %904 = vmatpush1.bf16.msra.mxu0 0
  %905 = vmatprep.subr.bf16.mxu0 0
  %906 = vmatpush1.bf16.msra.mxu0 0
  %907 = vmatprep.subr.bf16.mxu0 0
  %908 = vmatpush1.bf16.msra.mxu0 0
  %909 = vmatprep.mubr.bf16.mxu0 0
  %910 = vmatmul.mubr.bf16.gmra.mrb[0].mxu0 %v204
  %v911 = vpop.f32.mrb[0].mxu0
  %v912 = vadd.f32 0.0, %v911
  %v913 = vpop.f32.mrb[0].mxu0
  %v914 = vadd.f32 0.0, %v913
  %v915 = vpop.f32.mrb[0].mxu0
  %v916 = vadd.f32 0.0, %v915
  %v917 = vpop.f32.mrb[0].mxu0
  %v918 = vadd.f32 0.0, %v917
  %919 = vdwg.mxu0
  %920 = vmatprep.subr.bf16.mxu0 %v298
  %921 = vmatpush1.bf16.msra.mxu0 %v295
  %922 = vmatprep.subr.bf16.mxu0 0
  %923 = vmatpush1.bf16.msra.mxu0 0
  %924 = vmatprep.subr.bf16.mxu0 0
  %925 = vmatpush1.bf16.msra.mxu0 0
  %926 = vmatprep.subr.bf16.mxu0 0
  %927 = vmatpush1.bf16.msra.mxu0 0
  %928 = vmatprep.subr.bf16.mxu0 0
  %929 = vmatpush1.bf16.msra.mxu0 0
  %930 = vmatprep.subr.bf16.mxu0 0
  %931 = vmatpush1.bf16.msra.mxu0 0
  %932 = vmatprep.subr.bf16.mxu0 0
  %933 = vmatpush1.bf16.msra.mxu0 0
  %934 = vmatprep.subr.bf16.mxu0 0
  %935 = vmatpush1.bf16.msra.mxu0 0
  %936 = vmatprep.subr.bf16.mxu0 0
  %937 = vmatpush1.bf16.msra.mxu0 0
  %938 = vmatprep.subr.bf16.mxu0 0
  %939 = vmatpush1.bf16.msra.mxu0 0
  %940 = vmatprep.subr.bf16.mxu0 0
  %941 = vmatpush1.bf16.msra.mxu0 0
  %942 = vmatprep.subr.bf16.mxu0 0
  %943 = vmatpush1.bf16.msra.mxu0 0
  %944 = vmatprep.subr.bf16.mxu0 0
  %945 = vmatpush1.bf16.msra.mxu0 0
  %946 = vmatprep.subr.bf16.mxu0 0
  %947 = vmatpush1.bf16.msra.mxu0 0
  %948 = vmatprep.subr.bf16.mxu0 0
  %949 = vmatpush1.bf16.msra.mxu0 0
  %950 = vmatprep.subr.bf16.mxu0 0
  %951 = vmatpush1.bf16.msra.mxu0 0
  %952 = vmatprep.mubr.bf16.mxu0 0
  %953 = vmatmul.mubr.bf16.gmra.mrb[0].mxu0 %v204
  %v954 = vpop.f32.mrb[0].mxu0
  %v955 = vadd.f32 0.0, %v954
  %v956 = vpop.f32.mrb[0].mxu0
  %v957 = vadd.f32 0.0, %v956
  %v958 = vpop.f32.mrb[0].mxu0
  %v959 = vadd.f32 0.0, %v958
  %v960 = vpop.f32.mrb[0].mxu0
  %v961 = vadd.f32 0.0, %v960
  %962 = vdwg.mxu0
  %963 = vmatprep.subr.bf16.mxu0 %v304
  %964 = vmatpush1.bf16.msra.mxu0 %v301
  %965 = vmatprep.subr.bf16.mxu0 0
  %966 = vmatpush1.bf16.msra.mxu0 0
  %967 = vmatprep.subr.bf16.mxu0 0
  %968 = vmatpush1.bf16.msra.mxu0 0
  %969 = vmatprep.subr.bf16.mxu0 0
  %970 = vmatpush1.bf16.msra.mxu0 0
  %971 = vmatprep.subr.bf16.mxu0 0
  %972 = vmatpush1.bf16.msra.mxu0 0
  %973 = vmatprep.subr.bf16.mxu0 0
  %974 = vmatpush1.bf16.msra.mxu0 0
  %975 = vmatprep.subr.bf16.mxu0 0
  %976 = vmatpush1.bf16.msra.mxu0 0
  %977 = vmatprep.subr.bf16.mxu0 0
  %978 = vmatpush1.bf16.msra.mxu0 0
  %979 = vmatprep.subr.bf16.mxu0 0
  %980 = vmatpush1.bf16.msra.mxu0 0
  %981 = vmatprep.subr.bf16.mxu0 0
  %982 = vmatpush1.bf16.msra.mxu0 0
  %983 = vmatprep.subr.bf16.mxu0 0
  %984 = vmatpush1.bf16.msra.mxu0 0
  %985 = vmatprep.subr.bf16.mxu0 0
  %986 = vmatpush1.bf16.msra.mxu0 0
  %987 = vmatprep.subr.bf16.mxu0 0
  %988 = vmatpush1.bf16.msra.mxu0 0
  %989 = vmatprep.subr.bf16.mxu0 0
  %990 = vmatpush1.bf16.msra.mxu0 0
  %991 = vmatprep.subr.bf16.mxu0 0
  %992 = vmatpush1.bf16.msra.mxu0 0
  %993 = vmatprep.subr.bf16.mxu0 0
  %994 = vmatpush1.bf16.msra.mxu0 0
  %995 = vmatprep.mubr.bf16.mxu0 0
  %996 = vmatmul.mubr.bf16.gmra.mrb[0].mxu0 %v204
  %v997 = vpop.f32.mrb[0].mxu0
  %v998 = vadd.f32 0.0, %v997
  %v999 = vpop.f32.mrb[0].mxu0
  %v1000 = vadd.f32 0.0, %v999
  %v1001 = vpop.f32.mrb[0].mxu0
  %v1002 = vadd.f32 0.0, %v1001
  %v1003 = vpop.f32.mrb[0].mxu0
  %v1004 = vadd.f32 0.0, %v1003
  %1005 = vdwg.mxu0
  %1006 = vmatprep.subr.bf16.mxu0 %v310
  %1007 = vmatpush1.bf16.msra.mxu0 %v307
  %1008 = vmatprep.subr.bf16.mxu0 0
  %1009 = vmatpush1.bf16.msra.mxu0 0
  %1010 = vmatprep.subr.bf16.mxu0 0
  %1011 = vmatpush1.bf16.msra.mxu0 0
  %1012 = vmatprep.subr.bf16.mxu0 0
  %1013 = vmatpush1.bf16.msra.mxu0 0
  %1014 = vmatprep.subr.bf16.mxu0 0
  %1015 = vmatpush1.bf16.msra.mxu0 0
  %1016 = vmatprep.subr.bf16.mxu0 0
  %1017 = vmatpush1.bf16.msra.mxu0 0
  %1018 = vmatprep.subr.bf16.mxu0 0
  %1019 = vmatpush1.bf16.msra.mxu0 0
  %1020 = vmatprep.subr.bf16.mxu0 0
  %1021 = vmatpush1.bf16.msra.mxu0 0
  %1022 = vmatprep.subr.bf16.mxu0 0
  %1023 = vmatpush1.bf16.msra.mxu0 0
  %1024 = vmatprep.subr.bf16.mxu0 0
  %1025 = vmatpush1.bf16.msra.mxu0 0
  %1026 = vmatprep.subr.bf16.mxu0 0
  %1027 = vmatpush1.bf16.msra.mxu0 0
  %1028 = vmatprep.subr.bf16.mxu0 0
  %1029 = vmatpush1.bf16.msra.mxu0 0
  %1030 = vmatprep.subr.bf16.mxu0 0
  %1031 = vmatpush1.bf16.msra.mxu0 0
  %1032 = vmatprep.subr.bf16.mxu0 0
  %1033 = vmatpush1.bf16.msra.mxu0 0
  %1034 = vmatprep.subr.bf16.mxu0 0
  %1035 = vmatpush1.bf16.msra.mxu0 0
  %1036 = vmatprep.subr.bf16.mxu0 0
  %1037 = vmatpush1.bf16.msra.mxu0 0
  %1038 = vmatprep.mubr.bf16.mxu0 0
  %1039 = vmatmul.mubr.bf16.gmra.mrb[0].mxu0 %v204
  %v1040 = vpop.f32.mrb[0].mxu0
  %v1041 = vadd.f32 0.0, %v1040
  %v1042 = vpop.f32.mrb[0].mxu0
  %v1043 = vadd.f32 0.0, %v1042
  %v1044 = vpop.f32.mrb[0].mxu0
  %v1045 = vadd.f32 0.0, %v1044
  %v1046 = vpop.f32.mrb[0].mxu0
  %v1047 = vadd.f32 0.0, %v1046
  %1048 = vdwg.mxu0
  %1049 = vmatprep.subr.bf16.mxu0 %v316
  %1050 = vmatpush1.bf16.msra.mxu0 %v313
  %1051 = vmatprep.subr.bf16.mxu0 0
  %1052 = vmatpush1.bf16.msra.mxu0 0
  %1053 = vmatprep.subr.bf16.mxu0 0
  %1054 = vmatpush1.bf16.msra.mxu0 0
  %1055 = vmatprep.subr.bf16.mxu0 0
  %1056 = vmatpush1.bf16.msra.mxu0 0
  %1057 = vmatprep.subr.bf16.mxu0 0
  %1058 = vmatpush1.bf16.msra.mxu0 0
  %1059 = vmatprep.subr.bf16.mxu0 0
  %1060 = vmatpush1.bf16.msra.mxu0 0
  %1061 = vmatprep.subr.bf16.mxu0 0
  %1062 = vmatpush1.bf16.msra.mxu0 0
  %1063 = vmatprep.subr.bf16.mxu0 0
  %1064 = vmatpush1.bf16.msra.mxu0 0
  %1065 = vmatprep.subr.bf16.mxu0 0
  %1066 = vmatpush1.bf16.msra.mxu0 0
  %1067 = vmatprep.subr.bf16.mxu0 0
  %1068 = vmatpush1.bf16.msra.mxu0 0
  %1069 = vmatprep.subr.bf16.mxu0 0
  %1070 = vmatpush1.bf16.msra.mxu0 0
  %1071 = vmatprep.subr.bf16.mxu0 0
  %1072 = vmatpush1.bf16.msra.mxu0 0
  %1073 = vmatprep.subr.bf16.mxu0 0
  %1074 = vmatpush1.bf16.msra.mxu0 0
  %1075 = vmatprep.subr.bf16.mxu0 0
  %1076 = vmatpush1.bf16.msra.mxu0 0
  %1077 = vmatprep.subr.bf16.mxu0 0
  %1078 = vmatpush1.bf16.msra.mxu0 0
  %1079 = vmatprep.subr.bf16.mxu0 0
  %1080 = vmatpush1.bf16.msra.mxu0 0
  %1081 = vmatprep.mubr.bf16.mxu0 0
  %1082 = vmatmul.mubr.bf16.gmra.mrb[0].mxu0 %v204
  %v1083 = vpop.f32.mrb[0].mxu0
  %v1084 = vadd.f32 0.0, %v1083
  %v1085 = vpop.f32.mrb[0].mxu0
  %v1086 = vadd.f32 0.0, %v1085
  %v1087 = vpop.f32.mrb[0].mxu0
  %v1088 = vadd.f32 0.0, %v1087
  %v1089 = vpop.f32.mrb[0].mxu0
  %v1090 = vadd.f32 0.0, %v1089
  %1091 = vdwg.mxu0
  %v1092 = vmax.f32 %v353, %v527
  %v1093 = vmax.f32 %v355, %v568
  %v1094 = vmax.f32 %v396, %v570
  %v1095 = vmax.f32 %v398, %v611
  %v1096 = vmax.f32 %v439, %v613
  %v1097 = vmax.f32 %v441, %v654
  %v1098 = vmax.f32 %v482, %v656
  %v1099 = vmax.f32 %v484, %v697
  %v1100 = vmax.f32 %v525, %v699
  %v1101 = vmax.f32 %v357, %v531
  %v1102 = vmax.f32 %v359, %v572
  %v1103 = vmax.f32 %v400, %v574
  %v1104 = vmax.f32 %v402, %v615
  %v1105 = vmax.f32 %v443, %v617
  %v1106 = vmax.f32 %v445, %v658
  %v1107 = vmax.f32 %v486, %v660
  %v1108 = vmax.f32 %v488, %v701
  %v1109 = vmax.f32 %v529, %v703
  %v1110 = vmax.f32 %v740, %v914
  %v1111 = vmax.f32 %v742, %v955
  %v1112 = vmax.f32 %v783, %v957
  %v1113 = vmax.f32 %v785, %v998
  %v1114 = vmax.f32 %v826, %v1000
  %v1115 = vmax.f32 %v828, %v1041
  %v1116 = vmax.f32 %v869, %v1043
  %v1117 = vmax.f32 %v871, %v1084
  %v1118 = vmax.f32 %v912, %v1086
  %v1119 = vmax.f32 %v744, %v918
  %v1120 = vmax.f32 %v746, %v959
  %v1121 = vmax.f32 %v787, %v961
  %v1122 = vmax.f32 %v789, %v1002
  %v1123 = vmax.f32 %v830, %v1004
  %v1124 = vmax.f32 %v832, %v1045
  %v1125 = vmax.f32 %v873, %v1047
  %v1126 = vmax.f32 %v875, %v1088
  %v1127 = vmax.f32 %v916, %v1090
  %v1128 = vmax.f32 %v1092, %v1110
  %v1129 = vmax.f32 %v1093, %v1111
  %v1130 = vmax.f32 %v1094, %v1112
  %v1131 = vmax.f32 %v1095, %v1113
  %v1132 = vmax.f32 %v1096, %v1114
  %v1133 = vmax.f32 %v1097, %v1115
  %v1134 = vmax.f32 %v1098, %v1116
  %v1135 = vmax.f32 %v1099, %v1117
  %v1136 = vmax.f32 %v1100, %v1118
  %v1137 = vmax.f32 %v1101, %v1119
  %v1138 = vmax.f32 %v1102, %v1120
  %v1139 = vmax.f32 %v1103, %v1121
  %v1140 = vmax.f32 %v1104, %v1122
  %v1141 = vmax.f32 %v1105, %v1123
  %v1142 = vmax.f32 %v1106, %v1124
  %v1143 = vmax.f32 %v1107, %v1125
  %v1144 = vmax.f32 %v1108, %v1126
  %v1145 = vmax.f32 %v1109, %v1127
  %v1146 = vld [vmem:[%s2] sm:$0xff]
  %v1147 = vld [vmem:[%s2 + $0x8] sm:$0xff]
  %1149 = vset.pattern.permute.xlu0 0
  %1150 = vperm.xlu0 %1149, %v1146
  %v1151 = vpop.permute.xlu0 %1150
  %1154 = vset.pattern.permute.xlu0 0
  %1155 = vperm.xlu0 %1154, %v1147
  %v1156 = vpop.permute.xlu0 %1155
  %v1158 = vadd.f32 %v1128, %v1151
  %v1159 = vadd.f32 %v1129, %v1151
  %v1160 = vadd.f32 %v1130, %v1151
  %v1161 = vadd.f32 %v1131, %v1151
  %v1162 = vadd.f32 %v1132, %v1151
  %v1163 = vadd.f32 %v1133, %v1151
  %v1164 = vadd.f32 %v1134, %v1151
  %v1165 = vadd.f32 %v1135, %v1151
  %v1166 = vadd.f32 %v1136, %v1151
  %v1167 = vadd.f32 %v1137, %v1156
  %v1168 = vadd.f32 %v1138, %v1156
  %v1169 = vadd.f32 %v1139, %v1156
  %v1170 = vadd.f32 %v1140, %v1156
  %v1171 = vadd.f32 %v1141, %v1156
  %v1172 = vadd.f32 %v1142, %v1156
  %v1173 = vadd.f32 %v1143, %v1156
  %v1174 = vadd.f32 %v1144, %v1156
  %v1175 = vadd.f32 %v1145, %v1156
  %v1176 = vmax.f32 %v1158, 0.0
  %v1177 = vmax.f32 %v1159, 0.0
  %v1178 = vmax.f32 %v1160, 0.0
  %v1179 = vmax.f32 %v1161, 0.0
  %v1180 = vmax.f32 %v1162, 0.0
  %v1181 = vmax.f32 %v1163, 0.0
  %v1182 = vmax.f32 %v1164, 0.0
  %v1183 = vmax.f32 %v1165, 0.0
  %v1184 = vmax.f32 %v1166, 0.0
  %v1185 = vmax.f32 %v1167, 0.0
  %v1186 = vmax.f32 %v1168, 0.0
  %v1187 = vmax.f32 %v1169, 0.0
  %v1188 = vmax.f32 %v1170, 0.0
  %v1189 = vmax.f32 %v1171, 0.0
  %v1190 = vmax.f32 %v1172, 0.0
  %v1191 = vmax.f32 %v1173, 0.0
  %v1192 = vmax.f32 %v1174, 0.0
  %v1193 = vmax.f32 %v1175, 0.0
  %v1194 = vpack.c.bf16 %v1185, %v1176
  %v1195 = vpack.c.bf16 %v1186, %v1177
  %v1196 = vpack.c.bf16 %v1187, %v1178
  %v1197 = vpack.c.bf16 %v1188, %v1179
  %v1198 = vpack.c.bf16 %v1189, %v1180
  %v1199 = vpack.c.bf16 %v1190, %v1181
  %v1200 = vpack.c.bf16 %v1191, %v1182
  %v1201 = vpack.c.bf16 %v1192, %v1183
  %v1202 = vpack.c.bf16 %v1193, %v1184
  %v1212 = vunpack.c.l.b16 %v1194
  %v1213 = vunpack.c.l.b16 %v1195
  %v1214 = vunpack.c.l.b16 %v1196
  %v1215 = vunpack.c.l.b16 %v1197
  %v1216 = vunpack.c.l.b16 %v1198
  %v1217 = vunpack.c.l.b16 %v1199
  %v1218 = vunpack.c.l.b16 %v1200
  %v1219 = vunpack.c.l.b16 %v1201
  %v1220 = vunpack.c.l.b16 %v1202
  %v1221 = vunpack.c.h.b16 %v1194
  %v1222 = vunpack.c.h.b16 %v1195
  %v1223 = vunpack.c.h.b16 %v1196
  %v1224 = vunpack.c.h.b16 %v1197
  %v1225 = vunpack.c.h.b16 %v1198
  %v1226 = vunpack.c.h.b16 %v1199
  %v1227 = vunpack.c.h.b16 %v1200
  %v1228 = vunpack.c.h.b16 %v1201
  %v1229 = vunpack.c.h.b16 %v1202
  %v1230 = vpack.c.b16 %v1213, %v1212
  %v1231 = vpack.c.b16 %v1215, %v1214
  %v1232 = vpack.c.b16 %v1217, %v1216
  %v1233 = vpack.c.b16 %v1219, %v1218
  %v1234 = vpack.c.b16 %v1220, %v1220
  %v1235 = vpack.c.b16 %v1222, %v1221
  %v1236 = vpack.c.b16 %v1224, %v1223
  %v1237 = vpack.c.b16 %v1226, %v1225
  %v1238 = vpack.c.b16 %v1228, %v1227
  %v1239 = vpack.c.b16 %v1229, %v1229
  %1250 = vst [vmem:[%s3] sm:$0xff] %v1230
  %1251 = vst [vmem:[%s3 + $0x8] sm:$0xff] %v1231
  %1252 = vst [vmem:[%s3 + $0x10] sm:$0xff] %v1232
  %1253 = vst [vmem:[%s3 + $0x18] sm:$0xff] %v1233
  %1254 = vst [vmem:[%s3 + $0x20] sm:$0xf] %v1234
  %1255 = vst [vmem:[%s3 + $0x24] sm:$0xff] %v1235
  %1256 = vst [vmem:[%s3 + $0x2c] sm:$0xff] %v1236
  %1257 = vst [vmem:[%s3 + $0x34] sm:$0xff] %v1237
  %1258 = vst [vmem:[%s3 + $0x3c] sm:$0xff] %v1238
  %1259 = vst [vmem:[%s3 + $0x44] sm:$0xf] %v1239
  // Predicated region
  $region14: #{rdm_cnn_lstm_forward.2} parent=0 // pred_check
    _
  $region15: #{rdm_cnn_lstm_forward.2} parent=0 // pred_check_branch
    %1261 = sbr.rel (0) target = $region17
  $region16: #{rdm_cnn_lstm_forward.2} parent=0 // pred_region
    _
  $region17: #{rdm_cnn_lstm_forward.2} parent=0 // pred_fallthru
    _
  // Predicated region
  $region18: #{rdm_cnn_lstm_forward.2} parent=0 // pred_check
    _
  $region19: #{rdm_cnn_lstm_forward.2} parent=0 // pred_check_branch
    %1263 = sbr.rel (0) target = $region21
  $region20: #{rdm_cnn_lstm_forward.2} parent=0 // pred_region
    _
  $region21: #{rdm_cnn_lstm_forward.2} parent=0 // pred_fallthru
    _

// kernel: rdm_cnn_lstm_forward.3
$region0: #{rdm_cnn_lstm_forward.3}
  #allocation0 [shape = 'u32[]', space=smem, size = 0x4, offset = 0x4, fixed_abs, tag = 'smem constant byte address 0x4 - core index']
  #allocation1 [shape = 'u32[144,128]{1,0:T(1,128)}', space=vmem, size = 0x12000, scoped, tag = 'internal scratch']
  #allocation2 [shape = 'f32[1,1]{1,0:T(1,128)S(1)}', space=vmem, size = 0x200, scoped, tag = 'scoped memory for rdm_cnn_lstm_forward.3']
  %s0 = inlined_call_operand.vmem [shape: bf16[960,144], index: 0, kind: input, shape index: {}]
  %s1 = inlined_call_operand.vmem [shape: bf16[144,32], index: 1, kind: input, shape index: {}]
  %s2 = inlined_call_operand.vmem [shape: f32[1,32], index: 2, kind: input, shape index: {}]
  %s3 = inlined_call_operand.vmem [shape: bf16[480,128], index: 3, kind: input, shape index: {}]
  %s4 = inlined_call_operand.vmem [shape: f32[32,128], index: 4, kind: input, shape index: {}]
  %s5 = inlined_call_operand.vmem [shape: f32[1,128], index: 5, kind: input, shape index: {}]
  %s6 = inlined_call_operand.vmem [shape: f32[1,32], index: 6, kind: input, shape index: {}]
  %s7 = inlined_call_operand.<no memory space> [shape: f32[1,1], index: 7, kind: input, shape index: {}]
  %s8 = inlined_call_operand.vmem [shape: f32[2,1], index: 8, kind: output, shape index: {}]
  %s9 = sld [smem:[#allocation0]]
  $region42: #{rdm_cnn_lstm_forward.3} parent=0
    _
  %s11 = ssub.s32 1, %s9
  %s12 = scalar_select 0, %s11, %s9
  %v13 = vstv %s7
  %14 = vst [vmem:[#allocation2] sm:$0x1] %v13
  // Predicated region
  $region2: #{rdm_cnn_lstm_forward.3} parent=0 // pred_check
    _
  $region3: #{rdm_cnn_lstm_forward.3} parent=0 // pred_check_branch
    %16 = sbr.rel (0) target = $region5
  $region4: #{rdm_cnn_lstm_forward.3} parent=0 // pred_region
    _
  $region5: #{rdm_cnn_lstm_forward.3} parent=0 // pred_fallthru
    _
  // Predicated region
  $region6: #{rdm_cnn_lstm_forward.3} parent=0 // pred_check
    _
  $region7: #{rdm_cnn_lstm_forward.3} parent=0 // pred_check_branch
    %18 = sbr.rel (0) target = $region9
  $region8: #{rdm_cnn_lstm_forward.3} parent=0 // pred_region
    _
  $region9: #{rdm_cnn_lstm_forward.3} parent=0 // pred_fallthru
    _
  // Predicated region
  $region10: #{rdm_cnn_lstm_forward.3} parent=0 // pred_check
    _
  $region11: #{rdm_cnn_lstm_forward.3} parent=0 // pred_check_branch
    %20 = sbr.rel (0) target = $region13
  $region12: #{rdm_cnn_lstm_forward.3} parent=0 // pred_region
    _
  $region13: #{rdm_cnn_lstm_forward.3} parent=0 // pred_fallthru
    _
  // Predicated region
  $region14: #{rdm_cnn_lstm_forward.3} parent=0 // pred_check
    _
  $region15: #{rdm_cnn_lstm_forward.3} parent=0 // pred_check_branch
    %22 = sbr.rel (0) target = $region17
  $region16: #{rdm_cnn_lstm_forward.3} parent=0 // pred_region
    _
  $region17: #{rdm_cnn_lstm_forward.3} parent=0 // pred_fallthru
    _
  // Predicated region
  $region18: #{rdm_cnn_lstm_forward.3} parent=0 // pred_check
    _
  $region19: #{rdm_cnn_lstm_forward.3} parent=0 // pred_check_branch
    %24 = sbr.rel (0) target = $region21
  $region20: #{rdm_cnn_lstm_forward.3} parent=0 // pred_region
    _
  $region21: #{rdm_cnn_lstm_forward.3} parent=0 // pred_fallthru
    _
  // Predicated region
  $region22: #{rdm_cnn_lstm_forward.3} parent=0 // pred_check
    _
  $region23: #{rdm_cnn_lstm_forward.3} parent=0 // pred_check_branch
    %26 = sbr.rel (0) target = $region25
  $region24: #{rdm_cnn_lstm_forward.3} parent=0 // pred_region
    _
  $region25: #{rdm_cnn_lstm_forward.3} parent=0 // pred_fallthru
    _
  // Predicated region
  $region26: #{rdm_cnn_lstm_forward.3} parent=0 // pred_check
    _
  $region27: #{rdm_cnn_lstm_forward.3} parent=0 // pred_check_branch
    %28 = sbr.rel (0) target = $region29
  $region28: #{rdm_cnn_lstm_forward.3} parent=0 // pred_region
    _
  $region29: #{rdm_cnn_lstm_forward.3} parent=0 // pred_fallthru
    _
  // Predicated region
  $region30: #{rdm_cnn_lstm_forward.3} parent=0 // pred_check
    _
  $region31: #{rdm_cnn_lstm_forward.3} parent=0 // pred_check_branch
    %30 = sbr.rel (0) target = $region33
  $region32: #{rdm_cnn_lstm_forward.3} parent=0 // pred_region
    _
  $region33: #{rdm_cnn_lstm_forward.3} parent=0 // pred_fallthru
    _
  %v32 = vld [vmem:[%s0] sm:$0xff]
  %v33 = vld [vmem:[%s0 + $0x8] sm:$0xff]
  %v34 = vld [vmem:[%s0 + $0x10] sm:$0xff]
  %v35 = vld [vmem:[%s0 + $0x18] sm:$0xff]
  %v36 = vld [vmem:[%s0 + $0x20] sm:$0xff]
  %v37 = vld [vmem:[%s0 + $0x28] sm:$0xff]
  %v38 = vld [vmem:[%s0 + $0x30] sm:$0xff]
  %v39 = vld [vmem:[%s0 + $0x38] sm:$0xff]
  %v40 = vld [vmem:[%s0 + $0x40] sm:$0xff]
  %v41 = vld [vmem:[%s0 + $0x48] sm:$0xff]
  %v42 = vld [vmem:[%s0 + $0x50] sm:$0xff]
  %v43 = vld [vmem:[%s0 + $0x58] sm:$0xff]
  %v44 = vld [vmem:[%s0 + $0x60] sm:$0xff]
  %v45 = vld [vmem:[%s0 + $0x68] sm:$0xff]
  %v46 = vld [vmem:[%s0 + $0x70] sm:$0xff]
  %v47 = vld [vmem:[%s0 + $0x78] sm:$0xff]
  %v48 = vld [vmem:[%s0 + $0x80] sm:$0xff]
  %v49 = vld [vmem:[%s0 + $0x88] sm:$0xff]
  %v50 = vld [vmem:[%s0 + $0x90] sm:$0xff]
  %v51 = vld [vmem:[%s0 + $0x98] sm:$0xff]
  %v52 = vld [vmem:[%s0 + $0xa0] sm:$0xff]
  %v53 = vld [vmem:[%s0 + $0xa8] sm:$0xff]
  %v54 = vld [vmem:[%s0 + $0xb0] sm:$0xff]
  %v55 = vld [vmem:[%s0 + $0xb8] sm:$0xff]
  %v56 = vld [vmem:[%s0 + $0xc0] sm:$0xff]
  %v57 = vld [vmem:[%s0 + $0xc8] sm:$0xff]
  %v58 = vld [vmem:[%s0 + $0xd0] sm:$0xff]
  %v59 = vld [vmem:[%s0 + $0xd8] sm:$0xff]
  %v60 = vld [vmem:[%s0 + $0xe0] sm:$0xff]
  %v61 = vld [vmem:[%s0 + $0xe8] sm:$0xff]
  %v62 = vld [vmem:[%s0 + $0xf0] sm:$0xff]
  %v63 = vld [vmem:[%s0 + $0xf8] sm:$0xff]
  %v64 = vld [vmem:[%s0 + $0x100] sm:$0xff]
  %v65 = vld [vmem:[%s0 + $0x108] sm:$0xff]
  %v66 = vld [vmem:[%s0 + $0x110] sm:$0xff]
  %v67 = vld [vmem:[%s0 + $0x118] sm:$0xff]
  %v68 = vld [vmem:[%s0 + $0x120] sm:$0xff]
  %v69 = vld [vmem:[%s0 + $0x128] sm:$0xff]
  %v70 = vld [vmem:[%s0 + $0x130] sm:$0xff]
  %v71 = vld [vmem:[%s0 + $0x138] sm:$0xff]
  %v72 = vld [vmem:[%s0 + $0x140] sm:$0xff]
  %v73 = vld [vmem:[%s0 + $0x148] sm:$0xff]
  %v74 = vld [vmem:[%s0 + $0x150] sm:$0xff]
  %v75 = vld [vmem:[%s0 + $0x158] sm:$0xff]
  %v76 = vld [vmem:[%s0 + $0x160] sm:$0xff]
  %v77 = vld [vmem:[%s0 + $0x168] sm:$0xff]
  %v78 = vld [vmem:[%s0 + $0x170] sm:$0xff]
  %v79 = vld [vmem:[%s0 + $0x178] sm:$0xff]
  %v80 = vld [vmem:[%s0 + $0x180] sm:$0xff]
  %v81 = vld [vmem:[%s0 + $0x188] sm:$0xff]
  %v82 = vld [vmem:[%s0 + $0x190] sm:$0xff]
  %v83 = vld [vmem:[%s0 + $0x198] sm:$0xff]
  %v84 = vld [vmem:[%s0 + $0x1a0] sm:$0xff]
  %v85 = vld [vmem:[%s0 + $0x1a8] sm:$0xff]
  %v86 = vld [vmem:[%s0 + $0x1b0] sm:$0xff]
  %v87 = vld [vmem:[%s0 + $0x1b8] sm:$0xff]
  %v88 = vld [vmem:[%s0 + $0x1c0] sm:$0xff]
  %v89 = vld [vmem:[%s0 + $0x1c8] sm:$0xff]
  %v90 = vld [vmem:[%s0 + $0x1d0] sm:$0xff]
  %v91 = vld [vmem:[%s0 + $0x1d8] sm:$0xff]
  %v92 = vld [vmem:[%s0 + $0x1e0] sm:$0xff]
  %v93 = vld [vmem:[%s0 + $0x1e8] sm:$0xff]
  %v94 = vld [vmem:[%s0 + $0x1f0] sm:$0xff]
  %v95 = vld [vmem:[%s0 + $0x1f8] sm:$0xff]
  %v96 = vld [vmem:[%s0 + $0x200] sm:$0xff]
  %v97 = vld [vmem:[%s0 + $0x208] sm:$0xff]
  %v98 = vld [vmem:[%s0 + $0x210] sm:$0xff]
  %v99 = vld [vmem:[%s0 + $0x218] sm:$0xff]
  %v100 = vld [vmem:[%s0 + $0x220] sm:$0xff]
  %v101 = vld [vmem:[%s0 + $0x228] sm:$0xff]
  %v102 = vld [vmem:[%s0 + $0x230] sm:$0xff]
  %v103 = vld [vmem:[%s0 + $0x238] sm:$0xff]
  %v104 = vld [vmem:[%s0 + $0x240] sm:$0xff]
  %v105 = vld [vmem:[%s0 + $0x248] sm:$0xff]
  %v106 = vld [vmem:[%s0 + $0x250] sm:$0xff]
  %v107 = vld [vmem:[%s0 + $0x258] sm:$0xff]
  %v108 = vld [vmem:[%s0 + $0x260] sm:$0xff]
  %v109 = vld [vmem:[%s0 + $0x268] sm:$0xff]
  %v110 = vld [vmem:[%s0 + $0x270] sm:$0xff]
  %v111 = vld [vmem:[%s0 + $0x278] sm:$0xff]
  %v112 = vld [vmem:[%s0 + $0x280] sm:$0xff]
  %v113 = vld [vmem:[%s0 + $0x288] sm:$0xff]
  %v114 = vld [vmem:[%s0 + $0x290] sm:$0xff]
  %v115 = vld [vmem:[%s0 + $0x298] sm:$0xff]
  %v116 = vld [vmem:[%s0 + $0x2a0] sm:$0xff]
  %v117 = vld [vmem:[%s0 + $0x2a8] sm:$0xff]
  %v118 = vld [vmem:[%s0 + $0x2b0] sm:$0xff]
  %v119 = vld [vmem:[%s0 + $0x2b8] sm:$0xff]
  %v120 = vld [vmem:[%s0 + $0x2c0] sm:$0xff]
  %v121 = vld [vmem:[%s0 + $0x2c8] sm:$0xff]
  %v122 = vld [vmem:[%s0 + $0x2d0] sm:$0xff]
  %v123 = vld [vmem:[%s0 + $0x2d8] sm:$0xff]
  %v124 = vld [vmem:[%s0 + $0x2e0] sm:$0xff]
  %v125 = vld [vmem:[%s0 + $0x2e8] sm:$0xff]
  %v126 = vld [vmem:[%s0 + $0x2f0] sm:$0xff]
  %v127 = vld [vmem:[%s0 + $0x2f8] sm:$0xff]
  %v128 = vld [vmem:[%s0 + $0x300] sm:$0xff]
  %v129 = vld [vmem:[%s0 + $0x308] sm:$0xff]
  %v130 = vld [vmem:[%s0 + $0x310] sm:$0xff]
  %v131 = vld [vmem:[%s0 + $0x318] sm:$0xff]
  %v132 = vld [vmem:[%s0 + $0x320] sm:$0xff]
  %v133 = vld [vmem:[%s0 + $0x328] sm:$0xff]
  %v134 = vld [vmem:[%s0 + $0x330] sm:$0xff]
  %v135 = vld [vmem:[%s0 + $0x338] sm:$0xff]
  %v136 = vld [vmem:[%s0 + $0x340] sm:$0xff]
  %v137 = vld [vmem:[%s0 + $0x348] sm:$0xff]
  %v138 = vld [vmem:[%s0 + $0x350] sm:$0xff]
  %v139 = vld [vmem:[%s0 + $0x358] sm:$0xff]
  %v140 = vld [vmem:[%s0 + $0x360] sm:$0xff]
  %v141 = vld [vmem:[%s0 + $0x368] sm:$0xff]
  %v142 = vld [vmem:[%s0 + $0x370] sm:$0xff]
  %v143 = vld [vmem:[%s0 + $0x378] sm:$0xff]
  %v144 = vld [vmem:[%s0 + $0x380] sm:$0xff]
  %v145 = vld [vmem:[%s0 + $0x388] sm:$0xff]
  %v146 = vld [vmem:[%s0 + $0x390] sm:$0xff]
  %v147 = vld [vmem:[%s0 + $0x398] sm:$0xff]
  %v148 = vld [vmem:[%s0 + $0x3a0] sm:$0xff]
  %v149 = vld [vmem:[%s0 + $0x3a8] sm:$0xff]
  %v150 = vld [vmem:[%s0 + $0x3b0] sm:$0xff]
  %v151 = vld [vmem:[%s0 + $0x3b8] sm:$0xff]
  %v152 = vld [vmem:[%s1] sm:$0xf]
  %v153 = vld [vmem:[%s1 + $0x4] sm:$0xf]
  %v154 = vld [vmem:[%s1 + $0x8] sm:$0xf]
  %v155 = vld [vmem:[%s1 + $0xc] sm:$0xf]
  %v156 = vld [vmem:[%s1 + $0x10] sm:$0xf]
  %v157 = vld [vmem:[%s1 + $0x14] sm:$0xf]
  %v158 = vld [vmem:[%s1 + $0x18] sm:$0xf]
  %v159 = vld [vmem:[%s1 + $0x1c] sm:$0xf]
  %v160 = vld [vmem:[%s1 + $0x20] sm:$0xf]
  %v161 = vld [vmem:[%s1 + $0x24] sm:$0xf]
  %v162 = vld [vmem:[%s1 + $0x28] sm:$0xf]
  %v163 = vld [vmem:[%s1 + $0x2c] sm:$0xf]
  %v164 = vld [vmem:[%s1 + $0x30] sm:$0xf]
  %v165 = vld [vmem:[%s1 + $0x34] sm:$0xf]
  %v166 = vld [vmem:[%s1 + $0x38] sm:$0xf]
  %v167 = vld [vmem:[%s1 + $0x3c] sm:$0xf]
  %v168 = vld [vmem:[%s1 + $0x40] sm:$0xf]
  %v169 = vld [vmem:[%s1 + $0x44] sm:$0xf]
  %v290 = vunpack.c.l.b16 %v32
  %v291 = vunpack.c.h.b16 %v32
  %v292 = vunpack.c.l.b16 %v33
  %v293 = vunpack.c.h.b16 %v33
  %v294 = vunpack.c.l.b16 %v34
  %v295 = vunpack.c.h.b16 %v34
  %v296 = vunpack.c.l.b16 %v35
  %v297 = vunpack.c.h.b16 %v35
  %v298 = vunpack.c.l.b16 %v36
  %v299 = vunpack.c.h.b16 %v36
  %v300 = vunpack.c.l.b16 %v37
  %v301 = vunpack.c.h.b16 %v37
  %v302 = vunpack.c.l.b16 %v38
  %v303 = vunpack.c.h.b16 %v38
  %v304 = vunpack.c.l.b16 %v39
  %v305 = vunpack.c.h.b16 %v39
  %v306 = vunpack.c.l.b16 %v40
  %v307 = vunpack.c.h.b16 %v40
  %v308 = vunpack.c.l.b16 %v41
  %v309 = vunpack.c.h.b16 %v41
  %v310 = vunpack.c.l.b16 %v42
  %v311 = vunpack.c.h.b16 %v42
  %v312 = vunpack.c.l.b16 %v43
  %v313 = vunpack.c.h.b16 %v43
  %v314 = vunpack.c.l.b16 %v44
  %v315 = vunpack.c.h.b16 %v44
  %v316 = vunpack.c.l.b16 %v45
  %v317 = vunpack.c.h.b16 %v45
  %v318 = vunpack.c.l.b16 %v46
  %v319 = vunpack.c.h.b16 %v46
  %v320 = vunpack.c.l.b16 %v47
  %v321 = vunpack.c.h.b16 %v47
  %v322 = vunpack.c.l.b16 %v48
  %v323 = vunpack.c.h.b16 %v48
  %v324 = vunpack.c.l.b16 %v49
  %v325 = vunpack.c.h.b16 %v49
  %v326 = vunpack.c.l.b16 %v50
  %v327 = vunpack.c.h.b16 %v50
  %v328 = vunpack.c.l.b16 %v51
  %v329 = vunpack.c.h.b16 %v51
  %v330 = vunpack.c.l.b16 %v52
  %v331 = vunpack.c.h.b16 %v52
  %v332 = vunpack.c.l.b16 %v53
  %v333 = vunpack.c.h.b16 %v53
  %v334 = vunpack.c.l.b16 %v54
  %v335 = vunpack.c.h.b16 %v54
  %v336 = vunpack.c.l.b16 %v55
  %v337 = vunpack.c.h.b16 %v55
  %v338 = vunpack.c.l.b16 %v56
  %v339 = vunpack.c.h.b16 %v56
  %v340 = vunpack.c.l.b16 %v57
  %v341 = vunpack.c.h.b16 %v57
  %v342 = vunpack.c.l.b16 %v58
  %v343 = vunpack.c.h.b16 %v58
  %v344 = vunpack.c.l.b16 %v59
  %v345 = vunpack.c.h.b16 %v59
  %v346 = vunpack.c.l.b16 %v60
  %v347 = vunpack.c.h.b16 %v60
  %v348 = vunpack.c.l.b16 %v61
  %v349 = vunpack.c.h.b16 %v61
  %v350 = vunpack.c.l.b16 %v62
  %v351 = vunpack.c.h.b16 %v62
  %v352 = vunpack.c.l.b16 %v63
  %v353 = vunpack.c.h.b16 %v63
  %v354 = vunpack.c.l.b16 %v64
  %v355 = vunpack.c.h.b16 %v64
  %v356 = vunpack.c.l.b16 %v65
  %v357 = vunpack.c.h.b16 %v65
  %v358 = vunpack.c.l.b16 %v66
  %v359 = vunpack.c.h.b16 %v66
  %v360 = vunpack.c.l.b16 %v67
  %v361 = vunpack.c.h.b16 %v67
  %v362 = vunpack.c.l.b16 %v68
  %v363 = vunpack.c.h.b16 %v68
  %v364 = vunpack.c.l.b16 %v69
  %v365 = vunpack.c.h.b16 %v69
  %v366 = vunpack.c.l.b16 %v70
  %v367 = vunpack.c.h.b16 %v70
  %v368 = vunpack.c.l.b16 %v71
  %v369 = vunpack.c.h.b16 %v71
  %v370 = vunpack.c.l.b16 %v72
  %v371 = vunpack.c.h.b16 %v72
  %v372 = vunpack.c.l.b16 %v73
  %v373 = vunpack.c.h.b16 %v73
  %v374 = vunpack.c.l.b16 %v74
  %v375 = vunpack.c.h.b16 %v74
  %v376 = vunpack.c.l.b16 %v75
  %v377 = vunpack.c.h.b16 %v75
  %v378 = vunpack.c.l.b16 %v76
  %v379 = vunpack.c.h.b16 %v76
  %v380 = vunpack.c.l.b16 %v77
  %v381 = vunpack.c.h.b16 %v77
  %v382 = vunpack.c.l.b16 %v78
  %v383 = vunpack.c.h.b16 %v78
  %v384 = vunpack.c.l.b16 %v79
  %v385 = vunpack.c.h.b16 %v79
  %v386 = vunpack.c.l.b16 %v80
  %v387 = vunpack.c.h.b16 %v80
  %v388 = vunpack.c.l.b16 %v81
  %v389 = vunpack.c.h.b16 %v81
  %v390 = vunpack.c.l.b16 %v82
  %v391 = vunpack.c.h.b16 %v82
  %v392 = vunpack.c.l.b16 %v83
  %v393 = vunpack.c.h.b16 %v83
  %v394 = vunpack.c.l.b16 %v84
  %v395 = vunpack.c.h.b16 %v84
  %v396 = vunpack.c.l.b16 %v85
  %v397 = vunpack.c.h.b16 %v85
  %v398 = vunpack.c.l.b16 %v86
  %v399 = vunpack.c.h.b16 %v86
  %v400 = vunpack.c.l.b16 %v87
  %v401 = vunpack.c.h.b16 %v87
  %v402 = vunpack.c.l.b16 %v88
  %v403 = vunpack.c.h.b16 %v88
  %v404 = vunpack.c.l.b16 %v89
  %v405 = vunpack.c.h.b16 %v89
  %v406 = vunpack.c.l.b16 %v90
  %v407 = vunpack.c.h.b16 %v90
  %v408 = vunpack.c.l.b16 %v91
  %v409 = vunpack.c.h.b16 %v91
  %v410 = vunpack.c.l.b16 %v92
  %v411 = vunpack.c.h.b16 %v92
  %v412 = vunpack.c.l.b16 %v93
  %v413 = vunpack.c.h.b16 %v93
  %v414 = vunpack.c.l.b16 %v94
  %v415 = vunpack.c.h.b16 %v94
  %v416 = vunpack.c.l.b16 %v95
  %v417 = vunpack.c.h.b16 %v95
  %v418 = vunpack.c.l.b16 %v96
  %v419 = vunpack.c.h.b16 %v96
  %v420 = vunpack.c.l.b16 %v97
  %v421 = vunpack.c.h.b16 %v97
  %v422 = vunpack.c.l.b16 %v98
  %v423 = vunpack.c.h.b16 %v98
  %v424 = vunpack.c.l.b16 %v99
  %v425 = vunpack.c.h.b16 %v99
  %v426 = vunpack.c.l.b16 %v100
  %v427 = vunpack.c.h.b16 %v100
  %v428 = vunpack.c.l.b16 %v101
  %v429 = vunpack.c.h.b16 %v101
  %v430 = vunpack.c.l.b16 %v102
  %v431 = vunpack.c.h.b16 %v102
  %v432 = vunpack.c.l.b16 %v103
  %v433 = vunpack.c.h.b16 %v103
  %v434 = vunpack.c.l.b16 %v104
  %v435 = vunpack.c.h.b16 %v104
  %v436 = vunpack.c.l.b16 %v105
  %v437 = vunpack.c.h.b16 %v105
  %v438 = vunpack.c.l.b16 %v106
  %v439 = vunpack.c.h.b16 %v106
  %v440 = vunpack.c.l.b16 %v107
  %v441 = vunpack.c.h.b16 %v107
  %v442 = vunpack.c.l.b16 %v108
  %v443 = vunpack.c.h.b16 %v108
  %v444 = vunpack.c.l.b16 %v109
  %v445 = vunpack.c.h.b16 %v109
  %v446 = vunpack.c.l.b16 %v110
  %v447 = vunpack.c.h.b16 %v110
  %v448 = vunpack.c.l.b16 %v111
  %v449 = vunpack.c.h.b16 %v111
  %v450 = vunpack.c.l.b16 %v112
  %v451 = vunpack.c.h.b16 %v112
  %v452 = vunpack.c.l.b16 %v113
  %v453 = vunpack.c.h.b16 %v113
  %v454 = vunpack.c.l.b16 %v114
  %v455 = vunpack.c.h.b16 %v114
  %v456 = vunpack.c.l.b16 %v115
  %v457 = vunpack.c.h.b16 %v115
  %v458 = vunpack.c.l.b16 %v116
  %v459 = vunpack.c.h.b16 %v116
  %v460 = vunpack.c.l.b16 %v117
  %v461 = vunpack.c.h.b16 %v117
  %v462 = vunpack.c.l.b16 %v118
  %v463 = vunpack.c.h.b16 %v118
  %v464 = vunpack.c.l.b16 %v119
  %v465 = vunpack.c.h.b16 %v119
  %v466 = vunpack.c.l.b16 %v120
  %v467 = vunpack.c.h.b16 %v120
  %v468 = vunpack.c.l.b16 %v121
  %v469 = vunpack.c.h.b16 %v121
  %v470 = vunpack.c.l.b16 %v122
  %v471 = vunpack.c.h.b16 %v122
  %v472 = vunpack.c.l.b16 %v123
  %v473 = vunpack.c.h.b16 %v123
  %v474 = vunpack.c.l.b16 %v124
  %v475 = vunpack.c.h.b16 %v124
  %v476 = vunpack.c.l.b16 %v125
  %v477 = vunpack.c.h.b16 %v125
  %v478 = vunpack.c.l.b16 %v126
  %v479 = vunpack.c.h.b16 %v126
  %v480 = vunpack.c.l.b16 %v127
  %v481 = vunpack.c.h.b16 %v127
  %v482 = vunpack.c.l.b16 %v128
  %v483 = vunpack.c.h.b16 %v128
  %v484 = vunpack.c.l.b16 %v129
  %v485 = vunpack.c.h.b16 %v129
  %v486 = vunpack.c.l.b16 %v130
  %v487 = vunpack.c.h.b16 %v130
  %v488 = vunpack.c.l.b16 %v131
  %v489 = vunpack.c.h.b16 %v131
  %v490 = vunpack.c.l.b16 %v132
  %v491 = vunpack.c.h.b16 %v132
  %v492 = vunpack.c.l.b16 %v133
  %v493 = vunpack.c.h.b16 %v133
  %v494 = vunpack.c.l.b16 %v134
  %v495 = vunpack.c.h.b16 %v134
  %v496 = vunpack.c.l.b16 %v135
  %v497 = vunpack.c.h.b16 %v135
  %v498 = vunpack.c.l.b16 %v136
  %v499 = vunpack.c.h.b16 %v136
  %v500 = vunpack.c.l.b16 %v137
  %v501 = vunpack.c.h.b16 %v137
  %v502 = vunpack.c.l.b16 %v138
  %v503 = vunpack.c.h.b16 %v138
  %v504 = vunpack.c.l.b16 %v139
  %v505 = vunpack.c.h.b16 %v139
  %v506 = vunpack.c.l.b16 %v140
  %v507 = vunpack.c.h.b16 %v140
  %v508 = vunpack.c.l.b16 %v141
  %v509 = vunpack.c.h.b16 %v141
  %v510 = vunpack.c.l.b16 %v142
  %v511 = vunpack.c.h.b16 %v142
  %v512 = vunpack.c.l.b16 %v143
  %v513 = vunpack.c.h.b16 %v143
  %v514 = vunpack.c.l.b16 %v144
  %v515 = vunpack.c.h.b16 %v144
  %v516 = vunpack.c.l.b16 %v145
  %v517 = vunpack.c.h.b16 %v145
  %v518 = vunpack.c.l.b16 %v146
  %v519 = vunpack.c.h.b16 %v146
  %v520 = vunpack.c.l.b16 %v147
  %v521 = vunpack.c.h.b16 %v147
  %v522 = vunpack.c.l.b16 %v148
  %v523 = vunpack.c.h.b16 %v148
  %v524 = vunpack.c.l.b16 %v149
  %v525 = vunpack.c.h.b16 %v149
  %v526 = vunpack.c.l.b16 %v150
  %v527 = vunpack.c.h.b16 %v150
  %v528 = vunpack.c.l.b16 %v151
  %v529 = vunpack.c.h.b16 %v151
  %v530 = vpack.c.b16 %v292, %v290
  %v531 = vpack.c.b16 %v293, %v291
  %v532 = vpack.c.b16 %v296, %v294
  %v533 = vpack.c.b16 %v297, %v295
  %v534 = vpack.c.b16 %v300, %v298
  %v535 = vpack.c.b16 %v301, %v299
  %v536 = vpack.c.b16 %v304, %v302
  %v537 = vpack.c.b16 %v305, %v303
  %v538 = vpack.c.b16 %v308, %v306
  %v539 = vpack.c.b16 %v309, %v307
  %v540 = vpack.c.b16 %v312, %v310
  %v541 = vpack.c.b16 %v313, %v311
  %v542 = vpack.c.b16 %v316, %v314
  %v543 = vpack.c.b16 %v317, %v315
  %v544 = vpack.c.b16 %v320, %v318
  %v545 = vpack.c.b16 %v321, %v319
  %v546 = vpack.c.b16 %v324, %v322
  %v547 = vpack.c.b16 %v325, %v323
  %v548 = vpack.c.b16 %v328, %v326
  %v549 = vpack.c.b16 %v329, %v327
  %v550 = vpack.c.b16 %v332, %v330
  %v551 = vpack.c.b16 %v333, %v331
  %v552 = vpack.c.b16 %v336, %v334
  %v553 = vpack.c.b16 %v337, %v335
  %v554 = vpack.c.b16 %v340, %v338
  %v555 = vpack.c.b16 %v341, %v339
  %v556 = vpack.c.b16 %v344, %v342
  %v557 = vpack.c.b16 %v345, %v343
  %v558 = vpack.c.b16 %v348, %v346
  %v559 = vpack.c.b16 %v349, %v347
  %v560 = vpack.c.b16 %v352, %v350
  %v561 = vpack.c.b16 %v353, %v351
  %v562 = vpack.c.b16 %v356, %v354
  %v563 = vpack.c.b16 %v357, %v355
  %v564 = vpack.c.b16 %v360, %v358
  %v565 = vpack.c.b16 %v361, %v359
  %v566 = vpack.c.b16 %v364, %v362
  %v567 = vpack.c.b16 %v365, %v363
  %v568 = vpack.c.b16 %v368, %v366
  %v569 = vpack.c.b16 %v369, %v367
  %v570 = vpack.c.b16 %v372, %v370
  %v571 = vpack.c.b16 %v373, %v371
  %v572 = vpack.c.b16 %v376, %v374
  %v573 = vpack.c.b16 %v377, %v375
  %v574 = vpack.c.b16 %v380, %v378
  %v575 = vpack.c.b16 %v381, %v379
  %v576 = vpack.c.b16 %v384, %v382
  %v577 = vpack.c.b16 %v385, %v383
  %v578 = vpack.c.b16 %v388, %v386
  %v579 = vpack.c.b16 %v389, %v387
  %v580 = vpack.c.b16 %v392, %v390
  %v581 = vpack.c.b16 %v393, %v391
  %v582 = vpack.c.b16 %v396, %v394
  %v583 = vpack.c.b16 %v397, %v395
  %v584 = vpack.c.b16 %v400, %v398
  %v585 = vpack.c.b16 %v401, %v399
  %v586 = vpack.c.b16 %v404, %v402
  %v587 = vpack.c.b16 %v405, %v403
  %v588 = vpack.c.b16 %v408, %v406
  %v589 = vpack.c.b16 %v409, %v407
  %v590 = vpack.c.b16 %v412, %v410
  %v591 = vpack.c.b16 %v413, %v411
  %v592 = vpack.c.b16 %v416, %v414
  %v593 = vpack.c.b16 %v417, %v415
  %v594 = vpack.c.b16 %v420, %v418
  %v595 = vpack.c.b16 %v421, %v419
  %v596 = vpack.c.b16 %v424, %v422
  %v597 = vpack.c.b16 %v425, %v423
  %v598 = vpack.c.b16 %v428, %v426
  %v599 = vpack.c.b16 %v429, %v427
  %v600 = vpack.c.b16 %v432, %v430
  %v601 = vpack.c.b16 %v433, %v431
  %v602 = vpack.c.b16 %v436, %v434
  %v603 = vpack.c.b16 %v437, %v435
  %v604 = vpack.c.b16 %v440, %v438
  %v605 = vpack.c.b16 %v441, %v439
  %v606 = vpack.c.b16 %v444, %v442
  %v607 = vpack.c.b16 %v445, %v443
  %v608 = vpack.c.b16 %v448, %v446
  %v609 = vpack.c.b16 %v449, %v447
  %v610 = vpack.c.b16 %v452, %v450
  %v611 = vpack.c.b16 %v453, %v451
  %v612 = vpack.c.b16 %v456, %v454
  %v613 = vpack.c.b16 %v457, %v455
  %v614 = vpack.c.b16 %v460, %v458
  %v615 = vpack.c.b16 %v461, %v459
  %v616 = vpack.c.b16 %v464, %v462
  %v617 = vpack.c.b16 %v465, %v463
  %v618 = vpack.c.b16 %v468, %v466
  %v619 = vpack.c.b16 %v469, %v467
  %v620 = vpack.c.b16 %v472, %v470
  %v621 = vpack.c.b16 %v473, %v471
  %v622 = vpack.c.b16 %v476, %v474
  %v623 = vpack.c.b16 %v477, %v475
  %v624 = vpack.c.b16 %v480, %v478
  %v625 = vpack.c.b16 %v481, %v479
  %v626 = vpack.c.b16 %v484, %v482
  %v627 = vpack.c.b16 %v485, %v483
  %v628 = vpack.c.b16 %v488, %v486
  %v629 = vpack.c.b16 %v489, %v487
  %v630 = vpack.c.b16 %v492, %v490
  %v631 = vpack.c.b16 %v493, %v491
  %v632 = vpack.c.b16 %v496, %v494
  %v633 = vpack.c.b16 %v497, %v495
  %v634 = vpack.c.b16 %v500, %v498
  %v635 = vpack.c.b16 %v501, %v499
  %v636 = vpack.c.b16 %v504, %v502
  %v637 = vpack.c.b16 %v505, %v503
  %v638 = vpack.c.b16 %v508, %v506
  %v639 = vpack.c.b16 %v509, %v507
  %v640 = vpack.c.b16 %v512, %v510
  %v641 = vpack.c.b16 %v513, %v511
  %v642 = vpack.c.b16 %v516, %v514
  %v643 = vpack.c.b16 %v517, %v515
  %v644 = vpack.c.b16 %v520, %v518
  %v645 = vpack.c.b16 %v521, %v519
  %v646 = vpack.c.b16 %v524, %v522
  %v647 = vpack.c.b16 %v525, %v523
  %v648 = vpack.c.b16 %v528, %v526
  %v649 = vpack.c.b16 %v529, %v527
  %v728 = vunpack.c.l.b16 %v152
  %v729 = vunpack.c.l.b16 %v153
  %v730 = vunpack.c.l.b16 %v154
  %v731 = vunpack.c.l.b16 %v155
  %v732 = vunpack.c.l.b16 %v156
  %v733 = vunpack.c.l.b16 %v157
  %v734 = vunpack.c.l.b16 %v158
  %v735 = vunpack.c.l.b16 %v159
  %v736 = vunpack.c.l.b16 %v160
  %v737 = vunpack.c.l.b16 %v161
  %v738 = vunpack.c.l.b16 %v162
  %v739 = vunpack.c.l.b16 %v163
  %v740 = vunpack.c.l.b16 %v164
  %v741 = vunpack.c.l.b16 %v165
  %v742 = vunpack.c.l.b16 %v166
  %v743 = vunpack.c.l.b16 %v167
  %v744 = vunpack.c.l.b16 %v168
  %v745 = vunpack.c.l.b16 %v169
  %v746 = vpack.c.b16 %v729, %v728
  %v747 = vpack.c.b16 %v731, %v730
  %v748 = vpack.c.b16 %v733, %v732
  %v749 = vpack.c.b16 %v735, %v734
  %v750 = vpack.c.b16 %v737, %v736
  %v751 = vpack.c.b16 %v739, %v738
  %v752 = vpack.c.b16 %v741, %v740
  %v753 = vpack.c.b16 %v743, %v742
  %v754 = vpack.c.b16 %v745, %v744
  %vm764 = vcmask 130048
  %v766 = vsel %vm764, %v531, 0
  %v769 = vsel %vm764, %v533, 0
  %v772 = vsel %vm764, %v535, 0
  %v775 = vsel %vm764, %v537, 0
  %v778 = vsel %vm764, %v539, 0
  %v781 = vsel %vm764, %v541, 0
  %v784 = vsel %vm764, %v543, 0
  %v787 = vsel %vm764, %v545, 0
  %v790 = vsel %vm764, %v547, 0
  %v793 = vsel %vm764, %v549, 0
  %v796 = vsel %vm764, %v551, 0
  %v799 = vsel %vm764, %v553, 0
  %v802 = vsel %vm764, %v555, 0
  %v805 = vsel %vm764, %v557, 0
  %v808 = vsel %vm764, %v559, 0
  %v811 = vsel %vm764, %v561, 0
  %v814 = vsel %vm764, %v563, 0
  %v817 = vsel %vm764, %v565, 0
  %v820 = vsel %vm764, %v567, 0
  %v823 = vsel %vm764, %v569, 0
  %v826 = vsel %vm764, %v571, 0
  %v829 = vsel %vm764, %v573, 0
  %v832 = vsel %vm764, %v575, 0
  %v835 = vsel %vm764, %v577, 0
  %v838 = vsel %vm764, %v579, 0
  %v841 = vsel %vm764, %v581, 0
  %v844 = vsel %vm764, %v583, 0
  %v847 = vsel %vm764, %v585, 0
  %v850 = vsel %vm764, %v587, 0
  %v853 = vsel %vm764, %v589, 0
  %v856 = vsel %vm764, %v591, 0
  %v859 = vsel %vm764, %v593, 0
  %v862 = vsel %vm764, %v595, 0
  %v865 = vsel %vm764, %v597, 0
  %v868 = vsel %vm764, %v599, 0
  %v871 = vsel %vm764, %v601, 0
  %v874 = vsel %vm764, %v603, 0
  %v877 = vsel %vm764, %v605, 0
  %v880 = vsel %vm764, %v607, 0
  %v883 = vsel %vm764, %v609, 0
  %v886 = vsel %vm764, %v611, 0
  %v889 = vsel %vm764, %v613, 0
  %v892 = vsel %vm764, %v615, 0
  %v895 = vsel %vm764, %v617, 0
  %v898 = vsel %vm764, %v619, 0
  %v901 = vsel %vm764, %v621, 0
  %v904 = vsel %vm764, %v623, 0
  %v907 = vsel %vm764, %v625, 0
  %v910 = vsel %vm764, %v627, 0
  %v913 = vsel %vm764, %v629, 0
  %v916 = vsel %vm764, %v631, 0
  %v919 = vsel %vm764, %v633, 0
  %v922 = vsel %vm764, %v635, 0
  %v925 = vsel %vm764, %v637, 0
  %v928 = vsel %vm764, %v639, 0
  %v931 = vsel %vm764, %v641, 0
  %v934 = vsel %vm764, %v643, 0
  %v937 = vsel %vm764, %v645, 0
  %v940 = vsel %vm764, %v647, 0
  %v943 = vsel %vm764, %v649, 0
  %945 = vmatprep.subr.bf16.mxu0 0
  %946 = vmatpush1.bf16.msra.mxu0 %v746
  %947 = vmatprep.subr.bf16.mxu0 0
  %948 = vmatpush1.bf16.msra.mxu0 %v747
  %949 = vmatprep.subr.bf16.mxu0 0
  %950 = vmatpush1.bf16.msra.mxu0 %v748
  %951 = vmatprep.subr.bf16.mxu0 0
  %952 = vmatpush1.bf16.msra.mxu0 %v749
  %953 = vmatprep.subr.bf16.mxu0 0
  %954 = vmatpush1.bf16.msra.mxu0 %v750
  %955 = vmatprep.subr.bf16.mxu0 0
  %956 = vmatpush1.bf16.msra.mxu0 %v751
  %957 = vmatprep.subr.bf16.mxu0 0
  %958 = vmatpush1.bf16.msra.mxu0 %v752
  %959 = vmatprep.subr.bf16.mxu0 0
  %960 = vmatpush1.bf16.msra.mxu0 %v753
  %961 = vmatprep.subr.bf16.mxu0 0
  %962 = vmatpush1.bf16.msra.mxu0 %v754
  %963 = vmatprep.subr.bf16.mxu0 0
  %964 = vmatpush1.bf16.msra.mxu0 0
  %965 = vmatprep.subr.bf16.mxu0 0
  %966 = vmatpush1.bf16.msra.mxu0 0
  %967 = vmatprep.subr.bf16.mxu0 0
  %968 = vmatpush1.bf16.msra.mxu0 0
  %969 = vmatprep.subr.bf16.mxu0 0
  %970 = vmatpush1.bf16.msra.mxu0 0
  %971 = vmatprep.subr.bf16.mxu0 0
  %972 = vmatpush1.bf16.msra.mxu0 0
  %973 = vmatprep.subr.bf16.mxu0 0
  %974 = vmatpush1.bf16.msra.mxu0 0
  %975 = vmatprep.subr.bf16.mxu0 0
  %976 = vmatpush1.bf16.msra.mxu0 0
  %977 = vmatprep.mubr.bf16.mxu0 %v766
  %978 = vmatmul.mubr.bf16.gmra.mrb[0].mxu0 %v530
  %v979 = vpop.f32.mrb[0].mxu0
  %v980 = vadd.f32 0.0, %v979
  %v981 = vpop.f32.mrb[0].mxu0
  %v982 = vpop.f32.mrb[0].mxu0
  %v983 = vadd.f32 0.0, %v982
  %v984 = vpop.f32.mrb[0].mxu0
  %985 = vmatprep.mubr.bf16.mxu0 %v769
  %986 = vmatmul.mubr.bf16.gmra.mrb[0].mxu0 %v532
  %v987 = vpop.f32.mrb[0].mxu0
  %v988 = vadd.f32 0.0, %v987
  %v989 = vpop.f32.mrb[0].mxu0
  %v990 = vpop.f32.mrb[0].mxu0
  %v991 = vadd.f32 0.0, %v990
  %v992 = vpop.f32.mrb[0].mxu0
  %993 = vmatprep.mubr.bf16.mxu0 %v772
  %994 = vmatmul.mubr.bf16.gmra.mrb[0].mxu0 %v534
  %v995 = vpop.f32.mrb[0].mxu0
  %v996 = vadd.f32 0.0, %v995
  %v997 = vpop.f32.mrb[0].mxu0
  %v998 = vpop.f32.mrb[0].mxu0
  %v999 = vadd.f32 0.0, %v998
  %v1000 = vpop.f32.mrb[0].mxu0
  %1001 = vmatprep.mubr.bf16.mxu0 %v775
  %1002 = vmatmul.mubr.bf16.gmra.mrb[0].mxu0 %v536
  %v1003 = vpop.f32.mrb[0].mxu0
  %v1004 = vadd.f32 0.0, %v1003
  %v1005 = vpop.f32.mrb[0].mxu0
  %v1006 = vpop.f32.mrb[0].mxu0
  %v1007 = vadd.f32 0.0, %v1006
  %v1008 = vpop.f32.mrb[0].mxu0
  %1009 = vmatprep.mubr.bf16.mxu0 %v778
  %1010 = vmatmul.mubr.bf16.gmra.mrb[0].mxu0 %v538
  %v1011 = vpop.f32.mrb[0].mxu0
  %v1012 = vadd.f32 0.0, %v1011
  %v1013 = vpop.f32.mrb[0].mxu0
  %v1014 = vpop.f32.mrb[0].mxu0
  %v1015 = vadd.f32 0.0, %v1014
  %v1016 = vpop.f32.mrb[0].mxu0
  %1017 = vmatprep.mubr.bf16.mxu0 %v781
  %1018 = vmatmul.mubr.bf16.gmra.mrb[0].mxu0 %v540
  %v1019 = vpop.f32.mrb[0].mxu0
  %v1020 = vadd.f32 0.0, %v1019
  %v1021 = vpop.f32.mrb[0].mxu0
  %v1022 = vpop.f32.mrb[0].mxu0
  %v1023 = vadd.f32 0.0, %v1022
  %v1024 = vpop.f32.mrb[0].mxu0
  %1025 = vmatprep.mubr.bf16.mxu0 %v784
  %1026 = vmatmul.mubr.bf16.gmra.mrb[0].mxu0 %v542
  %v1027 = vpop.f32.mrb[0].mxu0
  %v1028 = vadd.f32 0.0, %v1027
  %v1029 = vpop.f32.mrb[0].mxu0
  %v1030 = vpop.f32.mrb[0].mxu0
  %v1031 = vadd.f32 0.0, %v1030
  %v1032 = vpop.f32.mrb[0].mxu0
  %1033 = vmatprep.mubr.bf16.mxu0 %v787
  %1034 = vmatmul.mubr.bf16.gmra.mrb[0].mxu0 %v544
  %v1035 = vpop.f32.mrb[0].mxu0
  %v1036 = vadd.f32 0.0, %v1035
  %v1037 = vpop.f32.mrb[0].mxu0
  %v1038 = vpop.f32.mrb[0].mxu0
  %v1039 = vadd.f32 0.0, %v1038
  %v1040 = vpop.f32.mrb[0].mxu0
  %1041 = vmatprep.mubr.bf16.mxu0 %v790
  %1042 = vmatmul.mubr.bf16.gmra.mrb[0].mxu0 %v546
  %v1043 = vpop.f32.mrb[0].mxu0
  %v1044 = vadd.f32 0.0, %v1043
  %v1045 = vpop.f32.mrb[0].mxu0
  %v1046 = vpop.f32.mrb[0].mxu0
  %v1047 = vadd.f32 0.0, %v1046
  %v1048 = vpop.f32.mrb[0].mxu0
  %1049 = vmatprep.mubr.bf16.mxu0 %v793
  %1050 = vmatmul.mubr.bf16.gmra.mrb[0].mxu0 %v548
  %v1051 = vpop.f32.mrb[0].mxu0
  %v1052 = vadd.f32 0.0, %v1051
  %v1053 = vpop.f32.mrb[0].mxu0
  %v1054 = vpop.f32.mrb[0].mxu0
  %v1055 = vadd.f32 0.0, %v1054
  %v1056 = vpop.f32.mrb[0].mxu0
  %1057 = vmatprep.mubr.bf16.mxu0 %v796
  %1058 = vmatmul.mubr.bf16.gmra.mrb[0].mxu0 %v550
  %v1059 = vpop.f32.mrb[0].mxu0
  %v1060 = vadd.f32 0.0, %v1059
  %v1061 = vpop.f32.mrb[0].mxu0
  %v1062 = vpop.f32.mrb[0].mxu0
  %v1063 = vadd.f32 0.0, %v1062
  %v1064 = vpop.f32.mrb[0].mxu0
  %1065 = vmatprep.mubr.bf16.mxu0 %v799
  %1066 = vmatmul.mubr.bf16.gmra.mrb[0].mxu0 %v552
  %v1067 = vpop.f32.mrb[0].mxu0
  %v1068 = vadd.f32 0.0, %v1067
  %v1069 = vpop.f32.mrb[0].mxu0
  %v1070 = vpop.f32.mrb[0].mxu0
  %v1071 = vadd.f32 0.0, %v1070
  %v1072 = vpop.f32.mrb[0].mxu0
  %1073 = vmatprep.mubr.bf16.mxu0 %v802
  %1074 = vmatmul.mubr.bf16.gmra.mrb[0].mxu0 %v554
  %v1075 = vpop.f32.mrb[0].mxu0
  %v1076 = vadd.f32 0.0, %v1075
  %v1077 = vpop.f32.mrb[0].mxu0
  %v1078 = vpop.f32.mrb[0].mxu0
  %v1079 = vadd.f32 0.0, %v1078
  %v1080 = vpop.f32.mrb[0].mxu0
  %1081 = vmatprep.mubr.bf16.mxu0 %v805
  %1082 = vmatmul.mubr.bf16.gmra.mrb[0].mxu0 %v556
  %v1083 = vpop.f32.mrb[0].mxu0
  %v1084 = vadd.f32 0.0, %v1083
  %v1085 = vpop.f32.mrb[0].mxu0
  %v1086 = vpop.f32.mrb[0].mxu0
  %v1087 = vadd.f32 0.0, %v1086
  %v1088 = vpop.f32.mrb[0].mxu0
  %1089 = vmatprep.mubr.bf16.mxu0 %v808
  %1090 = vmatmul.mubr.bf16.gmra.mrb[0].mxu0 %v558
  %v1091 = vpop.f32.mrb[0].mxu0
  %v1092 = vadd.f32 0.0, %v1091
  %v1093 = vpop.f32.mrb[0].mxu0
  %v1094 = vpop.f32.mrb[0].mxu0
  %v1095 = vadd.f32 0.0, %v1094
  %v1096 = vpop.f32.mrb[0].mxu0
  %1097 = vmatprep.mubr.bf16.mxu0 %v811
  %1098 = vmatmul.mubr.bf16.gmra.mrb[0].mxu0 %v560
  %v1099 = vpop.f32.mrb[0].mxu0
  %v1100 = vadd.f32 0.0, %v1099
  %v1101 = vpop.f32.mrb[0].mxu0
  %v1102 = vpop.f32.mrb[0].mxu0
  %v1103 = vadd.f32 0.0, %v1102
  %v1104 = vpop.f32.mrb[0].mxu0
  %1105 = vmatprep.mubr.bf16.mxu0 %v814
  %1106 = vmatmul.mubr.bf16.gmra.mrb[0].mxu0 %v562
  %v1107 = vpop.f32.mrb[0].mxu0
  %v1108 = vadd.f32 0.0, %v1107
  %v1109 = vpop.f32.mrb[0].mxu0
  %v1110 = vpop.f32.mrb[0].mxu0
  %v1111 = vadd.f32 0.0, %v1110
  %v1112 = vpop.f32.mrb[0].mxu0
  %1113 = vmatprep.mubr.bf16.mxu0 %v817
  %1114 = vmatmul.mubr.bf16.gmra.mrb[0].mxu0 %v564
  %v1115 = vpop.f32.mrb[0].mxu0
  %v1116 = vadd.f32 0.0, %v1115
  %v1117 = vpop.f32.mrb[0].mxu0
  %v1118 = vpop.f32.mrb[0].mxu0
  %v1119 = vadd.f32 0.0, %v1118
  %v1120 = vpop.f32.mrb[0].mxu0
  %1121 = vmatprep.mubr.bf16.mxu0 %v820
  %1122 = vmatmul.mubr.bf16.gmra.mrb[0].mxu0 %v566
  %v1123 = vpop.f32.mrb[0].mxu0
  %v1124 = vadd.f32 0.0, %v1123
  %v1125 = vpop.f32.mrb[0].mxu0
  %v1126 = vpop.f32.mrb[0].mxu0
  %v1127 = vadd.f32 0.0, %v1126
  %v1128 = vpop.f32.mrb[0].mxu0
  %1129 = vmatprep.mubr.bf16.mxu0 %v823
  %1130 = vmatmul.mubr.bf16.gmra.mrb[0].mxu0 %v568
  %v1131 = vpop.f32.mrb[0].mxu0
  %v1132 = vadd.f32 0.0, %v1131
  %v1133 = vpop.f32.mrb[0].mxu0
  %v1134 = vpop.f32.mrb[0].mxu0
  %v1135 = vadd.f32 0.0, %v1134
  %v1136 = vpop.f32.mrb[0].mxu0
  %1137 = vmatprep.mubr.bf16.mxu0 %v826
  %1138 = vmatmul.mubr.bf16.gmra.mrb[0].mxu0 %v570
  %v1139 = vpop.f32.mrb[0].mxu0
  %v1140 = vadd.f32 0.0, %v1139
  %v1141 = vpop.f32.mrb[0].mxu0
  %v1142 = vpop.f32.mrb[0].mxu0
  %v1143 = vadd.f32 0.0, %v1142
  %v1144 = vpop.f32.mrb[0].mxu0
  %1145 = vmatprep.mubr.bf16.mxu0 %v829
  %1146 = vmatmul.mubr.bf16.gmra.mrb[0].mxu0 %v572
  %v1147 = vpop.f32.mrb[0].mxu0
  %v1148 = vadd.f32 0.0, %v1147
  %v1149 = vpop.f32.mrb[0].mxu0
  %v1150 = vpop.f32.mrb[0].mxu0
  %v1151 = vadd.f32 0.0, %v1150
  %v1152 = vpop.f32.mrb[0].mxu0
  %1153 = vmatprep.mubr.bf16.mxu0 %v832
  %1154 = vmatmul.mubr.bf16.gmra.mrb[0].mxu0 %v574
  %v1155 = vpop.f32.mrb[0].mxu0
  %v1156 = vadd.f32 0.0, %v1155
  %v1157 = vpop.f32.mrb[0].mxu0
  %v1158 = vpop.f32.mrb[0].mxu0
  %v1159 = vadd.f32 0.0, %v1158
  %v1160 = vpop.f32.mrb[0].mxu0
  %1161 = vmatprep.mubr.bf16.mxu0 %v835
  %1162 = vmatmul.mubr.bf16.gmra.mrb[0].mxu0 %v576
  %v1163 = vpop.f32.mrb[0].mxu0
  %v1164 = vadd.f32 0.0, %v1163
  %v1165 = vpop.f32.mrb[0].mxu0
  %v1166 = vpop.f32.mrb[0].mxu0
  %v1167 = vadd.f32 0.0, %v1166
  %v1168 = vpop.f32.mrb[0].mxu0
  %1169 = vmatprep.mubr.bf16.mxu0 %v838
  %1170 = vmatmul.mubr.bf16.gmra.mrb[0].mxu0 %v578
  %v1171 = vpop.f32.mrb[0].mxu0
  %v1172 = vadd.f32 0.0, %v1171
  %v1173 = vpop.f32.mrb[0].mxu0
  %v1174 = vpop.f32.mrb[0].mxu0
  %v1175 = vadd.f32 0.0, %v1174
  %v1176 = vpop.f32.mrb[0].mxu0
  %1177 = vmatprep.mubr.bf16.mxu0 %v841
  %1178 = vmatmul.mubr.bf16.gmra.mrb[0].mxu0 %v580
  %v1179 = vpop.f32.mrb[0].mxu0
  %v1180 = vadd.f32 0.0, %v1179
  %v1181 = vpop.f32.mrb[0].mxu0
  %v1182 = vpop.f32.mrb[0].mxu0
  %v1183 = vadd.f32 0.0, %v1182
  %v1184 = vpop.f32.mrb[0].mxu0
  %1185 = vmatprep.mubr.bf16.mxu0 %v844
  %1186 = vmatmul.mubr.bf16.gmra.mrb[0].mxu0 %v582
  %v1187 = vpop.f32.mrb[0].mxu0
  %v1188 = vadd.f32 0.0, %v1187
  %v1189 = vpop.f32.mrb[0].mxu0
  %v1190 = vpop.f32.mrb[0].mxu0
  %v1191 = vadd.f32 0.0, %v1190
  %v1192 = vpop.f32.mrb[0].mxu0
  %1193 = vmatprep.mubr.bf16.mxu0 %v847
  %1194 = vmatmul.mubr.bf16.gmra.mrb[0].mxu0 %v584
  %v1195 = vpop.f32.mrb[0].mxu0
  %v1196 = vadd.f32 0.0, %v1195
  %v1197 = vpop.f32.mrb[0].mxu0
  %v1198 = vpop.f32.mrb[0].mxu0
  %v1199 = vadd.f32 0.0, %v1198
  %v1200 = vpop.f32.mrb[0].mxu0
  %1201 = vmatprep.mubr.bf16.mxu0 %v850
  %1202 = vmatmul.mubr.bf16.gmra.mrb[0].mxu0 %v586
  %v1203 = vpop.f32.mrb[0].mxu0
  %v1204 = vadd.f32 0.0, %v1203
  %v1205 = vpop.f32.mrb[0].mxu0
  %v1206 = vpop.f32.mrb[0].mxu0
  %v1207 = vadd.f32 0.0, %v1206
  %v1208 = vpop.f32.mrb[0].mxu0
  %1209 = vmatprep.mubr.bf16.mxu0 %v853
  %1210 = vmatmul.mubr.bf16.gmra.mrb[0].mxu0 %v588
  %v1211 = vpop.f32.mrb[0].mxu0
  %v1212 = vadd.f32 0.0, %v1211
  %v1213 = vpop.f32.mrb[0].mxu0
  %v1214 = vpop.f32.mrb[0].mxu0
  %v1215 = vadd.f32 0.0, %v1214
  %v1216 = vpop.f32.mrb[0].mxu0
  %1217 = vmatprep.mubr.bf16.mxu0 %v856
  %1218 = vmatmul.mubr.bf16.gmra.mrb[0].mxu0 %v590
  %v1219 = vpop.f32.mrb[0].mxu0
  %v1220 = vadd.f32 0.0, %v1219
  %v1221 = vpop.f32.mrb[0].mxu0
  %v1222 = vpop.f32.mrb[0].mxu0
  %v1223 = vadd.f32 0.0, %v1222
  %v1224 = vpop.f32.mrb[0].mxu0
  %1225 = vmatprep.mubr.bf16.mxu0 %v859
  %1226 = vmatmul.mubr.bf16.gmra.mrb[0].mxu0 %v592
  %v1227 = vpop.f32.mrb[0].mxu0
  %v1228 = vadd.f32 0.0, %v1227
  %v1229 = vpop.f32.mrb[0].mxu0
  %v1230 = vpop.f32.mrb[0].mxu0
  %v1231 = vadd.f32 0.0, %v1230
  %v1232 = vpop.f32.mrb[0].mxu0
  %1233 = vmatprep.mubr.bf16.mxu0 %v862
  %1234 = vmatmul.mubr.bf16.gmra.mrb[0].mxu0 %v594
  %v1235 = vpop.f32.mrb[0].mxu0
  %v1236 = vadd.f32 0.0, %v1235
  %v1237 = vpop.f32.mrb[0].mxu0
  %v1238 = vpop.f32.mrb[0].mxu0
  %v1239 = vadd.f32 0.0, %v1238
  %v1240 = vpop.f32.mrb[0].mxu0
  %1241 = vmatprep.mubr.bf16.mxu0 %v865
  %1242 = vmatmul.mubr.bf16.gmra.mrb[0].mxu0 %v596
  %v1243 = vpop.f32.mrb[0].mxu0
  %v1244 = vadd.f32 0.0, %v1243
  %v1245 = vpop.f32.mrb[0].mxu0
  %v1246 = vpop.f32.mrb[0].mxu0
  %v1247 = vadd.f32 0.0, %v1246
  %v1248 = vpop.f32.mrb[0].mxu0
  %1249 = vmatprep.mubr.bf16.mxu0 %v868
  %1250 = vmatmul.mubr.bf16.gmra.mrb[0].mxu0 %v598
  %v1251 = vpop.f32.mrb[0].mxu0
  %v1252 = vadd.f32 0.0, %v1251
  %v1253 = vpop.f32.mrb[0].mxu0
  %v1254 = vpop.f32.mrb[0].mxu0
  %v1255 = vadd.f32 0.0, %v1254
  %v1256 = vpop.f32.mrb[0].mxu0
  %1257 = vmatprep.mubr.bf16.mxu0 %v871
  %1258 = vmatmul.mubr.bf16.gmra.mrb[0].mxu0 %v600
  %v1259 = vpop.f32.mrb[0].mxu0
  %v1260 = vadd.f32 0.0, %v1259
  %v1261 = vpop.f32.mrb[0].mxu0
  %v1262 = vpop.f32.mrb[0].mxu0
  %v1263 = vadd.f32 0.0, %v1262
  %v1264 = vpop.f32.mrb[0].mxu0
  %1265 = vmatprep.mubr.bf16.mxu0 %v874
  %1266 = vmatmul.mubr.bf16.gmra.mrb[0].mxu0 %v602
  %v1267 = vpop.f32.mrb[0].mxu0
  %v1268 = vadd.f32 0.0, %v1267
  %v1269 = vpop.f32.mrb[0].mxu0
  %v1270 = vpop.f32.mrb[0].mxu0
  %v1271 = vadd.f32 0.0, %v1270
  %v1272 = vpop.f32.mrb[0].mxu0
  %1273 = vmatprep.mubr.bf16.mxu0 %v877
  %1274 = vmatmul.mubr.bf16.gmra.mrb[0].mxu0 %v604
  %v1275 = vpop.f32.mrb[0].mxu0
  %v1276 = vadd.f32 0.0, %v1275
  %v1277 = vpop.f32.mrb[0].mxu0
  %v1278 = vpop.f32.mrb[0].mxu0
  %v1279 = vadd.f32 0.0, %v1278
  %v1280 = vpop.f32.mrb[0].mxu0
  %1281 = vmatprep.mubr.bf16.mxu0 %v880
  %1282 = vmatmul.mubr.bf16.gmra.mrb[0].mxu0 %v606
  %v1283 = vpop.f32.mrb[0].mxu0
  %v1284 = vadd.f32 0.0, %v1283
  %v1285 = vpop.f32.mrb[0].mxu0
  %v1286 = vpop.f32.mrb[0].mxu0
  %v1287 = vadd.f32 0.0, %v1286
  %v1288 = vpop.f32.mrb[0].mxu0
  %1289 = vmatprep.mubr.bf16.mxu0 %v883
  %1290 = vmatmul.mubr.bf16.gmra.mrb[0].mxu0 %v608
  %v1291 = vpop.f32.mrb[0].mxu0
  %v1292 = vadd.f32 0.0, %v1291
  %v1293 = vpop.f32.mrb[0].mxu0
  %v1294 = vpop.f32.mrb[0].mxu0
  %v1295 = vadd.f32 0.0, %v1294
  %v1296 = vpop.f32.mrb[0].mxu0
  %1297 = vmatprep.mubr.bf16.mxu0 %v886
  %1298 = vmatmul.mubr.bf16.gmra.mrb[0].mxu0 %v610
  %v1299 = vpop.f32.mrb[0].mxu0
  %v1300 = vadd.f32 0.0, %v1299
  %v1301 = vpop.f32.mrb[0].mxu0
  %v1302 = vpop.f32.mrb[0].mxu0
  %v1303 = vadd.f32 0.0, %v1302
  %v1304 = vpop.f32.mrb[0].mxu0
  %1305 = vmatprep.mubr.bf16.mxu0 %v889
  %1306 = vmatmul.mubr.bf16.gmra.mrb[0].mxu0 %v612
  %v1307 = vpop.f32.mrb[0].mxu0
  %v1308 = vadd.f32 0.0, %v1307
  %v1309 = vpop.f32.mrb[0].mxu0
  %v1310 = vpop.f32.mrb[0].mxu0
  %v1311 = vadd.f32 0.0, %v1310
  %v1312 = vpop.f32.mrb[0].mxu0
  %1313 = vmatprep.mubr.bf16.mxu0 %v892
  %1314 = vmatmul.mubr.bf16.gmra.mrb[0].mxu0 %v614
  %v1315 = vpop.f32.mrb[0].mxu0
  %v1316 = vadd.f32 0.0, %v1315
  %v1317 = vpop.f32.mrb[0].mxu0
  %v1318 = vpop.f32.mrb[0].mxu0
  %v1319 = vadd.f32 0.0, %v1318
  %v1320 = vpop.f32.mrb[0].mxu0
  %1321 = vmatprep.mubr.bf16.mxu0 %v895
  %1322 = vmatmul.mubr.bf16.gmra.mrb[0].mxu0 %v616
  %v1323 = vpop.f32.mrb[0].mxu0
  %v1324 = vadd.f32 0.0, %v1323
  %v1325 = vpop.f32.mrb[0].mxu0
  %v1326 = vpop.f32.mrb[0].mxu0
  %v1327 = vadd.f32 0.0, %v1326
  %v1328 = vpop.f32.mrb[0].mxu0
  %1329 = vmatprep.mubr.bf16.mxu0 %v898
  %1330 = vmatmul.mubr.bf16.gmra.mrb[0].mxu0 %v618
  %v1331 = vpop.f32.mrb[0].mxu0
  %v1332 = vadd.f32 0.0, %v1331
  %v1333 = vpop.f32.mrb[0].mxu0
  %v1334 = vpop.f32.mrb[0].mxu0
  %v1335 = vadd.f32 0.0, %v1334
  %v1336 = vpop.f32.mrb[0].mxu0
  %1337 = vmatprep.mubr.bf16.mxu0 %v901
  %1338 = vmatmul.mubr.bf16.gmra.mrb[0].mxu0 %v620
  %v1339 = vpop.f32.mrb[0].mxu0
  %v1340 = vadd.f32 0.0, %v1339
  %v1341 = vpop.f32.mrb[0].mxu0
  %v1342 = vpop.f32.mrb[0].mxu0
  %v1343 = vadd.f32 0.0, %v1342
  %v1344 = vpop.f32.mrb[0].mxu0
  %1345 = vmatprep.mubr.bf16.mxu0 %v904
  %1346 = vmatmul.mubr.bf16.gmra.mrb[0].mxu0 %v622
  %v1347 = vpop.f32.mrb[0].mxu0
  %v1348 = vadd.f32 0.0, %v1347
  %v1349 = vpop.f32.mrb[0].mxu0
  %v1350 = vpop.f32.mrb[0].mxu0
  %v1351 = vadd.f32 0.0, %v1350
  %v1352 = vpop.f32.mrb[0].mxu0
  %1353 = vmatprep.mubr.bf16.mxu0 %v907
  %1354 = vmatmul.mubr.bf16.gmra.mrb[0].mxu0 %v624
  %v1355 = vpop.f32.mrb[0].mxu0
  %v1356 = vadd.f32 0.0, %v1355
  %v1357 = vpop.f32.mrb[0].mxu0
  %v1358 = vpop.f32.mrb[0].mxu0
  %v1359 = vadd.f32 0.0, %v1358
  %v1360 = vpop.f32.mrb[0].mxu0
  %1361 = vmatprep.mubr.bf16.mxu0 %v910
  %1362 = vmatmul.mubr.bf16.gmra.mrb[0].mxu0 %v626
  %v1363 = vpop.f32.mrb[0].mxu0
  %v1364 = vadd.f32 0.0, %v1363
  %v1365 = vpop.f32.mrb[0].mxu0
  %v1366 = vpop.f32.mrb[0].mxu0
  %v1367 = vadd.f32 0.0, %v1366
  %v1368 = vpop.f32.mrb[0].mxu0
  %1369 = vmatprep.mubr.bf16.mxu0 %v913
  %1370 = vmatmul.mubr.bf16.gmra.mrb[0].mxu0 %v628
  %v1371 = vpop.f32.mrb[0].mxu0
  %v1372 = vadd.f32 0.0, %v1371
  %v1373 = vpop.f32.mrb[0].mxu0
  %v1374 = vpop.f32.mrb[0].mxu0
  %v1375 = vadd.f32 0.0, %v1374
  %v1376 = vpop.f32.mrb[0].mxu0
  %1377 = vmatprep.mubr.bf16.mxu0 %v916
  %1378 = vmatmul.mubr.bf16.gmra.mrb[0].mxu0 %v630
  %v1379 = vpop.f32.mrb[0].mxu0
  %v1380 = vadd.f32 0.0, %v1379
  %v1381 = vpop.f32.mrb[0].mxu0
  %v1382 = vpop.f32.mrb[0].mxu0
  %v1383 = vadd.f32 0.0, %v1382
  %v1384 = vpop.f32.mrb[0].mxu0
  %1385 = vmatprep.mubr.bf16.mxu0 %v919
  %1386 = vmatmul.mubr.bf16.gmra.mrb[0].mxu0 %v632
  %v1387 = vpop.f32.mrb[0].mxu0
  %v1388 = vadd.f32 0.0, %v1387
  %v1389 = vpop.f32.mrb[0].mxu0
  %v1390 = vpop.f32.mrb[0].mxu0
  %v1391 = vadd.f32 0.0, %v1390
  %v1392 = vpop.f32.mrb[0].mxu0
  %1393 = vmatprep.mubr.bf16.mxu0 %v922
  %1394 = vmatmul.mubr.bf16.gmra.mrb[0].mxu0 %v634
  %v1395 = vpop.f32.mrb[0].mxu0
  %v1396 = vadd.f32 0.0, %v1395
  %v1397 = vpop.f32.mrb[0].mxu0
  %v1398 = vpop.f32.mrb[0].mxu0
  %v1399 = vadd.f32 0.0, %v1398
  %v1400 = vpop.f32.mrb[0].mxu0
  %1401 = vmatprep.mubr.bf16.mxu0 %v925
  %1402 = vmatmul.mubr.bf16.gmra.mrb[0].mxu0 %v636
  %v1403 = vpop.f32.mrb[0].mxu0
  %v1404 = vadd.f32 0.0, %v1403
  %v1405 = vpop.f32.mrb[0].mxu0
  %v1406 = vpop.f32.mrb[0].mxu0
  %v1407 = vadd.f32 0.0, %v1406
  %v1408 = vpop.f32.mrb[0].mxu0
  %1409 = vmatprep.mubr.bf16.mxu0 %v928
  %1410 = vmatmul.mubr.bf16.gmra.mrb[0].mxu0 %v638
  %v1411 = vpop.f32.mrb[0].mxu0
  %v1412 = vadd.f32 0.0, %v1411
  %v1413 = vpop.f32.mrb[0].mxu0
  %v1414 = vpop.f32.mrb[0].mxu0
  %v1415 = vadd.f32 0.0, %v1414
  %v1416 = vpop.f32.mrb[0].mxu0
  %1417 = vmatprep.mubr.bf16.mxu0 %v931
  %1418 = vmatmul.mubr.bf16.gmra.mrb[0].mxu0 %v640
  %v1419 = vpop.f32.mrb[0].mxu0
  %v1420 = vadd.f32 0.0, %v1419
  %v1421 = vpop.f32.mrb[0].mxu0
  %v1422 = vpop.f32.mrb[0].mxu0
  %v1423 = vadd.f32 0.0, %v1422
  %v1424 = vpop.f32.mrb[0].mxu0
  %1425 = vmatprep.mubr.bf16.mxu0 %v934
  %1426 = vmatmul.mubr.bf16.gmra.mrb[0].mxu0 %v642
  %v1427 = vpop.f32.mrb[0].mxu0
  %v1428 = vadd.f32 0.0, %v1427
  %v1429 = vpop.f32.mrb[0].mxu0
  %v1430 = vpop.f32.mrb[0].mxu0
  %v1431 = vadd.f32 0.0, %v1430
  %v1432 = vpop.f32.mrb[0].mxu0
  %1433 = vmatprep.mubr.bf16.mxu0 %v937
  %1434 = vmatmul.mubr.bf16.gmra.mrb[0].mxu0 %v644
  %v1435 = vpop.f32.mrb[0].mxu0
  %v1436 = vadd.f32 0.0, %v1435
  %v1437 = vpop.f32.mrb[0].mxu0
  %v1438 = vpop.f32.mrb[0].mxu0
  %v1439 = vadd.f32 0.0, %v1438
  %v1440 = vpop.f32.mrb[0].mxu0
  %1441 = vmatprep.mubr.bf16.mxu0 %v940
  %1442 = vmatmul.mubr.bf16.gmra.mrb[0].mxu0 %v646
  %v1443 = vpop.f32.mrb[0].mxu0
  %v1444 = vadd.f32 0.0, %v1443
  %v1445 = vpop.f32.mrb[0].mxu0
  %v1446 = vpop.f32.mrb[0].mxu0
  %v1447 = vadd.f32 0.0, %v1446
  %v1448 = vpop.f32.mrb[0].mxu0
  %1449 = vmatprep.mubr.bf16.mxu0 %v943
  %1450 = vmatmul.mubr.bf16.gmra.mrb[0].mxu0 %v648
  %v1451 = vpop.f32.mrb[0].mxu0
  %v1452 = vadd.f32 0.0, %v1451
  %v1453 = vpop.f32.mrb[0].mxu0
  %v1454 = vpop.f32.mrb[0].mxu0
  %v1455 = vadd.f32 0.0, %v1454
  %v1456 = vpop.f32.mrb[0].mxu0
  %1457 = vdwg.mxu0
  %v1458 = vmax.f32 %v980, %v1100
  %v1459 = vmax.f32 %v983, %v1103
  %v1460 = vmax.f32 %v988, %v1108
  %v1461 = vmax.f32 %v991, %v1111
  %v1462 = vmax.f32 %v996, %v1116
  %v1463 = vmax.f32 %v999, %v1119
  %v1464 = vmax.f32 %v1004, %v1124
  %v1465 = vmax.f32 %v1007, %v1127
  %v1466 = vmax.f32 %v1012, %v1132
  %v1467 = vmax.f32 %v1015, %v1135
  %v1468 = vmax.f32 %v1020, %v1140
  %v1469 = vmax.f32 %v1023, %v1143
  %v1470 = vmax.f32 %v1028, %v1148
  %v1471 = vmax.f32 %v1031, %v1151
  %v1472 = vmax.f32 %v1036, %v1156
  %v1473 = vmax.f32 %v1039, %v1159
  %v1474 = vmax.f32 %v1044, %v1164
  %v1475 = vmax.f32 %v1047, %v1167
  %v1476 = vmax.f32 %v1052, %v1172
  %v1477 = vmax.f32 %v1055, %v1175
  %v1478 = vmax.f32 %v1060, %v1180
  %v1479 = vmax.f32 %v1063, %v1183
  %v1480 = vmax.f32 %v1068, %v1188
  %v1481 = vmax.f32 %v1071, %v1191
  %v1482 = vmax.f32 %v1076, %v1196
  %v1483 = vmax.f32 %v1079, %v1199
  %v1484 = vmax.f32 %v1084, %v1204
  %v1485 = vmax.f32 %v1087, %v1207
  %v1486 = vmax.f32 %v1092, %v1212
  %v1487 = vmax.f32 %v1095, %v1215
  %v1488 = vmax.f32 %v1220, %v1340
  %v1489 = vmax.f32 %v1223, %v1343
  %v1490 = vmax.f32 %v1228, %v1348
  %v1491 = vmax.f32 %v1231, %v1351
  %v1492 = vmax.f32 %v1236, %v1356
  %v1493 = vmax.f32 %v1239, %v1359
  %v1494 = vmax.f32 %v1244, %v1364
  %v1495 = vmax.f32 %v1247, %v1367
  %v1496 = vmax.f32 %v1252, %v1372
  %v1497 = vmax.f32 %v1255, %v1375
  %v1498 = vmax.f32 %v1260, %v1380
  %v1499 = vmax.f32 %v1263, %v1383
  %v1500 = vmax.f32 %v1268, %v1388
  %v1501 = vmax.f32 %v1271, %v1391
  %v1502 = vmax.f32 %v1276, %v1396
  %v1503 = vmax.f32 %v1279, %v1399
  %v1504 = vmax.f32 %v1284, %v1404
  %v1505 = vmax.f32 %v1287, %v1407
  %v1506 = vmax.f32 %v1292, %v1412
  %v1507 = vmax.f32 %v1295, %v1415
  %v1508 = vmax.f32 %v1300, %v1420
  %v1509 = vmax.f32 %v1303, %v1423
  %v1510 = vmax.f32 %v1308, %v1428
  %v1511 = vmax.f32 %v1311, %v1431
  %v1512 = vmax.f32 %v1316, %v1436
  %v1513 = vmax.f32 %v1319, %v1439
  %v1514 = vmax.f32 %v1324, %v1444
  %v1515 = vmax.f32 %v1327, %v1447
  %v1516 = vmax.f32 %v1332, %v1452
  %v1517 = vmax.f32 %v1335, %v1455
  %v1518 = vmax.f32 %v1458, %v1488
  %v1519 = vmax.f32 %v1459, %v1489
  %v1520 = vmax.f32 %v1460, %v1490
  %v1521 = vmax.f32 %v1461, %v1491
  %v1522 = vmax.f32 %v1462, %v1492
  %v1523 = vmax.f32 %v1463, %v1493
  %v1524 = vmax.f32 %v1464, %v1494
  %v1525 = vmax.f32 %v1465, %v1495
  %v1526 = vmax.f32 %v1466, %v1496
  %v1527 = vmax.f32 %v1467, %v1497
  %v1528 = vmax.f32 %v1468, %v1498
  %v1529 = vmax.f32 %v1469, %v1499
  %v1530 = vmax.f32 %v1470, %v1500
  %v1531 = vmax.f32 %v1471, %v1501
  %v1532 = vmax.f32 %v1472, %v1502
  %v1533 = vmax.f32 %v1473, %v1503
  %v1534 = vmax.f32 %v1474, %v1504
  %v1535 = vmax.f32 %v1475, %v1505
  %v1536 = vmax.f32 %v1476, %v1506
  %v1537 = vmax.f32 %v1477, %v1507
  %v1538 = vmax.f32 %v1478, %v1508
  %v1539 = vmax.f32 %v1479, %v1509
  %v1540 = vmax.f32 %v1480, %v1510
  %v1541 = vmax.f32 %v1481, %v1511
  %v1542 = vmax.f32 %v1482, %v1512
  %v1543 = vmax.f32 %v1483, %v1513
  %v1544 = vmax.f32 %v1484, %v1514
  %v1545 = vmax.f32 %v1485, %v1515
  %v1546 = vmax.f32 %v1486, %v1516
  %v1547 = vmax.f32 %v1487, %v1517
  %v1548 = vld [vmem:[%s2] sm:$0x1]
  %v1550 = vlaneseq
  %v1551 = vshrl.u32 %v1550, 7
  %v1552 = vsub.s32 0, %v1551
  %v1553 = vrot.slane %v1548, %v1552
  %v1555 = vadd.f32 %v1518, %v1553
  %v1556 = vadd.f32 %v1519, %v1553
  %v1557 = vadd.f32 %v1520, %v1553
  %v1558 = vadd.f32 %v1521, %v1553
  %v1559 = vadd.f32 %v1522, %v1553
  %v1560 = vadd.f32 %v1523, %v1553
  %v1561 = vadd.f32 %v1524, %v1553
  %v1562 = vadd.f32 %v1525, %v1553
  %v1563 = vadd.f32 %v1526, %v1553
  %v1564 = vadd.f32 %v1527, %v1553
  %v1565 = vadd.f32 %v1528, %v1553
  %v1566 = vadd.f32 %v1529, %v1553
  %v1567 = vadd.f32 %v1530, %v1553
  %v1568 = vadd.f32 %v1531, %v1553
  %v1569 = vadd.f32 %v1532, %v1553
  %v1570 = vadd.f32 %v1533, %v1553
  %v1571 = vadd.f32 %v1534, %v1553
  %v1572 = vadd.f32 %v1535, %v1553
  %v1573 = vadd.f32 %v1536, %v1553
  %v1574 = vadd.f32 %v1537, %v1553
  %v1575 = vadd.f32 %v1538, %v1553
  %v1576 = vadd.f32 %v1539, %v1553
  %v1577 = vadd.f32 %v1540, %v1553
  %v1578 = vadd.f32 %v1541, %v1553
  %v1579 = vadd.f32 %v1542, %v1553
  %v1580 = vadd.f32 %v1543, %v1553
  %v1581 = vadd.f32 %v1544, %v1553
  %v1582 = vadd.f32 %v1545, %v1553
  %v1583 = vadd.f32 %v1546, %v1553
  %v1584 = vadd.f32 %v1547, %v1553
  %v1585 = vmax.f32 %v1555, 0.0
  %v1586 = vmax.f32 %v1556, 0.0
  %v1587 = vmax.f32 %v1557, 0.0
  %v1588 = vmax.f32 %v1558, 0.0
  %v1589 = vmax.f32 %v1559, 0.0
  %v1590 = vmax.f32 %v1560, 0.0
  %v1591 = vmax.f32 %v1561, 0.0
  %v1592 = vmax.f32 %v1562, 0.0
  %v1593 = vmax.f32 %v1563, 0.0
  %v1594 = vmax.f32 %v1564, 0.0
  %v1595 = vmax.f32 %v1565, 0.0
  %v1596 = vmax.f32 %v1566, 0.0
  %v1597 = vmax.f32 %v1567, 0.0
  %v1598 = vmax.f32 %v1568, 0.0
  %v1599 = vmax.f32 %v1569, 0.0
  %v1600 = vmax.f32 %v1570, 0.0
  %v1601 = vmax.f32 %v1571, 0.0
  %v1602 = vmax.f32 %v1572, 0.0
  %v1603 = vmax.f32 %v1573, 0.0
  %v1604 = vmax.f32 %v1574, 0.0
  %v1605 = vmax.f32 %v1575, 0.0
  %v1606 = vmax.f32 %v1576, 0.0
  %v1607 = vmax.f32 %v1577, 0.0
  %v1608 = vmax.f32 %v1578, 0.0
  %v1609 = vmax.f32 %v1579, 0.0
  %v1610 = vmax.f32 %v1580, 0.0
  %v1611 = vmax.f32 %v1581, 0.0
  %v1612 = vmax.f32 %v1582, 0.0
  %v1613 = vmax.f32 %v1583, 0.0
  %v1614 = vmax.f32 %v1584, 0.0
  %v1615 = vpack.c.bf16 %v1586, %v1585
  %v1616 = vpack.c.bf16 %v1588, %v1587
  %v1617 = vpack.c.bf16 %v1590, %v1589
  %v1618 = vpack.c.bf16 %v1592, %v1591
  %v1619 = vpack.c.bf16 %v1594, %v1593
  %v1620 = vpack.c.bf16 %v1596, %v1595
  %v1621 = vpack.c.bf16 %v1598, %v1597
  %v1622 = vpack.c.bf16 %v1600, %v1599
  %v1623 = vpack.c.bf16 %v1602, %v1601
  %v1624 = vpack.c.bf16 %v1604, %v1603
  %v1625 = vpack.c.bf16 %v1606, %v1605
  %v1626 = vpack.c.bf16 %v1608, %v1607
  %v1627 = vpack.c.bf16 %v1610, %v1609
  %v1628 = vpack.c.bf16 %v1612, %v1611
  %v1629 = vpack.c.bf16 %v1614, %v1613
  %v1630 = vld [vmem:[%s3] sm:$0xf]
  %v1631 = vld [vmem:[%s3 + $0x4] sm:$0xf]
  %v1632 = vld [vmem:[%s3 + $0x8] sm:$0xf]
  %v1633 = vld [vmem:[%s3 + $0xc] sm:$0xf]
  %v1634 = vld [vmem:[%s3 + $0x10] sm:$0xf]
  %v1635 = vld [vmem:[%s3 + $0x14] sm:$0xf]
  %v1636 = vld [vmem:[%s3 + $0x18] sm:$0xf]
  %v1637 = vld [vmem:[%s3 + $0x1c] sm:$0xf]
  %v1642 = vunpack.c.l.b16 %v1634
  %v1643 = vunpack.c.l.b16 %v1635
  %v1644 = vunpack.c.l.b16 %v1636
  %v1645 = vunpack.c.l.b16 %v1637
  %v1646 = vpack.c.b16 %v1643, %v1642
  %v1647 = vpack.c.b16 %v1645, %v1644
  %vm1650 = vcmask 261120
  %v1652 = vsel %vm1650, %v1616, 0
  %1654 = vmatprep.subr.bf16.mxu0 0
  %1655 = vmatpush1.bf16.msra.mxu0 %v1646
  %1656 = vmatprep.subr.bf16.mxu0 0
  %1657 = vmatpush1.bf16.msra.mxu0 %v1647
  %1658 = vmatprep.subr.bf16.mxu0 0
  %1659 = vmatpush1.bf16.msra.mxu0 0
  %1660 = vmatprep.subr.bf16.mxu0 0
  %1661 = vmatpush1.bf16.msra.mxu0 0
  %1662 = vmatprep.subr.bf16.mxu0 0
  %1663 = vmatpush1.bf16.msra.mxu0 0
  %1664 = vmatprep.subr.bf16.mxu0 0
  %1665 = vmatpush1.bf16.msra.mxu0 0
  %1666 = vmatprep.subr.bf16.mxu0 0
  %1667 = vmatpush1.bf16.msra.mxu0 0
  %1668 = vmatprep.subr.bf16.mxu0 0
  %1669 = vmatpush1.bf16.msra.mxu0 0
  %1670 = vmatprep.subr.bf16.mxu0 0
  %1671 = vmatpush1.bf16.msra.mxu0 0
  %1672 = vmatprep.subr.bf16.mxu0 0
  %1673 = vmatpush1.bf16.msra.mxu0 0
  %1674 = vmatprep.subr.bf16.mxu0 0
  %1675 = vmatpush1.bf16.msra.mxu0 0
  %1676 = vmatprep.subr.bf16.mxu0 0
  %1677 = vmatpush1.bf16.msra.mxu0 0
  %1678 = vmatprep.subr.bf16.mxu0 0
  %1679 = vmatpush1.bf16.msra.mxu0 0
  %1680 = vmatprep.subr.bf16.mxu0 0
  %1681 = vmatpush1.bf16.msra.mxu0 0
  %1682 = vmatprep.subr.bf16.mxu0 0
  %1683 = vmatpush1.bf16.msra.mxu0 0
  %1684 = vmatprep.subr.bf16.mxu0 0
  %1685 = vmatpush1.bf16.msra.mxu0 0
  %1686 = vmatprep.mubr.bf16.mxu0 0
  %1687 = vmatmul.mubr.bf16.gmra.mrb[0].mxu0 %v1652
  %v1688 = vpop.f32.mrb[0].mxu0
  %v1689 = vadd.f32 0.0, %v1688
  %v1690 = vpop.f32.mrb[0].mxu0
  %v1691 = vpop.f32.mrb[0].mxu0
  %v1692 = vadd.f32 0.0, %v1691
  %v1693 = vpop.f32.mrb[0].mxu0
  %1694 = vdwg.mxu0
  %v1699 = vunpack.c.l.b16 %v1630
  %v1700 = vunpack.c.l.b16 %v1631
  %v1701 = vunpack.c.l.b16 %v1632
  %v1702 = vunpack.c.l.b16 %v1633
  %v1703 = vpack.c.b16 %v1700, %v1699
  %v1704 = vpack.c.b16 %v1702, %v1701
  %v1708 = vsel %vm1650, %v1615, 0
  %1710 = vmatprep.subr.bf16.mxu0 0
  %1711 = vmatpush1.bf16.msra.mxu0 %v1703
  %1712 = vmatprep.subr.bf16.mxu0 0
  %1713 = vmatpush1.bf16.msra.mxu0 %v1704
  %1714 = vmatprep.subr.bf16.mxu0 0
  %1715 = vmatpush1.bf16.msra.mxu0 0
  %1716 = vmatprep.subr.bf16.mxu0 0
  %1717 = vmatpush1.bf16.msra.mxu0 0
  %1718 = vmatprep.subr.bf16.mxu0 0
  %1719 = vmatpush1.bf16.msra.mxu0 0
  %1720 = vmatprep.subr.bf16.mxu0 0
  %1721 = vmatpush1.bf16.msra.mxu0 0
  %1722 = vmatprep.subr.bf16.mxu0 0
  %1723 = vmatpush1.bf16.msra.mxu0 0
  %1724 = vmatprep.subr.bf16.mxu0 0
  %1725 = vmatpush1.bf16.msra.mxu0 0
  %1726 = vmatprep.subr.bf16.mxu0 0
  %1727 = vmatpush1.bf16.msra.mxu0 0
  %1728 = vmatprep.subr.bf16.mxu0 0
  %1729 = vmatpush1.bf16.msra.mxu0 0
  %1730 = vmatprep.subr.bf16.mxu0 0
  %1731 = vmatpush1.bf16.msra.mxu0 0
  %1732 = vmatprep.subr.bf16.mxu0 0
  %1733 = vmatpush1.bf16.msra.mxu0 0
  %1734 = vmatprep.subr.bf16.mxu0 0
  %1735 = vmatpush1.bf16.msra.mxu0 0
  %1736 = vmatprep.subr.bf16.mxu0 0
  %1737 = vmatpush1.bf16.msra.mxu0 0
  %1738 = vmatprep.subr.bf16.mxu0 0
  %1739 = vmatpush1.bf16.msra.mxu0 0
  %1740 = vmatprep.subr.bf16.mxu0 0
  %1741 = vmatpush1.bf16.msra.mxu0 0
  %1742 = vmatprep.mubr.bf16.mxu0 0
  %1743 = vmatmul.mubr.bf16.gmra.mrb[0].mxu0 %v1708
  %v1744 = vpop.f32.mrb[0].mxu0
  %v1745 = vadd.f32 %v1689, %v1744
  %v1746 = vpop.f32.mrb[0].mxu0
  %v1747 = vpop.f32.mrb[0].mxu0
  %v1748 = vadd.f32 %v1692, %v1747
  %v1749 = vpop.f32.mrb[0].mxu0
  %1750 = vdwg.mxu0
  %v1751 = vld [vmem:[%s3 + $0x20] sm:$0xf]
  %v1752 = vld [vmem:[%s3 + $0x24] sm:$0xf]
  %v1753 = vld [vmem:[%s3 + $0x28] sm:$0xf]
  %v1754 = vld [vmem:[%s3 + $0x2c] sm:$0xf]
  %v1759 = vunpack.c.l.b16 %v1751
  %v1760 = vunpack.c.l.b16 %v1752
  %v1761 = vunpack.c.l.b16 %v1753
  %v1762 = vunpack.c.l.b16 %v1754
  %v1763 = vpack.c.b16 %v1760, %v1759
  %v1764 = vpack.c.b16 %v1762, %v1761
  %v1768 = vsel %vm1650, %v1617, 0
  %1770 = vmatprep.subr.bf16.mxu0 0
  %1771 = vmatpush1.bf16.msra.mxu0 %v1763
  %1772 = vmatprep.subr.bf16.mxu0 0
  %1773 = vmatpush1.bf16.msra.mxu0 %v1764
  %1774 = vmatprep.subr.bf16.mxu0 0
  %1775 = vmatpush1.bf16.msra.mxu0 0
  %1776 = vmatprep.subr.bf16.mxu0 0
  %1777 = vmatpush1.bf16.msra.mxu0 0
  %1778 = vmatprep.subr.bf16.mxu0 0
  %1779 = vmatpush1.bf16.msra.mxu0 0
  %1780 = vmatprep.subr.bf16.mxu0 0
  %1781 = vmatpush1.bf16.msra.mxu0 0
  %1782 = vmatprep.subr.bf16.mxu0 0
  %1783 = vmatpush1.bf16.msra.mxu0 0
  %1784 = vmatprep.subr.bf16.mxu0 0
  %1785 = vmatpush1.bf16.msra.mxu0 0
  %1786 = vmatprep.subr.bf16.mxu0 0
  %1787 = vmatpush1.bf16.msra.mxu0 0
  %1788 = vmatprep.subr.bf16.mxu0 0
  %1789 = vmatpush1.bf16.msra.mxu0 0
  %1790 = vmatprep.subr.bf16.mxu0 0
  %1791 = vmatpush1.bf16.msra.mxu0 0
  %1792 = vmatprep.subr.bf16.mxu0 0
  %1793 = vmatpush1.bf16.msra.mxu0 0
  %1794 = vmatprep.subr.bf16.mxu0 0
  %1795 = vmatpush1.bf16.msra.mxu0 0
  %1796 = vmatprep.subr.bf16.mxu0 0
  %1797 = vmatpush1.bf16.msra.mxu0 0
  %1798 = vmatprep.subr.bf16.mxu0 0
  %1799 = vmatpush1.bf16.msra.mxu0 0
  %1800 = vmatprep.subr.bf16.mxu0 0
  %1801 = vmatpush1.bf16.msra.mxu0 0
  %1802 = vmatprep.mubr.bf16.mxu0 0
  %1803 = vmatmul.mubr.bf16.gmra.mrb[0].mxu0 %v1768
  %v1804 = vpop.f32.mrb[0].mxu0
  %v1805 = vadd.f32 0.0, %v1804
  %v1806 = vpop.f32.mrb[0].mxu0
  %v1807 = vpop.f32.mrb[0].mxu0
  %v1808 = vadd.f32 0.0, %v1807
  %v1809 = vpop.f32.mrb[0].mxu0
  %1810 = vdwg.mxu0
  %v1811 = vadd.f32 %v1745, %v1805
  %v1812 = vadd.f32 %v1748, %v1808
  %v1813 = vld [vmem:[%s3 + $0x30] sm:$0xf]
  %v1814 = vld [vmem:[%s3 + $0x34] sm:$0xf]
  %v1815 = vld [vmem:[%s3 + $0x38] sm:$0xf]
  %v1816 = vld [vmem:[%s3 + $0x3c] sm:$0xf]
  %v1821 = vunpack.c.l.b16 %v1813
  %v1822 = vunpack.c.l.b16 %v1814
  %v1823 = vunpack.c.l.b16 %v1815
  %v1824 = vunpack.c.l.b16 %v1816
  %v1825 = vpack.c.b16 %v1822, %v1821
  %v1826 = vpack.c.b16 %v1824, %v1823
  %v1830 = vsel %vm1650, %v1618, 0
  %1832 = vmatprep.subr.bf16.mxu0 0
  %1833 = vmatpush1.bf16.msra.mxu0 %v1825
  %1834 = vmatprep.subr.bf16.mxu0 0
  %1835 = vmatpush1.bf16.msra.mxu0 %v1826
  %1836 = vmatprep.subr.bf16.mxu0 0
  %1837 = vmatpush1.bf16.msra.mxu0 0
  %1838 = vmatprep.subr.bf16.mxu0 0
  %1839 = vmatpush1.bf16.msra.mxu0 0
  %1840 = vmatprep.subr.bf16.mxu0 0
  %1841 = vmatpush1.bf16.msra.mxu0 0
  %1842 = vmatprep.subr.bf16.mxu0 0
  %1843 = vmatpush1.bf16.msra.mxu0 0
  %1844 = vmatprep.subr.bf16.mxu0 0
  %1845 = vmatpush1.bf16.msra.mxu0 0
  %1846 = vmatprep.subr.bf16.mxu0 0
  %1847 = vmatpush1.bf16.msra.mxu0 0
  %1848 = vmatprep.subr.bf16.mxu0 0
  %1849 = vmatpush1.bf16.msra.mxu0 0
  %1850 = vmatprep.subr.bf16.mxu0 0
  %1851 = vmatpush1.bf16.msra.mxu0 0
  %1852 = vmatprep.subr.bf16.mxu0 0
  %1853 = vmatpush1.bf16.msra.mxu0 0
  %1854 = vmatprep.subr.bf16.mxu0 0
  %1855 = vmatpush1.bf16.msra.mxu0 0
  %1856 = vmatprep.subr.bf16.mxu0 0
  %1857 = vmatpush1.bf16.msra.mxu0 0
  %1858 = vmatprep.subr.bf16.mxu0 0
  %1859 = vmatpush1.bf16.msra.mxu0 0
  %1860 = vmatprep.subr.bf16.mxu0 0
  %1861 = vmatpush1.bf16.msra.mxu0 0
  %1862 = vmatprep.subr.bf16.mxu0 0
  %1863 = vmatpush1.bf16.msra.mxu0 0
  %1864 = vmatprep.mubr.bf16.mxu0 0
  %1865 = vmatmul.mubr.bf16.gmra.mrb[0].mxu0 %v1830
  %v1866 = vpop.f32.mrb[0].mxu0
  %v1867 = vadd.f32 0.0, %v1866
  %v1868 = vpop.f32.mrb[0].mxu0
  %v1869 = vpop.f32.mrb[0].mxu0
  %v1870 = vadd.f32 0.0, %v1869
  %v1871 = vpop.f32.mrb[0].mxu0
  %1872 = vdwg.mxu0
  %v1873 = vadd.f32 %v1811, %v1867
  %v1874 = vadd.f32 %v1812, %v1870
  %v1875 = vld [vmem:[%s3 + $0x40] sm:$0xf]
  %v1876 = vld [vmem:[%s3 + $0x44] sm:$0xf]
  %v1877 = vld [vmem:[%s3 + $0x48] sm:$0xf]
  %v1878 = vld [vmem:[%s3 + $0x4c] sm:$0xf]
  %v1883 = vunpack.c.l.b16 %v1875
  %v1884 = vunpack.c.l.b16 %v1876
  %v1885 = vunpack.c.l.b16 %v1877
  %v1886 = vunpack.c.l.b16 %v1878
  %v1887 = vpack.c.b16 %v1884, %v1883
  %v1888 = vpack.c.b16 %v1886, %v1885
  %v1892 = vsel %vm1650, %v1619, 0
  %1894 = vmatprep.subr.bf16.mxu0 0
  %1895 = vmatpush1.bf16.msra.mxu0 %v1887
  %1896 = vmatprep.subr.bf16.mxu0 0
  %1897 = vmatpush1.bf16.msra.mxu0 %v1888
  %1898 = vmatprep.subr.bf16.mxu0 0
  %1899 = vmatpush1.bf16.msra.mxu0 0
  %1900 = vmatprep.subr.bf16.mxu0 0
  %1901 = vmatpush1.bf16.msra.mxu0 0
  %1902 = vmatprep.subr.bf16.mxu0 0
  %1903 = vmatpush1.bf16.msra.mxu0 0
  %1904 = vmatprep.subr.bf16.mxu0 0
  %1905 = vmatpush1.bf16.msra.mxu0 0
  %1906 = vmatprep.subr.bf16.mxu0 0
  %1907 = vmatpush1.bf16.msra.mxu0 0
  %1908 = vmatprep.subr.bf16.mxu0 0
  %1909 = vmatpush1.bf16.msra.mxu0 0
  %1910 = vmatprep.subr.bf16.mxu0 0
  %1911 = vmatpush1.bf16.msra.mxu0 0
  %1912 = vmatprep.subr.bf16.mxu0 0
  %1913 = vmatpush1.bf16.msra.mxu0 0
  %1914 = vmatprep.subr.bf16.mxu0 0
  %1915 = vmatpush1.bf16.msra.mxu0 0
  %1916 = vmatprep.subr.bf16.mxu0 0
  %1917 = vmatpush1.bf16.msra.mxu0 0
  %1918 = vmatprep.subr.bf16.mxu0 0
  %1919 = vmatpush1.bf16.msra.mxu0 0
  %1920 = vmatprep.subr.bf16.mxu0 0
  %1921 = vmatpush1.bf16.msra.mxu0 0
  %1922 = vmatprep.subr.bf16.mxu0 0
  %1923 = vmatpush1.bf16.msra.mxu0 0
  %1924 = vmatprep.subr.bf16.mxu0 0
  %1925 = vmatpush1.bf16.msra.mxu0 0
  %1926 = vmatprep.mubr.bf16.mxu0 0
  %1927 = vmatmul.mubr.bf16.gmra.mrb[0].mxu0 %v1892
  %v1928 = vpop.f32.mrb[0].mxu0
  %v1929 = vadd.f32 0.0, %v1928
  %v1930 = vpop.f32.mrb[0].mxu0
  %v1931 = vpop.f32.mrb[0].mxu0
  %v1932 = vadd.f32 0.0, %v1931
  %v1933 = vpop.f32.mrb[0].mxu0
  %1934 = vdwg.mxu0
  %v1935 = vadd.f32 %v1873, %v1929
  %v1936 = vadd.f32 %v1874, %v1932
  %v1937 = vld [vmem:[%s3 + $0x50] sm:$0xf]
  %v1938 = vld [vmem:[%s3 + $0x54] sm:$0xf]
  %v1939 = vld [vmem:[%s3 + $0x58] sm:$0xf]
  %v1940 = vld [vmem:[%s3 + $0x5c] sm:$0xf]
  %v1945 = vunpack.c.l.b16 %v1937
  %v1946 = vunpack.c.l.b16 %v1938
  %v1947 = vunpack.c.l.b16 %v1939
  %v1948 = vunpack.c.l.b16 %v1940
  %v1949 = vpack.c.b16 %v1946, %v1945
  %v1950 = vpack.c.b16 %v1948, %v1947
  %v1954 = vsel %vm1650, %v1620, 0
  %1956 = vmatprep.subr.bf16.mxu0 0
  %1957 = vmatpush1.bf16.msra.mxu0 %v1949
  %1958 = vmatprep.subr.bf16.mxu0 0
  %1959 = vmatpush1.bf16.msra.mxu0 %v1950
  %1960 = vmatprep.subr.bf16.mxu0 0
  %1961 = vmatpush1.bf16.msra.mxu0 0
  %1962 = vmatprep.subr.bf16.mxu0 0
  %1963 = vmatpush1.bf16.msra.mxu0 0
  %1964 = vmatprep.subr.bf16.mxu0 0
  %1965 = vmatpush1.bf16.msra.mxu0 0
  %1966 = vmatprep.subr.bf16.mxu0 0
  %1967 = vmatpush1.bf16.msra.mxu0 0
  %1968 = vmatprep.subr.bf16.mxu0 0
  %1969 = vmatpush1.bf16.msra.mxu0 0
  %1970 = vmatprep.subr.bf16.mxu0 0
  %1971 = vmatpush1.bf16.msra.mxu0 0
  %1972 = vmatprep.subr.bf16.mxu0 0
  %1973 = vmatpush1.bf16.msra.mxu0 0
  %1974 = vmatprep.subr.bf16.mxu0 0
  %1975 = vmatpush1.bf16.msra.mxu0 0
  %1976 = vmatprep.subr.bf16.mxu0 0
  %1977 = vmatpush1.bf16.msra.mxu0 0
  %1978 = vmatprep.subr.bf16.mxu0 0
  %1979 = vmatpush1.bf16.msra.mxu0 0
  %1980 = vmatprep.subr.bf16.mxu0 0
  %1981 = vmatpush1.bf16.msra.mxu0 0
  %1982 = vmatprep.subr.bf16.mxu0 0
  %1983 = vmatpush1.bf16.msra.mxu0 0
  %1984 = vmatprep.subr.bf16.mxu0 0
  %1985 = vmatpush1.bf16.msra.mxu0 0
  %1986 = vmatprep.subr.bf16.mxu0 0
  %1987 = vmatpush1.bf16.msra.mxu0 0
  %1988 = vmatprep.mubr.bf16.mxu0 0
  %1989 = vmatmul.mubr.bf16.gmra.mrb[0].mxu0 %v1954
  %v1990 = vpop.f32.mrb[0].mxu0
  %v1991 = vadd.f32 0.0, %v1990
  %v1992 = vpop.f32.mrb[0].mxu0
  %v1993 = vpop.f32.mrb[0].mxu0
  %v1994 = vadd.f32 0.0, %v1993
  %v1995 = vpop.f32.mrb[0].mxu0
  %1996 = vdwg.mxu0
  %v1997 = vadd.f32 %v1935, %v1991
  %v1998 = vadd.f32 %v1936, %v1994
  %v1999 = vld [vmem:[%s3 + $0x60] sm:$0xf]
  %v2000 = vld [vmem:[%s3 + $0x64] sm:$0xf]
  %v2001 = vld [vmem:[%s3 + $0x68] sm:$0xf]
  %v2002 = vld [vmem:[%s3 + $0x6c] sm:$0xf]
  %v2007 = vunpack.c.l.b16 %v1999
  %v2008 = vunpack.c.l.b16 %v2000
  %v2009 = vunpack.c.l.b16 %v2001
  %v2010 = vunpack.c.l.b16 %v2002
  %v2011 = vpack.c.b16 %v2008, %v2007
  %v2012 = vpack.c.b16 %v2010, %v2009
  %v2016 = vsel %vm1650, %v1621, 0
  %2018 = vmatprep.subr.bf16.mxu0 0
  %2019 = vmatpush1.bf16.msra.mxu0 %v2011
  %2020 = vmatprep.subr.bf16.mxu0 0
  %2021 = vmatpush1.bf16.msra.mxu0 %v2012
  %2022 = vmatprep.subr.bf16.mxu0 0
  %2023 = vmatpush1.bf16.msra.mxu0 0
  %2024 = vmatprep.subr.bf16.mxu0 0
  %2025 = vmatpush1.bf16.msra.mxu0 0
  %2026 = vmatprep.subr.bf16.mxu0 0
  %2027 = vmatpush1.bf16.msra.mxu0 0
  %2028 = vmatprep.subr.bf16.mxu0 0
  %2029 = vmatpush1.bf16.msra.mxu0 0
  %2030 = vmatprep.subr.bf16.mxu0 0
  %2031 = vmatpush1.bf16.msra.mxu0 0
  %2032 = vmatprep.subr.bf16.mxu0 0
  %2033 = vmatpush1.bf16.msra.mxu0 0
  %2034 = vmatprep.subr.bf16.mxu0 0
  %2035 = vmatpush1.bf16.msra.mxu0 0
  %2036 = vmatprep.subr.bf16.mxu0 0
  %2037 = vmatpush1.bf16.msra.mxu0 0
  %2038 = vmatprep.subr.bf16.mxu0 0
  %2039 = vmatpush1.bf16.msra.mxu0 0
  %2040 = vmatprep.subr.bf16.mxu0 0
  %2041 = vmatpush1.bf16.msra.mxu0 0
  %2042 = vmatprep.subr.bf16.mxu0 0
  %2043 = vmatpush1.bf16.msra.mxu0 0
  %2044 = vmatprep.subr.bf16.mxu0 0
  %2045 = vmatpush1.bf16.msra.mxu0 0
  %2046 = vmatprep.subr.bf16.mxu0 0
  %2047 = vmatpush1.bf16.msra.mxu0 0
  %2048 = vmatprep.subr.bf16.mxu0 0
  %2049 = vmatpush1.bf16.msra.mxu0 0
  %2050 = vmatprep.mubr.bf16.mxu0 0
  %2051 = vmatmul.mubr.bf16.gmra.mrb[0].mxu0 %v2016
  %v2052 = vpop.f32.mrb[0].mxu0
  %v2053 = vadd.f32 0.0, %v2052
  %v2054 = vpop.f32.mrb[0].mxu0
  %v2055 = vpop.f32.mrb[0].mxu0
  %v2056 = vadd.f32 0.0, %v2055
  %v2057 = vpop.f32.mrb[0].mxu0
  %2058 = vdwg.mxu0
  %v2059 = vadd.f32 %v1997, %v2053
  %v2060 = vadd.f32 %v1998, %v2056
  %v2061 = vld [vmem:[%s3 + $0x70] sm:$0xf]
  %v2062 = vld [vmem:[%s3 + $0x74] sm:$0xf]
  %v2063 = vld [vmem:[%s3 + $0x78] sm:$0xf]
  %v2064 = vld [vmem:[%s3 + $0x7c] sm:$0xf]
  %v2069 = vunpack.c.l.b16 %v2061
  %v2070 = vunpack.c.l.b16 %v2062
  %v2071 = vunpack.c.l.b16 %v2063
  %v2072 = vunpack.c.l.b16 %v2064
  %v2073 = vpack.c.b16 %v2070, %v2069
  %v2074 = vpack.c.b16 %v2072, %v2071
  %v2078 = vsel %vm1650, %v1622, 0
  %2080 = vmatprep.subr.bf16.mxu0 0
  %2081 = vmatpush1.bf16.msra.mxu0 %v2073
  %2082 = vmatprep.subr.bf16.mxu0 0
  %2083 = vmatpush1.bf16.msra.mxu0 %v2074
  %2084 = vmatprep.subr.bf16.mxu0 0
  %2085 = vmatpush1.bf16.msra.mxu0 0
  %2086 = vmatprep.subr.bf16.mxu0 0
  %2087 = vmatpush1.bf16.msra.mxu0 0
  %2088 = vmatprep.subr.bf16.mxu0 0
  %2089 = vmatpush1.bf16.msra.mxu0 0
  %2090 = vmatprep.subr.bf16.mxu0 0
  %2091 = vmatpush1.bf16.msra.mxu0 0
  %2092 = vmatprep.subr.bf16.mxu0 0
  %2093 = vmatpush1.bf16.msra.mxu0 0
  %2094 = vmatprep.subr.bf16.mxu0 0
  %2095 = vmatpush1.bf16.msra.mxu0 0
  %2096 = vmatprep.subr.bf16.mxu0 0
  %2097 = vmatpush1.bf16.msra.mxu0 0
  %2098 = vmatprep.subr.bf16.mxu0 0
  %2099 = vmatpush1.bf16.msra.mxu0 0
  %2100 = vmatprep.subr.bf16.mxu0 0
  %2101 = vmatpush1.bf16.msra.mxu0 0
  %2102 = vmatprep.subr.bf16.mxu0 0
  %2103 = vmatpush1.bf16.msra.mxu0 0
  %2104 = vmatprep.subr.bf16.mxu0 0
  %2105 = vmatpush1.bf16.msra.mxu0 0
  %2106 = vmatprep.subr.bf16.mxu0 0
  %2107 = vmatpush1.bf16.msra.mxu0 0
  %2108 = vmatprep.subr.bf16.mxu0 0
  %2109 = vmatpush1.bf16.msra.mxu0 0
  %2110 = vmatprep.subr.bf16.mxu0 0
  %2111 = vmatpush1.bf16.msra.mxu0 0
  %2112 = vmatprep.mubr.bf16.mxu0 0
  %2113 = vmatmul.mubr.bf16.gmra.mrb[0].mxu0 %v2078
  %v2114 = vpop.f32.mrb[0].mxu0
  %v2115 = vadd.f32 0.0, %v2114
  %v2116 = vpop.f32.mrb[0].mxu0
  %v2117 = vpop.f32.mrb[0].mxu0
  %v2118 = vadd.f32 0.0, %v2117
  %v2119 = vpop.f32.mrb[0].mxu0
  %2120 = vdwg.mxu0
  %v2121 = vadd.f32 %v2059, %v2115
  %v2122 = vadd.f32 %v2060, %v2118
  %v2123 = vld [vmem:[%s3 + $0x80] sm:$0xf]
  %v2124 = vld [vmem:[%s3 + $0x84] sm:$0xf]
  %v2125 = vld [vmem:[%s3 + $0x88] sm:$0xf]
  %v2126 = vld [vmem:[%s3 + $0x8c] sm:$0xf]
  %v2131 = vunpack.c.l.b16 %v2123
  %v2132 = vunpack.c.l.b16 %v2124
  %v2133 = vunpack.c.l.b16 %v2125
  %v2134 = vunpack.c.l.b16 %v2126
  %v2135 = vpack.c.b16 %v2132, %v2131
  %v2136 = vpack.c.b16 %v2134, %v2133
  %v2140 = vsel %vm1650, %v1623, 0
  %2142 = vmatprep.subr.bf16.mxu0 0
  %2143 = vmatpush1.bf16.msra.mxu0 %v2135
  %2144 = vmatprep.subr.bf16.mxu0 0
  %2145 = vmatpush1.bf16.msra.mxu0 %v2136
  %2146 = vmatprep.subr.bf16.mxu0 0
  %2147 = vmatpush1.bf16.msra.mxu0 0
  %2148 = vmatprep.subr.bf16.mxu0 0
  %2149 = vmatpush1.bf16.msra.mxu0 0
  %2150 = vmatprep.subr.bf16.mxu0 0
  %2151 = vmatpush1.bf16.msra.mxu0 0
  %2152 = vmatprep.subr.bf16.mxu0 0
  %2153 = vmatpush1.bf16.msra.mxu0 0
  %2154 = vmatprep.subr.bf16.mxu0 0
  %2155 = vmatpush1.bf16.msra.mxu0 0
  %2156 = vmatprep.subr.bf16.mxu0 0
  %2157 = vmatpush1.bf16.msra.mxu0 0
  %2158 = vmatprep.subr.bf16.mxu0 0
  %2159 = vmatpush1.bf16.msra.mxu0 0
  %2160 = vmatprep.subr.bf16.mxu0 0
  %2161 = vmatpush1.bf16.msra.mxu0 0
  %2162 = vmatprep.subr.bf16.mxu0 0
  %2163 = vmatpush1.bf16.msra.mxu0 0
  %2164 = vmatprep.subr.bf16.mxu0 0
  %2165 = vmatpush1.bf16.msra.mxu0 0
  %2166 = vmatprep.subr.bf16.mxu0 0
  %2167 = vmatpush1.bf16.msra.mxu0 0
  %2168 = vmatprep.subr.bf16.mxu0 0
  %2169 = vmatpush1.bf16.msra.mxu0 0
  %2170 = vmatprep.subr.bf16.mxu0 0
  %2171 = vmatpush1.bf16.msra.mxu0 0
  %2172 = vmatprep.subr.bf16.mxu0 0
  %2173 = vmatpush1.bf16.msra.mxu0 0
  %2174 = vmatprep.mubr.bf16.mxu0 0
  %2175 = vmatmul.mubr.bf16.gmra.mrb[0].mxu0 %v2140
  %v2176 = vpop.f32.mrb[0].mxu0
  %v2177 = vadd.f32 0.0, %v2176
  %v2178 = vpop.f32.mrb[0].mxu0
  %v2179 = vpop.f32.mrb[0].mxu0
  %v2180 = vadd.f32 0.0, %v2179
  %v2181 = vpop.f32.mrb[0].mxu0
  %2182 = vdwg.mxu0
  %v2183 = vadd.f32 %v2121, %v2177
  %v2184 = vadd.f32 %v2122, %v2180
  %v2185 = vld [vmem:[%s3 + $0x90] sm:$0xf]
  %v2186 = vld [vmem:[%s3 + $0x94] sm:$0xf]
  %v2187 = vld [vmem:[%s3 + $0x98] sm:$0xf]
  %v2188 = vld [vmem:[%s3 + $0x9c] sm:$0xf]
  %v2193 = vunpack.c.l.b16 %v2185
  %v2194 = vunpack.c.l.b16 %v2186
  %v2195 = vunpack.c.l.b16 %v2187
  %v2196 = vunpack.c.l.b16 %v2188
  %v2197 = vpack.c.b16 %v2194, %v2193
  %v2198 = vpack.c.b16 %v2196, %v2195
  %v2202 = vsel %vm1650, %v1624, 0
  %2204 = vmatprep.subr.bf16.mxu0 0
  %2205 = vmatpush1.bf16.msra.mxu0 %v2197
  %2206 = vmatprep.subr.bf16.mxu0 0
  %2207 = vmatpush1.bf16.msra.mxu0 %v2198
  %2208 = vmatprep.subr.bf16.mxu0 0
  %2209 = vmatpush1.bf16.msra.mxu0 0
  %2210 = vmatprep.subr.bf16.mxu0 0
  %2211 = vmatpush1.bf16.msra.mxu0 0
  %2212 = vmatprep.subr.bf16.mxu0 0
  %2213 = vmatpush1.bf16.msra.mxu0 0
  %2214 = vmatprep.subr.bf16.mxu0 0
  %2215 = vmatpush1.bf16.msra.mxu0 0
  %2216 = vmatprep.subr.bf16.mxu0 0
  %2217 = vmatpush1.bf16.msra.mxu0 0
  %2218 = vmatprep.subr.bf16.mxu0 0
  %2219 = vmatpush1.bf16.msra.mxu0 0
  %2220 = vmatprep.subr.bf16.mxu0 0
  %2221 = vmatpush1.bf16.msra.mxu0 0
  %2222 = vmatprep.subr.bf16.mxu0 0
  %2223 = vmatpush1.bf16.msra.mxu0 0
  %2224 = vmatprep.subr.bf16.mxu0 0
  %2225 = vmatpush1.bf16.msra.mxu0 0
  %2226 = vmatprep.subr.bf16.mxu0 0
  %2227 = vmatpush1.bf16.msra.mxu0 0
  %2228 = vmatprep.subr.bf16.mxu0 0
  %2229 = vmatpush1.bf16.msra.mxu0 0
  %2230 = vmatprep.subr.bf16.mxu0 0
  %2231 = vmatpush1.bf16.msra.mxu0 0
  %2232 = vmatprep.subr.bf16.mxu0 0
  %2233 = vmatpush1.bf16.msra.mxu0 0
  %2234 = vmatprep.subr.bf16.mxu0 0
  %2235 = vmatpush1.bf16.msra.mxu0 0
  %2236 = vmatprep.mubr.bf16.mxu0 0
  %2237 = vmatmul.mubr.bf16.gmra.mrb[0].mxu0 %v2202
  %v2238 = vpop.f32.mrb[0].mxu0
  %v2239 = vadd.f32 0.0, %v2238
  %v2240 = vpop.f32.mrb[0].mxu0
  %v2241 = vpop.f32.mrb[0].mxu0
  %v2242 = vadd.f32 0.0, %v2241
  %v2243 = vpop.f32.mrb[0].mxu0
  %2244 = vdwg.mxu0
  %v2245 = vadd.f32 %v2183, %v2239
  %v2246 = vadd.f32 %v2184, %v2242
  %v2247 = vld [vmem:[%s3 + $0xa0] sm:$0xf]
  %v2248 = vld [vmem:[%s3 + $0xa4] sm:$0xf]
  %v2249 = vld [vmem:[%s3 + $0xa8] sm:$0xf]
  %v2250 = vld [vmem:[%s3 + $0xac] sm:$0xf]
  %v2255 = vunpack.c.l.b16 %v2247
  %v2256 = vunpack.c.l.b16 %v2248
  %v2257 = vunpack.c.l.b16 %v2249
  %v2258 = vunpack.c.l.b16 %v2250
  %v2259 = vpack.c.b16 %v2256, %v2255
  %v2260 = vpack.c.b16 %v2258, %v2257
  %v2264 = vsel %vm1650, %v1625, 0
  %2266 = vmatprep.subr.bf16.mxu0 0
  %2267 = vmatpush1.bf16.msra.mxu0 %v2259
  %2268 = vmatprep.subr.bf16.mxu0 0
  %2269 = vmatpush1.bf16.msra.mxu0 %v2260
  %2270 = vmatprep.subr.bf16.mxu0 0
  %2271 = vmatpush1.bf16.msra.mxu0 0
  %2272 = vmatprep.subr.bf16.mxu0 0
  %2273 = vmatpush1.bf16.msra.mxu0 0
  %2274 = vmatprep.subr.bf16.mxu0 0
  %2275 = vmatpush1.bf16.msra.mxu0 0
  %2276 = vmatprep.subr.bf16.mxu0 0
  %2277 = vmatpush1.bf16.msra.mxu0 0
  %2278 = vmatprep.subr.bf16.mxu0 0
  %2279 = vmatpush1.bf16.msra.mxu0 0
  %2280 = vmatprep.subr.bf16.mxu0 0
  %2281 = vmatpush1.bf16.msra.mxu0 0
  %2282 = vmatprep.subr.bf16.mxu0 0
  %2283 = vmatpush1.bf16.msra.mxu0 0
  %2284 = vmatprep.subr.bf16.mxu0 0
  %2285 = vmatpush1.bf16.msra.mxu0 0
  %2286 = vmatprep.subr.bf16.mxu0 0
  %2287 = vmatpush1.bf16.msra.mxu0 0
  %2288 = vmatprep.subr.bf16.mxu0 0
  %2289 = vmatpush1.bf16.msra.mxu0 0
  %2290 = vmatprep.subr.bf16.mxu0 0
  %2291 = vmatpush1.bf16.msra.mxu0 0
  %2292 = vmatprep.subr.bf16.mxu0 0
  %2293 = vmatpush1.bf16.msra.mxu0 0
  %2294 = vmatprep.subr.bf16.mxu0 0
  %2295 = vmatpush1.bf16.msra.mxu0 0
  %2296 = vmatprep.subr.bf16.mxu0 0
  %2297 = vmatpush1.bf16.msra.mxu0 0
  %2298 = vmatprep.mubr.bf16.mxu0 0
  %2299 = vmatmul.mubr.bf16.gmra.mrb[0].mxu0 %v2264
  %v2300 = vpop.f32.mrb[0].mxu0
  %v2301 = vadd.f32 0.0, %v2300
  %v2302 = vpop.f32.mrb[0].mxu0
  %v2303 = vpop.f32.mrb[0].mxu0
  %v2304 = vadd.f32 0.0, %v2303
  %v2305 = vpop.f32.mrb[0].mxu0
  %2306 = vdwg.mxu0
  %v2307 = vadd.f32 %v2245, %v2301
  %v2308 = vadd.f32 %v2246, %v2304
  %v2309 = vld [vmem:[%s3 + $0xb0] sm:$0xf]
  %v2310 = vld [vmem:[%s3 + $0xb4] sm:$0xf]
  %v2311 = vld [vmem:[%s3 + $0xb8] sm:$0xf]
  %v2312 = vld [vmem:[%s3 + $0xbc] sm:$0xf]
  %v2317 = vunpack.c.l.b16 %v2309
  %v2318 = vunpack.c.l.b16 %v2310
  %v2319 = vunpack.c.l.b16 %v2311
  %v2320 = vunpack.c.l.b16 %v2312
  %v2321 = vpack.c.b16 %v2318, %v2317
  %v2322 = vpack.c.b16 %v2320, %v2319
  %v2326 = vsel %vm1650, %v1626, 0
  %2328 = vmatprep.subr.bf16.mxu0 0
  %2329 = vmatpush1.bf16.msra.mxu0 %v2321
  %2330 = vmatprep.subr.bf16.mxu0 0
  %2331 = vmatpush1.bf16.msra.mxu0 %v2322
  %2332 = vmatprep.subr.bf16.mxu0 0
  %2333 = vmatpush1.bf16.msra.mxu0 0
  %2334 = vmatprep.subr.bf16.mxu0 0
  %2335 = vmatpush1.bf16.msra.mxu0 0
  %2336 = vmatprep.subr.bf16.mxu0 0
  %2337 = vmatpush1.bf16.msra.mxu0 0
  %2338 = vmatprep.subr.bf16.mxu0 0
  %2339 = vmatpush1.bf16.msra.mxu0 0
  %2340 = vmatprep.subr.bf16.mxu0 0
  %2341 = vmatpush1.bf16.msra.mxu0 0
  %2342 = vmatprep.subr.bf16.mxu0 0
  %2343 = vmatpush1.bf16.msra.mxu0 0
  %2344 = vmatprep.subr.bf16.mxu0 0
  %2345 = vmatpush1.bf16.msra.mxu0 0
  %2346 = vmatprep.subr.bf16.mxu0 0
  %2347 = vmatpush1.bf16.msra.mxu0 0
  %2348 = vmatprep.subr.bf16.mxu0 0
  %2349 = vmatpush1.bf16.msra.mxu0 0
  %2350 = vmatprep.subr.bf16.mxu0 0
  %2351 = vmatpush1.bf16.msra.mxu0 0
  %2352 = vmatprep.subr.bf16.mxu0 0
  %2353 = vmatpush1.bf16.msra.mxu0 0
  %2354 = vmatprep.subr.bf16.mxu0 0
  %2355 = vmatpush1.bf16.msra.mxu0 0
  %2356 = vmatprep.subr.bf16.mxu0 0
  %2357 = vmatpush1.bf16.msra.mxu0 0
  %2358 = vmatprep.subr.bf16.mxu0 0
  %2359 = vmatpush1.bf16.msra.mxu0 0
  %2360 = vmatprep.mubr.bf16.mxu0 0
  %2361 = vmatmul.mubr.bf16.gmra.mrb[0].mxu0 %v2326
  %v2362 = vpop.f32.mrb[0].mxu0
  %v2363 = vadd.f32 0.0, %v2362
  %v2364 = vpop.f32.mrb[0].mxu0
  %v2365 = vpop.f32.mrb[0].mxu0
  %v2366 = vadd.f32 0.0, %v2365
  %v2367 = vpop.f32.mrb[0].mxu0
  %2368 = vdwg.mxu0
  %v2369 = vadd.f32 %v2307, %v2363
  %v2370 = vadd.f32 %v2308, %v2366
  %v2371 = vld [vmem:[%s3 + $0xc0] sm:$0xf]
  %v2372 = vld [vmem:[%s3 + $0xc4] sm:$0xf]
  %v2373 = vld [vmem:[%s3 + $0xc8] sm:$0xf]
  %v2374 = vld [vmem:[%s3 + $0xcc] sm:$0xf]
  %v2379 = vunpack.c.l.b16 %v2371
  %v2380 = vunpack.c.l.b16 %v2372
  %v2381 = vunpack.c.l.b16 %v2373
  %v2382 = vunpack.c.l.b16 %v2374
  %v2383 = vpack.c.b16 %v2380, %v2379
  %v2384 = vpack.c.b16 %v2382, %v2381
  %v2388 = vsel %vm1650, %v1627, 0
  %2390 = vmatprep.subr.bf16.mxu0 0
  %2391 = vmatpush1.bf16.msra.mxu0 %v2383
  %2392 = vmatprep.subr.bf16.mxu0 0
  %2393 = vmatpush1.bf16.msra.mxu0 %v2384
  %2394 = vmatprep.subr.bf16.mxu0 0
  %2395 = vmatpush1.bf16.msra.mxu0 0
  %2396 = vmatprep.subr.bf16.mxu0 0
  %2397 = vmatpush1.bf16.msra.mxu0 0
  %2398 = vmatprep.subr.bf16.mxu0 0
  %2399 = vmatpush1.bf16.msra.mxu0 0
  %2400 = vmatprep.subr.bf16.mxu0 0
  %2401 = vmatpush1.bf16.msra.mxu0 0
  %2402 = vmatprep.subr.bf16.mxu0 0
  %2403 = vmatpush1.bf16.msra.mxu0 0
  %2404 = vmatprep.subr.bf16.mxu0 0
  %2405 = vmatpush1.bf16.msra.mxu0 0
  %2406 = vmatprep.subr.bf16.mxu0 0
  %2407 = vmatpush1.bf16.msra.mxu0 0
  %2408 = vmatprep.subr.bf16.mxu0 0
  %2409 = vmatpush1.bf16.msra.mxu0 0
  %2410 = vmatprep.subr.bf16.mxu0 0
  %2411 = vmatpush1.bf16.msra.mxu0 0
  %2412 = vmatprep.subr.bf16.mxu0 0
  %2413 = vmatpush1.bf16.msra.mxu0 0
  %2414 = vmatprep.subr.bf16.mxu0 0
  %2415 = vmatpush1.bf16.msra.mxu0 0
  %2416 = vmatprep.subr.bf16.mxu0 0
  %2417 = vmatpush1.bf16.msra.mxu0 0
  %2418 = vmatprep.subr.bf16.mxu0 0
  %2419 = vmatpush1.bf16.msra.mxu0 0
  %2420 = vmatprep.subr.bf16.mxu0 0
  %2421 = vmatpush1.bf16.msra.mxu0 0
  %2422 = vmatprep.mubr.bf16.mxu0 0
  %2423 = vmatmul.mubr.bf16.gmra.mrb[0].mxu0 %v2388
  %v2424 = vpop.f32.mrb[0].mxu0
  %v2425 = vadd.f32 0.0, %v2424
  %v2426 = vpop.f32.mrb[0].mxu0
  %v2427 = vpop.f32.mrb[0].mxu0
  %v2428 = vadd.f32 0.0, %v2427
  %v2429 = vpop.f32.mrb[0].mxu0
  %2430 = vdwg.mxu0
  %v2431 = vadd.f32 %v2369, %v2425
  %v2432 = vadd.f32 %v2370, %v2428
  %v2433 = vld [vmem:[%s3 + $0xd0] sm:$0xf]
  %v2434 = vld [vmem:[%s3 + $0xd4] sm:$0xf]
  %v2435 = vld [vmem:[%s3 + $0xd8] sm:$0xf]
  %v2436 = vld [vmem:[%s3 + $0xdc] sm:$0xf]
  %v2441 = vunpack.c.l.b16 %v2433
  %v2442 = vunpack.c.l.b16 %v2434
  %v2443 = vunpack.c.l.b16 %v2435
  %v2444 = vunpack.c.l.b16 %v2436
  %v2445 = vpack.c.b16 %v2442, %v2441
  %v2446 = vpack.c.b16 %v2444, %v2443
  %v2450 = vsel %vm1650, %v1628, 0
  %2452 = vmatprep.subr.bf16.mxu0 0
  %2453 = vmatpush1.bf16.msra.mxu0 %v2445
  %2454 = vmatprep.subr.bf16.mxu0 0
  %2455 = vmatpush1.bf16.msra.mxu0 %v2446
  %2456 = vmatprep.subr.bf16.mxu0 0
  %2457 = vmatpush1.bf16.msra.mxu0 0
  %2458 = vmatprep.subr.bf16.mxu0 0
  %2459 = vmatpush1.bf16.msra.mxu0 0
  %2460 = vmatprep.subr.bf16.mxu0 0
  %2461 = vmatpush1.bf16.msra.mxu0 0
  %2462 = vmatprep.subr.bf16.mxu0 0
  %2463 = vmatpush1.bf16.msra.mxu0 0
  %2464 = vmatprep.subr.bf16.mxu0 0
  %2465 = vmatpush1.bf16.msra.mxu0 0
  %2466 = vmatprep.subr.bf16.mxu0 0
  %2467 = vmatpush1.bf16.msra.mxu0 0
  %2468 = vmatprep.subr.bf16.mxu0 0
  %2469 = vmatpush1.bf16.msra.mxu0 0
  %2470 = vmatprep.subr.bf16.mxu0 0
  %2471 = vmatpush1.bf16.msra.mxu0 0
  %2472 = vmatprep.subr.bf16.mxu0 0
  %2473 = vmatpush1.bf16.msra.mxu0 0
  %2474 = vmatprep.subr.bf16.mxu0 0
  %2475 = vmatpush1.bf16.msra.mxu0 0
  %2476 = vmatprep.subr.bf16.mxu0 0
  %2477 = vmatpush1.bf16.msra.mxu0 0
  %2478 = vmatprep.subr.bf16.mxu0 0
  %2479 = vmatpush1.bf16.msra.mxu0 0
  %2480 = vmatprep.subr.bf16.mxu0 0
  %2481 = vmatpush1.bf16.msra.mxu0 0
  %2482 = vmatprep.subr.bf16.mxu0 0
  %2483 = vmatpush1.bf16.msra.mxu0 0
  %2484 = vmatprep.mubr.bf16.mxu0 0
  %2485 = vmatmul.mubr.bf16.gmra.mrb[0].mxu0 %v2450
  %v2486 = vpop.f32.mrb[0].mxu0
  %v2487 = vadd.f32 0.0, %v2486
  %v2488 = vpop.f32.mrb[0].mxu0
  %v2489 = vpop.f32.mrb[0].mxu0
  %v2490 = vadd.f32 0.0, %v2489
  %v2491 = vpop.f32.mrb[0].mxu0
  %2492 = vdwg.mxu0
  %v2493 = vadd.f32 %v2431, %v2487
  %v2494 = vadd.f32 %v2432, %v2490
  %v2495 = vld [vmem:[%s3 + $0xe0] sm:$0xf]
  %v2496 = vld [vmem:[%s3 + $0xe4] sm:$0xf]
  %v2497 = vld [vmem:[%s3 + $0xe8] sm:$0xf]
  %v2498 = vld [vmem:[%s3 + $0xec] sm:$0xf]
  %v2503 = vunpack.c.l.b16 %v2495
  %v2504 = vunpack.c.l.b16 %v2496
  %v2505 = vunpack.c.l.b16 %v2497
  %v2506 = vunpack.c.l.b16 %v2498
  %v2507 = vpack.c.b16 %v2504, %v2503
  %v2508 = vpack.c.b16 %v2506, %v2505
  %v2512 = vsel %vm1650, %v1629, 0
  %2514 = vmatprep.subr.bf16.mxu0 0
  %2515 = vmatpush1.bf16.msra.mxu0 %v2507
  %2516 = vmatprep.subr.bf16.mxu0 0
  %2517 = vmatpush1.bf16.msra.mxu0 %v2508
  %2518 = vmatprep.subr.bf16.mxu0 0
  %2519 = vmatpush1.bf16.msra.mxu0 0
  %2520 = vmatprep.subr.bf16.mxu0 0
  %2521 = vmatpush1.bf16.msra.mxu0 0
  %2522 = vmatprep.subr.bf16.mxu0 0
  %2523 = vmatpush1.bf16.msra.mxu0 0
  %2524 = vmatprep.subr.bf16.mxu0 0
  %2525 = vmatpush1.bf16.msra.mxu0 0
  %2526 = vmatprep.subr.bf16.mxu0 0
  %2527 = vmatpush1.bf16.msra.mxu0 0
  %2528 = vmatprep.subr.bf16.mxu0 0
  %2529 = vmatpush1.bf16.msra.mxu0 0
  %2530 = vmatprep.subr.bf16.mxu0 0
  %2531 = vmatpush1.bf16.msra.mxu0 0
  %2532 = vmatprep.subr.bf16.mxu0 0
  %2533 = vmatpush1.bf16.msra.mxu0 0
  %2534 = vmatprep.subr.bf16.mxu0 0
  %2535 = vmatpush1.bf16.msra.mxu0 0
  %2536 = vmatprep.subr.bf16.mxu0 0
  %2537 = vmatpush1.bf16.msra.mxu0 0
  %2538 = vmatprep.subr.bf16.mxu0 0
  %2539 = vmatpush1.bf16.msra.mxu0 0
  %2540 = vmatprep.subr.bf16.mxu0 0
  %2541 = vmatpush1.bf16.msra.mxu0 0
  %2542 = vmatprep.subr.bf16.mxu0 0
  %2543 = vmatpush1.bf16.msra.mxu0 0
  %2544 = vmatprep.subr.bf16.mxu0 0
  %2545 = vmatpush1.bf16.msra.mxu0 0
  %2546 = vmatprep.mubr.bf16.mxu0 0
  %2547 = vmatmul.mubr.bf16.gmra.mrb[0].mxu0 %v2512
  %v2548 = vpop.f32.mrb[0].mxu0
  %v2549 = vadd.f32 0.0, %v2548
  %v2550 = vpop.f32.mrb[0].mxu0
  %v2551 = vpop.f32.mrb[0].mxu0
  %v2552 = vadd.f32 0.0, %v2551
  %v2553 = vpop.f32.mrb[0].mxu0
  %2554 = vdwg.mxu0
  %v2555 = vadd.f32 %v2493, %v2549
  %v2556 = vadd.f32 %v2494, %v2552
  %v2557 = vld [vmem:[%s5] sm:$0x1]
  %v2559 = vlaneseq
  %v2560 = vshrl.u32 %v2559, 7
  %v2561 = vsub.s32 0, %v2560
  %v2562 = vrot.slane %v2557, %v2561
  %v2564 = vadd.f32 %v2555, %v2562
  %v2565 = vadd.f32 %v2556, %v2562
  %v2566 = vld [vmem:[%s4] sm:$0xff]
  %v2567 = vld [vmem:[%s4 + $0x8] sm:$0xff]
  %v2568 = vld [vmem:[%s4 + $0x10] sm:$0xff]
  %v2569 = vld [vmem:[%s4 + $0x18] sm:$0xff]
  %v2571 = vsel %vm1650, 0.0, 0
  %2573 = vmatprep.subr.mxu0 0.0
  %2574 = vmatpush1.msra.mxu0 %v2566
  %2575 = vmatprep.subr.mxu0 0.0
  %2576 = vmatpush1.msra.mxu0 %v2567
  %2577 = vmatprep.subr.mxu0 0.0
  %2578 = vmatpush1.msra.mxu0 %v2568
  %2579 = vmatprep.subr.mxu0 0.0
  %2580 = vmatpush1.msra.mxu0 %v2569
  %2581 = vmatprep.subr.mxu0 0.0
  %2582 = vmatpush1.msra.mxu0 0.0
  %2583 = vmatprep.subr.mxu0 0.0
  %2584 = vmatpush1.msra.mxu0 0.0
  %2585 = vmatprep.subr.mxu0 0.0
  %2586 = vmatpush1.msra.mxu0 0.0
  %2587 = vmatprep.subr.mxu0 0.0
  %2588 = vmatpush1.msra.mxu0 0.0
  %2589 = vmatprep.subr.mxu0 0.0
  %2590 = vmatpush1.msra.mxu0 0.0
  %2591 = vmatprep.subr.mxu0 0.0
  %2592 = vmatpush1.msra.mxu0 0.0
  %2593 = vmatprep.subr.mxu0 0.0
  %2594 = vmatpush1.msra.mxu0 0.0
  %2595 = vmatprep.subr.mxu0 0.0
  %2596 = vmatpush1.msra.mxu0 0.0
  %2597 = vmatprep.subr.mxu0 0.0
  %2598 = vmatpush1.msra.mxu0 0.0
  %2599 = vmatprep.subr.mxu0 0.0
  %2600 = vmatpush1.msra.mxu0 0.0
  %2601 = vmatprep.subr.mxu0 0.0
  %2602 = vmatpush1.msra.mxu0 0.0
  %2603 = vmatprep.subr.mxu0 0.0
  %2604 = vmatpush1.msra.mxu0 0.0
  %2605 = vmatprep.subr.mxu0 0.0
  %2606 = vmatpush1.msra.mxu0 0.0
  %2607 = vmatprep.subr.mxu0 0.0
  %2608 = vmatpush1.msra.mxu0 0.0
  %2609 = vmatprep.subr.mxu0 0.0
  %2610 = vmatpush1.msra.mxu0 0.0
  %2611 = vmatprep.subr.mxu0 0.0
  %2612 = vmatpush1.msra.mxu0 0.0
  %2613 = vmatprep.subr.mxu0 0.0
  %2614 = vmatpush1.msra.mxu0 0.0
  %2615 = vmatprep.subr.mxu0 0.0
  %2616 = vmatpush1.msra.mxu0 0.0
  %2617 = vmatprep.subr.mxu0 0.0
  %2618 = vmatpush1.msra.mxu0 0.0
  %2619 = vmatprep.subr.mxu0 0.0
  %2620 = vmatpush1.msra.mxu0 0.0
  %2621 = vmatprep.subr.mxu0 0.0
  %2622 = vmatpush1.msra.mxu0 0.0
  %2623 = vmatprep.subr.mxu0 0.0
  %2624 = vmatpush1.msra.mxu0 0.0
  %2625 = vmatprep.subr.mxu0 0.0
  %2626 = vmatpush1.msra.mxu0 0.0
  %2627 = vmatprep.subr.mxu0 0.0
  %2628 = vmatpush1.msra.mxu0 0.0
  %2629 = vmatprep.subr.mxu0 0.0
  %2630 = vmatpush1.msra.mxu0 0.0
  %2631 = vmatprep.subr.mxu0 0.0
  %2632 = vmatpush1.msra.mxu0 0.0
  %2633 = vmatprep.subr.mxu0 0.0
  %2634 = vmatpush1.msra.mxu0 0.0
  %2635 = vmatprep.subr.mxu0 0.0
  %2636 = vmatpush1.msra.mxu0 0.0
  %2637 = vmatprep.mubr.f32.mxu0 0.0
  %2638 = vmatmul.mubr.f32.gmra.mrb[0].mxu0 %v2571
  %v2639 = vpop.f32.mrb[0].mxu0
  %v2640 = vadd.f32 0.0, %v2639
  %v2641 = vpop.f32.mrb[0].mxu0
  %2642 = vdwg.mxu0
  %v2643 = vadd.f32 %v2564, %v2640
  %v2644 = vtanh.pop %v2643
  %v2645 = vmul.f32 %v2644, 0.5
  %v2646 = vadd.f32 %v2645, 0.5
  %v2647 = vmul.f32 %v2646, 0.0
  %2649 = vrot.lane.b32.xlu0 %v2644, 64
  %v2650 = vpop.permute.xlu0 %2649
  %v2652 = vmul.f32 %v2646, %v2650
  %2654 = vrot.lane.b32.xlu0 %v2652, 32
  %v2655 = vpop.permute.xlu0 %2654
  %v2657 = vadd.f32 %v2647, %v2655
  %v2658 = vtanh.pop %v2657
  %2660 = vrot.lane.b32.xlu0 %v2658, 64
  %v2661 = vpop.permute.xlu0 %2660
  %v2663 = vmul.f32 %v2646, %v2661
  %2665 = vrot.lane.b32.xlu0 %v2663, 32
  %v2666 = vpop.permute.xlu0 %2665
  %v2667 = vsel %vm1650, %v2666, 0
  %2669 = vmatprep.subr.mxu0 0.0
  %2670 = vmatpush1.msra.mxu0 %v2566
  %2671 = vmatprep.subr.mxu0 0.0
  %2672 = vmatpush1.msra.mxu0 %v2567
  %2673 = vmatprep.subr.mxu0 0.0
  %2674 = vmatpush1.msra.mxu0 %v2568
  %2675 = vmatprep.subr.mxu0 0.0
  %2676 = vmatpush1.msra.mxu0 %v2569
  %2677 = vmatprep.subr.mxu0 0.0
  %2678 = vmatpush1.msra.mxu0 0.0
  %2679 = vmatprep.subr.mxu0 0.0
  %2680 = vmatpush1.msra.mxu0 0.0
  %2681 = vmatprep.subr.mxu0 0.0
  %2682 = vmatpush1.msra.mxu0 0.0
  %2683 = vmatprep.subr.mxu0 0.0
  %2684 = vmatpush1.msra.mxu0 0.0
  %2685 = vmatprep.subr.mxu0 0.0
  %2686 = vmatpush1.msra.mxu0 0.0
  %2687 = vmatprep.subr.mxu0 0.0
  %2688 = vmatpush1.msra.mxu0 0.0
  %2689 = vmatprep.subr.mxu0 0.0
  %2690 = vmatpush1.msra.mxu0 0.0
  %2691 = vmatprep.subr.mxu0 0.0
  %2692 = vmatpush1.msra.mxu0 0.0
  %2693 = vmatprep.subr.mxu0 0.0
  %2694 = vmatpush1.msra.mxu0 0.0
  %2695 = vmatprep.subr.mxu0 0.0
  %2696 = vmatpush1.msra.mxu0 0.0
  %2697 = vmatprep.subr.mxu0 0.0
  %2698 = vmatpush1.msra.mxu0 0.0
  %2699 = vmatprep.subr.mxu0 0.0
  %2700 = vmatpush1.msra.mxu0 0.0
  %2701 = vmatprep.subr.mxu0 0.0
  %2702 = vmatpush1.msra.mxu0 0.0
  %2703 = vmatprep.subr.mxu0 0.0
  %2704 = vmatpush1.msra.mxu0 0.0
  %2705 = vmatprep.subr.mxu0 0.0
  %2706 = vmatpush1.msra.mxu0 0.0
  %2707 = vmatprep.subr.mxu0 0.0
  %2708 = vmatpush1.msra.mxu0 0.0
  %2709 = vmatprep.subr.mxu0 0.0
  %2710 = vmatpush1.msra.mxu0 0.0
  %2711 = vmatprep.subr.mxu0 0.0
  %2712 = vmatpush1.msra.mxu0 0.0
  %2713 = vmatprep.subr.mxu0 0.0
  %2714 = vmatpush1.msra.mxu0 0.0
  %2715 = vmatprep.subr.mxu0 0.0
  %2716 = vmatpush1.msra.mxu0 0.0
  %2717 = vmatprep.subr.mxu0 0.0
  %2718 = vmatpush1.msra.mxu0 0.0
  %2719 = vmatprep.subr.mxu0 0.0
  %2720 = vmatpush1.msra.mxu0 0.0
  %2721 = vmatprep.subr.mxu0 0.0
  %2722 = vmatpush1.msra.mxu0 0.0
  %2723 = vmatprep.subr.mxu0 0.0
  %2724 = vmatpush1.msra.mxu0 0.0
  %2725 = vmatprep.subr.mxu0 0.0
  %2726 = vmatpush1.msra.mxu0 0.0
  %2727 = vmatprep.subr.mxu0 0.0
  %2728 = vmatpush1.msra.mxu0 0.0
  %2729 = vmatprep.subr.mxu0 0.0
  %2730 = vmatpush1.msra.mxu0 0.0
  %2731 = vmatprep.subr.mxu0 0.0
  %2732 = vmatpush1.msra.mxu0 0.0
  %2733 = vmatprep.mubr.f32.mxu0 0.0
  %2734 = vmatmul.mubr.f32.gmra.mrb[0].mxu0 %v2667
  %v2735 = vpop.f32.mrb[0].mxu0
  %v2736 = vadd.f32 0.0, %v2735
  %v2737 = vpop.f32.mrb[0].mxu0
  %2738 = vdwg.mxu0
  %v2740 = vrot.slane %v2736, 6
  %v2742 = vadd.f32 %v2564, %v2740
  %v2743 = vtanh.pop %v2742
  %v2744 = vmul.f32 %v2743, 0.5
  %v2745 = vadd.f32 %v2744, 0.5
  %v2747 = vrot.slane %v2657, 6
  %v2749 = vmul.f32 %v2745, %v2747
  %2751 = vrot.lane.b32.xlu0 %v2743, 64
  %v2752 = vpop.permute.xlu0 %2751
  %v2754 = vmul.f32 %v2745, %v2752
  %2756 = vrot.lane.b32.xlu0 %v2754, 32
  %v2757 = vpop.permute.xlu0 %2756
  %v2759 = vadd.f32 %v2749, %v2757
  %v2760 = vtanh.pop %v2759
  %2762 = vrot.lane.b32.xlu0 %v2760, 64
  %v2763 = vpop.permute.xlu0 %2762
  %v2765 = vmul.f32 %v2745, %v2763
  %v2767 = vrot.slane %v2765, 2
  %2768 = vrot.lane.b32.xlu0 %v2767, 32
  %v2769 = vpop.permute.xlu0 %2768
  %v2770 = vsel %vm1650, %v2769, 0
  %2772 = vmatprep.subr.mxu0 0.0
  %2773 = vmatpush1.msra.mxu0 %v2566
  %2774 = vmatprep.subr.mxu0 0.0
  %2775 = vmatpush1.msra.mxu0 %v2567
  %2776 = vmatprep.subr.mxu0 0.0
  %2777 = vmatpush1.msra.mxu0 %v2568
  %2778 = vmatprep.subr.mxu0 0.0
  %2779 = vmatpush1.msra.mxu0 %v2569
  %2780 = vmatprep.subr.mxu0 0.0
  %2781 = vmatpush1.msra.mxu0 0.0
  %2782 = vmatprep.subr.mxu0 0.0
  %2783 = vmatpush1.msra.mxu0 0.0
  %2784 = vmatprep.subr.mxu0 0.0
  %2785 = vmatpush1.msra.mxu0 0.0
  %2786 = vmatprep.subr.mxu0 0.0
  %2787 = vmatpush1.msra.mxu0 0.0
  %2788 = vmatprep.subr.mxu0 0.0
  %2789 = vmatpush1.msra.mxu0 0.0
  %2790 = vmatprep.subr.mxu0 0.0
  %2791 = vmatpush1.msra.mxu0 0.0
  %2792 = vmatprep.subr.mxu0 0.0
  %2793 = vmatpush1.msra.mxu0 0.0
  %2794 = vmatprep.subr.mxu0 0.0
  %2795 = vmatpush1.msra.mxu0 0.0
  %2796 = vmatprep.subr.mxu0 0.0
  %2797 = vmatpush1.msra.mxu0 0.0
  %2798 = vmatprep.subr.mxu0 0.0
  %2799 = vmatpush1.msra.mxu0 0.0
  %2800 = vmatprep.subr.mxu0 0.0
  %2801 = vmatpush1.msra.mxu0 0.0
  %2802 = vmatprep.subr.mxu0 0.0
  %2803 = vmatpush1.msra.mxu0 0.0
  %2804 = vmatprep.subr.mxu0 0.0
  %2805 = vmatpush1.msra.mxu0 0.0
  %2806 = vmatprep.subr.mxu0 0.0
  %2807 = vmatpush1.msra.mxu0 0.0
  %2808 = vmatprep.subr.mxu0 0.0
  %2809 = vmatpush1.msra.mxu0 0.0
  %2810 = vmatprep.subr.mxu0 0.0
  %2811 = vmatpush1.msra.mxu0 0.0
  %2812 = vmatprep.subr.mxu0 0.0
  %2813 = vmatpush1.msra.mxu0 0.0
  %2814 = vmatprep.subr.mxu0 0.0
  %2815 = vmatpush1.msra.mxu0 0.0
  %2816 = vmatprep.subr.mxu0 0.0
  %2817 = vmatpush1.msra.mxu0 0.0
  %2818 = vmatprep.subr.mxu0 0.0
  %2819 = vmatpush1.msra.mxu0 0.0
  %2820 = vmatprep.subr.mxu0 0.0
  %2821 = vmatpush1.msra.mxu0 0.0
  %2822 = vmatprep.subr.mxu0 0.0
  %2823 = vmatpush1.msra.mxu0 0.0
  %2824 = vmatprep.subr.mxu0 0.0
  %2825 = vmatpush1.msra.mxu0 0.0
  %2826 = vmatprep.subr.mxu0 0.0
  %2827 = vmatpush1.msra.mxu0 0.0
  %2828 = vmatprep.subr.mxu0 0.0
  %2829 = vmatpush1.msra.mxu0 0.0
  %2830 = vmatprep.subr.mxu0 0.0
  %2831 = vmatpush1.msra.mxu0 0.0
  %2832 = vmatprep.subr.mxu0 0.0
  %2833 = vmatpush1.msra.mxu0 0.0
  %2834 = vmatprep.subr.mxu0 0.0
  %2835 = vmatpush1.msra.mxu0 0.0
  %2836 = vmatprep.mubr.f32.mxu0 0.0
  %2837 = vmatmul.mubr.f32.gmra.mrb[0].mxu0 %v2770
  %v2838 = vpop.f32.mrb[0].mxu0
  %v2839 = vadd.f32 0.0, %v2838
  %v2840 = vpop.f32.mrb[0].mxu0
  %2841 = vdwg.mxu0
  %v2843 = vrot.slane %v2839, 4
  %v2845 = vadd.f32 %v2564, %v2843
  %v2846 = vtanh.pop %v2845
  %v2847 = vmul.f32 %v2846, 0.5
  %v2848 = vadd.f32 %v2847, 0.5
  %v2850 = vrot.slane %v2759, 6
  %v2852 = vmul.f32 %v2848, %v2850
  %2854 = vrot.lane.b32.xlu0 %v2846, 64
  %v2855 = vpop.permute.xlu0 %2854
  %v2857 = vmul.f32 %v2848, %v2855
  %2859 = vrot.lane.b32.xlu0 %v2857, 32
  %v2860 = vpop.permute.xlu0 %2859
  %v2862 = vadd.f32 %v2852, %v2860
  %v2863 = vtanh.pop %v2862
  %2865 = vrot.lane.b32.xlu0 %v2863, 64
  %v2866 = vpop.permute.xlu0 %2865
  %v2868 = vmul.f32 %v2848, %v2866
  %v2870 = vrot.slane %v2868, 4
  %2871 = vrot.lane.b32.xlu0 %v2870, 32
  %v2872 = vpop.permute.xlu0 %2871
  %v2873 = vsel %vm1650, %v2872, 0
  %2875 = vmatprep.subr.mxu0 0.0
  %2876 = vmatpush1.msra.mxu0 %v2566
  %2877 = vmatprep.subr.mxu0 0.0
  %2878 = vmatpush1.msra.mxu0 %v2567
  %2879 = vmatprep.subr.mxu0 0.0
  %2880 = vmatpush1.msra.mxu0 %v2568
  %2881 = vmatprep.subr.mxu0 0.0
  %2882 = vmatpush1.msra.mxu0 %v2569
  %2883 = vmatprep.subr.mxu0 0.0
  %2884 = vmatpush1.msra.mxu0 0.0
  %2885 = vmatprep.subr.mxu0 0.0
  %2886 = vmatpush1.msra.mxu0 0.0
  %2887 = vmatprep.subr.mxu0 0.0
  %2888 = vmatpush1.msra.mxu0 0.0
  %2889 = vmatprep.subr.mxu0 0.0
  %2890 = vmatpush1.msra.mxu0 0.0
  %2891 = vmatprep.subr.mxu0 0.0
  %2892 = vmatpush1.msra.mxu0 0.0
  %2893 = vmatprep.subr.mxu0 0.0
  %2894 = vmatpush1.msra.mxu0 0.0
  %2895 = vmatprep.subr.mxu0 0.0
  %2896 = vmatpush1.msra.mxu0 0.0
  %2897 = vmatprep.subr.mxu0 0.0
  %2898 = vmatpush1.msra.mxu0 0.0
  %2899 = vmatprep.subr.mxu0 0.0
  %2900 = vmatpush1.msra.mxu0 0.0
  %2901 = vmatprep.subr.mxu0 0.0
  %2902 = vmatpush1.msra.mxu0 0.0
  %2903 = vmatprep.subr.mxu0 0.0
  %2904 = vmatpush1.msra.mxu0 0.0
  %2905 = vmatprep.subr.mxu0 0.0
  %2906 = vmatpush1.msra.mxu0 0.0
  %2907 = vmatprep.subr.mxu0 0.0
  %2908 = vmatpush1.msra.mxu0 0.0
  %2909 = vmatprep.subr.mxu0 0.0
  %2910 = vmatpush1.msra.mxu0 0.0
  %2911 = vmatprep.subr.mxu0 0.0
  %2912 = vmatpush1.msra.mxu0 0.0
  %2913 = vmatprep.subr.mxu0 0.0
  %2914 = vmatpush1.msra.mxu0 0.0
  %2915 = vmatprep.subr.mxu0 0.0
  %2916 = vmatpush1.msra.mxu0 0.0
  %2917 = vmatprep.subr.mxu0 0.0
  %2918 = vmatpush1.msra.mxu0 0.0
  %2919 = vmatprep.subr.mxu0 0.0
  %2920 = vmatpush1.msra.mxu0 0.0
  %2921 = vmatprep.subr.mxu0 0.0
  %2922 = vmatpush1.msra.mxu0 0.0
  %2923 = vmatprep.subr.mxu0 0.0
  %2924 = vmatpush1.msra.mxu0 0.0
  %2925 = vmatprep.subr.mxu0 0.0
  %2926 = vmatpush1.msra.mxu0 0.0
  %2927 = vmatprep.subr.mxu0 0.0
  %2928 = vmatpush1.msra.mxu0 0.0
  %2929 = vmatprep.subr.mxu0 0.0
  %2930 = vmatpush1.msra.mxu0 0.0
  %2931 = vmatprep.subr.mxu0 0.0
  %2932 = vmatpush1.msra.mxu0 0.0
  %2933 = vmatprep.subr.mxu0 0.0
  %2934 = vmatpush1.msra.mxu0 0.0
  %2935 = vmatprep.subr.mxu0 0.0
  %2936 = vmatpush1.msra.mxu0 0.0
  %2937 = vmatprep.subr.mxu0 0.0
  %2938 = vmatpush1.msra.mxu0 0.0
  %2939 = vmatprep.mubr.f32.mxu0 0.0
  %2940 = vmatmul.mubr.f32.gmra.mrb[0].mxu0 %v2873
  %v2941 = vpop.f32.mrb[0].mxu0
  %v2942 = vadd.f32 0.0, %v2941
  %v2943 = vpop.f32.mrb[0].mxu0
  %2944 = vdwg.mxu0
  %v2946 = vrot.slane %v2942, 2
  %v2948 = vadd.f32 %v2564, %v2946
  %v2949 = vtanh.pop %v2948
  %v2950 = vmul.f32 %v2949, 0.5
  %v2951 = vadd.f32 %v2950, 0.5
  %v2953 = vrot.slane %v2862, 6
  %v2955 = vmul.f32 %v2951, %v2953
  %2957 = vrot.lane.b32.xlu0 %v2949, 64
  %v2958 = vpop.permute.xlu0 %2957
  %v2960 = vmul.f32 %v2951, %v2958
  %2962 = vrot.lane.b32.xlu0 %v2960, 32
  %v2963 = vpop.permute.xlu0 %2962
  %v2965 = vadd.f32 %v2955, %v2963
  %v2966 = vtanh.pop %v2965
  %2968 = vrot.lane.b32.xlu0 %v2966, 64
  %v2969 = vpop.permute.xlu0 %2968
  %v2971 = vmul.f32 %v2951, %v2969
  %v2973 = vrot.slane %v2971, 6
  %2974 = vrot.lane.b32.xlu0 %v2973, 32
  %v2975 = vpop.permute.xlu0 %2974
  %v2976 = vsel %vm1650, %v2975, 0
  %2978 = vmatprep.subr.mxu0 0.0
  %2979 = vmatpush1.msra.mxu0 %v2566
  %2980 = vmatprep.subr.mxu0 0.0
  %2981 = vmatpush1.msra.mxu0 %v2567
  %2982 = vmatprep.subr.mxu0 0.0
  %2983 = vmatpush1.msra.mxu0 %v2568
  %2984 = vmatprep.subr.mxu0 0.0
  %2985 = vmatpush1.msra.mxu0 %v2569
  %2986 = vmatprep.subr.mxu0 0.0
  %2987 = vmatpush1.msra.mxu0 0.0
  %2988 = vmatprep.subr.mxu0 0.0
  %2989 = vmatpush1.msra.mxu0 0.0
  %2990 = vmatprep.subr.mxu0 0.0
  %2991 = vmatpush1.msra.mxu0 0.0
  %2992 = vmatprep.subr.mxu0 0.0
  %2993 = vmatpush1.msra.mxu0 0.0
  %2994 = vmatprep.subr.mxu0 0.0
  %2995 = vmatpush1.msra.mxu0 0.0
  %2996 = vmatprep.subr.mxu0 0.0
  %2997 = vmatpush1.msra.mxu0 0.0
  %2998 = vmatprep.subr.mxu0 0.0
  %2999 = vmatpush1.msra.mxu0 0.0
  %3000 = vmatprep.subr.mxu0 0.0
  %3001 = vmatpush1.msra.mxu0 0.0
  %3002 = vmatprep.subr.mxu0 0.0
  %3003 = vmatpush1.msra.mxu0 0.0
  %3004 = vmatprep.subr.mxu0 0.0
  %3005 = vmatpush1.msra.mxu0 0.0
  %3006 = vmatprep.subr.mxu0 0.0
  %3007 = vmatpush1.msra.mxu0 0.0
  %3008 = vmatprep.subr.mxu0 0.0
  %3009 = vmatpush1.msra.mxu0 0.0
  %3010 = vmatprep.subr.mxu0 0.0
  %3011 = vmatpush1.msra.mxu0 0.0
  %3012 = vmatprep.subr.mxu0 0.0
  %3013 = vmatpush1.msra.mxu0 0.0
  %3014 = vmatprep.subr.mxu0 0.0
  %3015 = vmatpush1.msra.mxu0 0.0
  %3016 = vmatprep.subr.mxu0 0.0
  %3017 = vmatpush1.msra.mxu0 0.0
  %3018 = vmatprep.subr.mxu0 0.0
  %3019 = vmatpush1.msra.mxu0 0.0
  %3020 = vmatprep.subr.mxu0 0.0
  %3021 = vmatpush1.msra.mxu0 0.0
  %3022 = vmatprep.subr.mxu0 0.0
  %3023 = vmatpush1.msra.mxu0 0.0
  %3024 = vmatprep.subr.mxu0 0.0
  %3025 = vmatpush1.msra.mxu0 0.0
  %3026 = vmatprep.subr.mxu0 0.0
  %3027 = vmatpush1.msra.mxu0 0.0
  %3028 = vmatprep.subr.mxu0 0.0
  %3029 = vmatpush1.msra.mxu0 0.0
  %3030 = vmatprep.subr.mxu0 0.0
  %3031 = vmatpush1.msra.mxu0 0.0
  %3032 = vmatprep.subr.mxu0 0.0
  %3033 = vmatpush1.msra.mxu0 0.0
  %3034 = vmatprep.subr.mxu0 0.0
  %3035 = vmatpush1.msra.mxu0 0.0
  %3036 = vmatprep.subr.mxu0 0.0
  %3037 = vmatpush1.msra.mxu0 0.0
  %3038 = vmatprep.subr.mxu0 0.0
  %3039 = vmatpush1.msra.mxu0 0.0
  %3040 = vmatprep.subr.mxu0 0.0
  %3041 = vmatpush1.msra.mxu0 0.0
  %3042 = vmatprep.mubr.f32.mxu0 0.0
  %3043 = vmatmul.mubr.f32.gmra.mrb[0].mxu0 %v2976
  %v3044 = vpop.f32.mrb[0].mxu0
  %v3045 = vadd.f32 0.0, %v3044
  %v3046 = vpop.f32.mrb[0].mxu0
  %3047 = vdwg.mxu0
  %v3048 = vadd.f32 %v2565, %v3045
  %v3049 = vtanh.pop %v3048
  %v3050 = vmul.f32 %v3049, 0.5
  %v3051 = vadd.f32 %v3050, 0.5
  %v3053 = vrot.slane %v2965, 6
  %v3055 = vmul.f32 %v3051, %v3053
  %3057 = vrot.lane.b32.xlu0 %v3049, 64
  %v3058 = vpop.permute.xlu0 %3057
  %v3060 = vmul.f32 %v3051, %v3058
  %3062 = vrot.lane.b32.xlu0 %v3060, 32
  %v3063 = vpop.permute.xlu0 %3062
  %v3065 = vadd.f32 %v3055, %v3063
  %v3066 = vtanh.pop %v3065
  %3068 = vrot.lane.b32.xlu0 %v3066, 64
  %v3069 = vpop.permute.xlu0 %3068
  %v3071 = vmul.f32 %v3051, %v3069
  %3073 = vrot.lane.b32.xlu0 %v3071, 32
  %v3074 = vpop.permute.xlu0 %3073
  %v3075 = vsel %vm1650, %v3074, 0
  %3077 = vmatprep.subr.mxu0 0.0
  %3078 = vmatpush1.msra.mxu0 %v2566
  %3079 = vmatprep.subr.mxu0 0.0
  %3080 = vmatpush1.msra.mxu0 %v2567
  %3081 = vmatprep.subr.mxu0 0.0
  %3082 = vmatpush1.msra.mxu0 %v2568
  %3083 = vmatprep.subr.mxu0 0.0
  %3084 = vmatpush1.msra.mxu0 %v2569
  %3085 = vmatprep.subr.mxu0 0.0
  %3086 = vmatpush1.msra.mxu0 0.0
  %3087 = vmatprep.subr.mxu0 0.0
  %3088 = vmatpush1.msra.mxu0 0.0
  %3089 = vmatprep.subr.mxu0 0.0
  %3090 = vmatpush1.msra.mxu0 0.0
  %3091 = vmatprep.subr.mxu0 0.0
  %3092 = vmatpush1.msra.mxu0 0.0
  %3093 = vmatprep.subr.mxu0 0.0
  %3094 = vmatpush1.msra.mxu0 0.0
  %3095 = vmatprep.subr.mxu0 0.0
  %3096 = vmatpush1.msra.mxu0 0.0
  %3097 = vmatprep.subr.mxu0 0.0
  %3098 = vmatpush1.msra.mxu0 0.0
  %3099 = vmatprep.subr.mxu0 0.0
  %3100 = vmatpush1.msra.mxu0 0.0
  %3101 = vmatprep.subr.mxu0 0.0
  %3102 = vmatpush1.msra.mxu0 0.0
  %3103 = vmatprep.subr.mxu0 0.0
  %3104 = vmatpush1.msra.mxu0 0.0
  %3105 = vmatprep.subr.mxu0 0.0
  %3106 = vmatpush1.msra.mxu0 0.0
  %3107 = vmatprep.subr.mxu0 0.0
  %3108 = vmatpush1.msra.mxu0 0.0
  %3109 = vmatprep.subr.mxu0 0.0
  %3110 = vmatpush1.msra.mxu0 0.0
  %3111 = vmatprep.subr.mxu0 0.0
  %3112 = vmatpush1.msra.mxu0 0.0
  %3113 = vmatprep.subr.mxu0 0.0
  %3114 = vmatpush1.msra.mxu0 0.0
  %3115 = vmatprep.subr.mxu0 0.0
  %3116 = vmatpush1.msra.mxu0 0.0
  %3117 = vmatprep.subr.mxu0 0.0
  %3118 = vmatpush1.msra.mxu0 0.0
  %3119 = vmatprep.subr.mxu0 0.0
  %3120 = vmatpush1.msra.mxu0 0.0
  %3121 = vmatprep.subr.mxu0 0.0
  %3122 = vmatpush1.msra.mxu0 0.0
  %3123 = vmatprep.subr.mxu0 0.0
  %3124 = vmatpush1.msra.mxu0 0.0
  %3125 = vmatprep.subr.mxu0 0.0
  %3126 = vmatpush1.msra.mxu0 0.0
  %3127 = vmatprep.subr.mxu0 0.0
  %3128 = vmatpush1.msra.mxu0 0.0
  %3129 = vmatprep.subr.mxu0 0.0
  %3130 = vmatpush1.msra.mxu0 0.0
  %3131 = vmatprep.subr.mxu0 0.0
  %3132 = vmatpush1.msra.mxu0 0.0
  %3133 = vmatprep.subr.mxu0 0.0
  %3134 = vmatpush1.msra.mxu0 0.0
  %3135 = vmatprep.subr.mxu0 0.0
  %3136 = vmatpush1.msra.mxu0 0.0
  %3137 = vmatprep.subr.mxu0 0.0
  %3138 = vmatpush1.msra.mxu0 0.0
  %3139 = vmatprep.subr.mxu0 0.0
  %3140 = vmatpush1.msra.mxu0 0.0
  %3141 = vmatprep.mubr.f32.mxu0 0.0
  %3142 = vmatmul.mubr.f32.gmra.mrb[0].mxu0 %v3075
  %v3143 = vpop.f32.mrb[0].mxu0
  %v3144 = vadd.f32 0.0, %v3143
  %v3145 = vpop.f32.mrb[0].mxu0
  %3146 = vdwg.mxu0
  %v3148 = vrot.slane %v3144, 6
  %v3150 = vadd.f32 %v2565, %v3148
  %v3151 = vtanh.pop %v3150
  %v3152 = vmul.f32 %v3151, 0.5
  %v3153 = vadd.f32 %v3152, 0.5
  %v3155 = vrot.slane %v3065, 6
  %v3157 = vmul.f32 %v3153, %v3155
  %3159 = vrot.lane.b32.xlu0 %v3151, 64
  %v3160 = vpop.permute.xlu0 %3159
  %v3162 = vmul.f32 %v3153, %v3160
  %3164 = vrot.lane.b32.xlu0 %v3162, 32
  %v3165 = vpop.permute.xlu0 %3164
  %v3167 = vadd.f32 %v3157, %v3165
  %v3168 = vtanh.pop %v3167
  %3170 = vrot.lane.b32.xlu0 %v3168, 64
  %v3171 = vpop.permute.xlu0 %3170
  %v3173 = vmul.f32 %v3153, %v3171
  %v3175 = vrot.slane %v3173, 2
  %3176 = vrot.lane.b32.xlu0 %v3175, 32
  %v3177 = vpop.permute.xlu0 %3176
  %v3178 = vsel %vm1650, %v3177, 0
  %3180 = vmatprep.subr.mxu0 0.0
  %3181 = vmatpush1.msra.mxu0 %v2566
  %3182 = vmatprep.subr.mxu0 0.0
  %3183 = vmatpush1.msra.mxu0 %v2567
  %3184 = vmatprep.subr.mxu0 0.0
  %3185 = vmatpush1.msra.mxu0 %v2568
  %3186 = vmatprep.subr.mxu0 0.0
  %3187 = vmatpush1.msra.mxu0 %v2569
  %3188 = vmatprep.subr.mxu0 0.0
  %3189 = vmatpush1.msra.mxu0 0.0
  %3190 = vmatprep.subr.mxu0 0.0
  %3191 = vmatpush1.msra.mxu0 0.0
  %3192 = vmatprep.subr.mxu0 0.0
  %3193 = vmatpush1.msra.mxu0 0.0
  %3194 = vmatprep.subr.mxu0 0.0
  %3195 = vmatpush1.msra.mxu0 0.0
  %3196 = vmatprep.subr.mxu0 0.0
  %3197 = vmatpush1.msra.mxu0 0.0
  %3198 = vmatprep.subr.mxu0 0.0
  %3199 = vmatpush1.msra.mxu0 0.0
  %3200 = vmatprep.subr.mxu0 0.0
  %3201 = vmatpush1.msra.mxu0 0.0
  %3202 = vmatprep.subr.mxu0 0.0
  %3203 = vmatpush1.msra.mxu0 0.0
  %3204 = vmatprep.subr.mxu0 0.0
  %3205 = vmatpush1.msra.mxu0 0.0
  %3206 = vmatprep.subr.mxu0 0.0
  %3207 = vmatpush1.msra.mxu0 0.0
  %3208 = vmatprep.subr.mxu0 0.0
  %3209 = vmatpush1.msra.mxu0 0.0
  %3210 = vmatprep.subr.mxu0 0.0
  %3211 = vmatpush1.msra.mxu0 0.0
  %3212 = vmatprep.subr.mxu0 0.0
  %3213 = vmatpush1.msra.mxu0 0.0
  %3214 = vmatprep.subr.mxu0 0.0
  %3215 = vmatpush1.msra.mxu0 0.0
  %3216 = vmatprep.subr.mxu0 0.0
  %3217 = vmatpush1.msra.mxu0 0.0
  %3218 = vmatprep.subr.mxu0 0.0
  %3219 = vmatpush1.msra.mxu0 0.0
  %3220 = vmatprep.subr.mxu0 0.0
  %3221 = vmatpush1.msra.mxu0 0.0
  %3222 = vmatprep.subr.mxu0 0.0
  %3223 = vmatpush1.msra.mxu0 0.0
  %3224 = vmatprep.subr.mxu0 0.0
  %3225 = vmatpush1.msra.mxu0 0.0
  %3226 = vmatprep.subr.mxu0 0.0
  %3227 = vmatpush1.msra.mxu0 0.0
  %3228 = vmatprep.subr.mxu0 0.0
  %3229 = vmatpush1.msra.mxu0 0.0
  %3230 = vmatprep.subr.mxu0 0.0
  %3231 = vmatpush1.msra.mxu0 0.0
  %3232 = vmatprep.subr.mxu0 0.0
  %3233 = vmatpush1.msra.mxu0 0.0
  %3234 = vmatprep.subr.mxu0 0.0
  %3235 = vmatpush1.msra.mxu0 0.0
  %3236 = vmatprep.subr.mxu0 0.0
  %3237 = vmatpush1.msra.mxu0 0.0
  %3238 = vmatprep.subr.mxu0 0.0
  %3239 = vmatpush1.msra.mxu0 0.0
  %3240 = vmatprep.subr.mxu0 0.0
  %3241 = vmatpush1.msra.mxu0 0.0
  %3242 = vmatprep.subr.mxu0 0.0
  %3243 = vmatpush1.msra.mxu0 0.0
  %3244 = vmatprep.mubr.f32.mxu0 0.0
  %3245 = vmatmul.mubr.f32.gmra.mrb[0].mxu0 %v3178
  %v3246 = vpop.f32.mrb[0].mxu0
  %v3247 = vadd.f32 0.0, %v3246
  %v3248 = vpop.f32.mrb[0].mxu0
  %3249 = vdwg.mxu0
  %v3251 = vrot.slane %v3247, 4
  %v3253 = vadd.f32 %v2565, %v3251
  %v3254 = vtanh.pop %v3253
  %v3255 = vmul.f32 %v3254, 0.5
  %v3256 = vadd.f32 %v3255, 0.5
  %v3258 = vrot.slane %v3167, 6
  %v3260 = vmul.f32 %v3256, %v3258
  %3262 = vrot.lane.b32.xlu0 %v3254, 64
  %v3263 = vpop.permute.xlu0 %3262
  %v3265 = vmul.f32 %v3256, %v3263
  %3267 = vrot.lane.b32.xlu0 %v3265, 32
  %v3268 = vpop.permute.xlu0 %3267
  %v3270 = vadd.f32 %v3260, %v3268
  %v3271 = vtanh.pop %v3270
  %3273 = vrot.lane.b32.xlu0 %v3271, 64
  %v3274 = vpop.permute.xlu0 %3273
  %v3276 = vmul.f32 %v3256, %v3274
  %v3278 = vrot.slane %v3276, 4
  %3279 = vrot.lane.b32.xlu0 %v3278, 32
  %v3280 = vpop.permute.xlu0 %3279
  %v3281 = vsel %vm1650, %v3280, 0
  %3283 = vmatprep.subr.mxu0 0.0
  %3284 = vmatpush1.msra.mxu0 %v2566
  %3285 = vmatprep.subr.mxu0 0.0
  %3286 = vmatpush1.msra.mxu0 %v2567
  %3287 = vmatprep.subr.mxu0 0.0
  %3288 = vmatpush1.msra.mxu0 %v2568
  %3289 = vmatprep.subr.mxu0 0.0
  %3290 = vmatpush1.msra.mxu0 %v2569
  %3291 = vmatprep.subr.mxu0 0.0
  %3292 = vmatpush1.msra.mxu0 0.0
  %3293 = vmatprep.subr.mxu0 0.0
  %3294 = vmatpush1.msra.mxu0 0.0
  %3295 = vmatprep.subr.mxu0 0.0
  %3296 = vmatpush1.msra.mxu0 0.0
  %3297 = vmatprep.subr.mxu0 0.0
  %3298 = vmatpush1.msra.mxu0 0.0
  %3299 = vmatprep.subr.mxu0 0.0
  %3300 = vmatpush1.msra.mxu0 0.0
  %3301 = vmatprep.subr.mxu0 0.0
  %3302 = vmatpush1.msra.mxu0 0.0
  %3303 = vmatprep.subr.mxu0 0.0
  %3304 = vmatpush1.msra.mxu0 0.0
  %3305 = vmatprep.subr.mxu0 0.0
  %3306 = vmatpush1.msra.mxu0 0.0
  %3307 = vmatprep.subr.mxu0 0.0
  %3308 = vmatpush1.msra.mxu0 0.0
  %3309 = vmatprep.subr.mxu0 0.0
  %3310 = vmatpush1.msra.mxu0 0.0
  %3311 = vmatprep.subr.mxu0 0.0
  %3312 = vmatpush1.msra.mxu0 0.0
  %3313 = vmatprep.subr.mxu0 0.0
  %3314 = vmatpush1.msra.mxu0 0.0
  %3315 = vmatprep.subr.mxu0 0.0
  %3316 = vmatpush1.msra.mxu0 0.0
  %3317 = vmatprep.subr.mxu0 0.0
  %3318 = vmatpush1.msra.mxu0 0.0
  %3319 = vmatprep.subr.mxu0 0.0
  %3320 = vmatpush1.msra.mxu0 0.0
  %3321 = vmatprep.subr.mxu0 0.0
  %3322 = vmatpush1.msra.mxu0 0.0
  %3323 = vmatprep.subr.mxu0 0.0
  %3324 = vmatpush1.msra.mxu0 0.0
  %3325 = vmatprep.subr.mxu0 0.0
  %3326 = vmatpush1.msra.mxu0 0.0
  %3327 = vmatprep.subr.mxu0 0.0
  %3328 = vmatpush1.msra.mxu0 0.0
  %3329 = vmatprep.subr.mxu0 0.0
  %3330 = vmatpush1.msra.mxu0 0.0
  %3331 = vmatprep.subr.mxu0 0.0
  %3332 = vmatpush1.msra.mxu0 0.0
  %3333 = vmatprep.subr.mxu0 0.0
  %3334 = vmatpush1.msra.mxu0 0.0
  %3335 = vmatprep.subr.mxu0 0.0
  %3336 = vmatpush1.msra.mxu0 0.0
  %3337 = vmatprep.subr.mxu0 0.0
  %3338 = vmatpush1.msra.mxu0 0.0
  %3339 = vmatprep.subr.mxu0 0.0
  %3340 = vmatpush1.msra.mxu0 0.0
  %3341 = vmatprep.subr.mxu0 0.0
  %3342 = vmatpush1.msra.mxu0 0.0
  %3343 = vmatprep.subr.mxu0 0.0
  %3344 = vmatpush1.msra.mxu0 0.0
  %3345 = vmatprep.subr.mxu0 0.0
  %3346 = vmatpush1.msra.mxu0 0.0
  %3347 = vmatprep.mubr.f32.mxu0 0.0
  %3348 = vmatmul.mubr.f32.gmra.mrb[0].mxu0 %v3281
  %v3349 = vpop.f32.mrb[0].mxu0
  %v3350 = vadd.f32 0.0, %v3349
  %v3351 = vpop.f32.mrb[0].mxu0
  %3352 = vdwg.mxu0
  %v3354 = vrot.slane %v3350, 2
  %v3356 = vadd.f32 %v2565, %v3354
  %v3357 = vtanh.pop %v3356
  %v3358 = vmul.f32 %v3357, 0.5
  %v3359 = vadd.f32 %v3358, 0.5
  %v3361 = vrot.slane %v3270, 6
  %v3363 = vmul.f32 %v3359, %v3361
  %3365 = vrot.lane.b32.xlu0 %v3357, 64
  %v3366 = vpop.permute.xlu0 %3365
  %v3368 = vmul.f32 %v3359, %v3366
  %3370 = vrot.lane.b32.xlu0 %v3368, 32
  %v3371 = vpop.permute.xlu0 %3370
  %v3373 = vadd.f32 %v3363, %v3371
  %v3374 = vtanh.pop %v3373
  %3376 = vrot.lane.b32.xlu0 %v3374, 64
  %v3377 = vpop.permute.xlu0 %3376
  %v3379 = vmul.f32 %v3359, %v3377
  %v3380 = vld [vmem:[%s6] sm:$0x1]
  %v3382 = vlaneseq
  %v3383 = vshrl.u32 %v3382, 7
  %v3384 = vsub.s32 0, %v3383
  %v3385 = vrot.slane %v3380, %v3384
  %3386 = vrot.lane.b32.xlu0 %v3385, 96
  %v3387 = vpop.permute.xlu0 %3386
  %v3389 = vmul.f32 %v3379, %v3387
  %3391 = vrot.lane.b32.xlu0 %v3389, 32
  %v3392 = vpop.permute.xlu0 %3391
  %vm3394 = vcmask 261126
  %v3395 = vsel %vm3394, %v3392, 0.0
  %3396 = vadd.xlane.f32.xlu0 %v3395
  %v3397 = vpop.xlane.xlu0 %3396
  %v3398 = vld [vmem:[#allocation2] sm:$0x1]
  %v3400 = vlaneseq
  %v3401 = vshrl.u32 %v3400, 7
  %v3402 = vsub.s32 0, %v3401
  %v3403 = vrot.slane %v3398, %v3402
  %v3405 = vadd.f32 %v3397, %v3403
  %vm3406 = vcmask 7174
  %3407 = vst.msk [vmem:[%s8 - $0x6] sm:$0xc0] %vm3406, %v3405
  // Predicated region
  $region34: #{rdm_cnn_lstm_forward.3} parent=0 // pred_check
    _
  $region35: #{rdm_cnn_lstm_forward.3} parent=0 // pred_check_branch
    %3409 = sbr.rel (0) target = $region37
  $region36: #{rdm_cnn_lstm_forward.3} parent=0 // pred_region
    _
  $region37: #{rdm_cnn_lstm_forward.3} parent=0 // pred_fallthru
    _
  // Predicated region
  $region38: #{rdm_cnn_lstm_forward.3} parent=0 // pred_check
    _
  $region39: #{rdm_cnn_lstm_forward.3} parent=0 // pred_check_branch
    %3411 = sbr.rel (0) target = $region41
  $region40: #{rdm_cnn_lstm_forward.3} parent=0 // pred_region
    _
  $region41: #{rdm_cnn_lstm_forward.3} parent=0 // pred_fallthru
    _

</llo_original>
